<compile_context>
chip_gen: v6e
topology: v6e:2x2x1
jax: 0.10.0
libtpu: 0.0.40
codegen_flags: <defaults>
</compile_context>

<pallas_src>
import functools

import jax
import jax.numpy as jnp
import numpy as np
from jax.experimental import pallas as pl
from jax.experimental.pallas import tpu as pltpu


# ----------------------------- Pallas kernel --------------------------------

def _layernorm_f32(h, gamma, beta, eps=1e-6):
    mean = jnp.mean(h, axis=-1, keepdims=True)
    var = jnp.mean((h - mean) ** 2, axis=-1, keepdims=True)
    return (h - mean) * jax.lax.rsqrt(var + eps) * gamma + beta


def _encoder_core(xq_f32, xkv_cdt, mask_bias,
                  wq, bq, wk, bk, wv, bv, wo, bo,
                  g1, be1, w1, bf1, w2, bf2, g2, be2,
                  *, num_heads, cdt):
    """All matmuls in `cdt` (bf16) on the MXU with f32 accumulation; softmax,
    LayerNorm and residual math in f32."""
    TQ, D = xq_f32.shape
    S = xkv_cdt.shape[0]
    dh = D // num_heads
    scale = 1.0 / jnp.sqrt(jnp.float32(dh))

    xq_cdt = xq_f32.astype(cdt)

    # --- Q/K/V projections ---
    q = jnp.dot(xq_cdt, wq, preferred_element_type=jnp.float32) + bq
    k = jnp.dot(xkv_cdt, wk, preferred_element_type=jnp.float32) + bk
    v = jnp.dot(xkv_cdt, wv, preferred_element_type=jnp.float32) + bv

    # --- batched multi-head attention (no per-head python loop, no concat) ---
    qh = q.reshape(TQ, num_heads, dh).swapaxes(0, 1).astype(cdt)    # (H, TQ, dh)
    kh = k.reshape(S, num_heads, dh).swapaxes(0, 1).astype(cdt)     # (H, S, dh)
    vh = v.reshape(S, num_heads, dh).swapaxes(0, 1).astype(cdt)     # (H, S, dh)

    logits = jnp.einsum("hqd,hkd->hqk", qh, kh,
                        preferred_element_type=jnp.float32) * scale  # (H, TQ, S)
    logits = logits + mask_bias[None, :, :]

    m = jnp.max(logits, axis=-1, keepdims=True)
    e = jnp.exp(logits - m)
    denom = jnp.sum(e, axis=-1, keepdims=True)
    p = e * pl.reciprocal(denom, approx=True)                        # softmax (f32)

    ctx = jnp.einsum("hqk,hkd->hqd", p.astype(cdt), vh,
                     preferred_element_type=jnp.float32)             # (H, TQ, dh)
    concat = ctx.swapaxes(0, 1).reshape(TQ, D)                       # (TQ, D)

    attn_out = jnp.dot(concat.astype(cdt), wo,
                       preferred_element_type=jnp.float32) + bo

    # dropout1 is identity (eval mode)
    out1 = _layernorm_f32(xq_f32 + attn_out, g1, be1)

    # --- FFN ---
    h = jnp.dot(out1.astype(cdt), w1, preferred_element_type=jnp.float32) + bf1
    h = jnp.maximum(h, 0.0)
    h = jnp.dot(h.astype(cdt), w2, preferred_element_type=jnp.float32) + bf2

    # dropout2 is identity (eval mode)
    return _layernorm_f32(out1 + h, g2, be2)


def _make_kernel(shared_x, num_heads, compute_dtype):
    def kernel(*refs):
        out_ref = refs[-1]
        if shared_x:
            x_ref, mask_ref = refs[0], refs[1]
            wrefs = refs[2:-1]
            xq_f32 = x_ref[0].astype(jnp.float32)          # (TQ=S, D) residual path
            xkv_cdt = xq_f32.astype(compute_dtype)         # same rows feed K/V
        else:
            xq_ref, xkv_ref, mask_ref = refs[0], refs[1], refs[2]
            wrefs = refs[3:-1]
            xq_f32 = xq_ref[0].astype(jnp.float32)         # (TQ, D)
            xkv_cdt = xkv_ref[0].astype(compute_dtype)     # (S, D)

        # Hoisted additive key-padding bias: (1, S), broadcast over heads & queries.
        mask_bias = mask_ref[0].astype(jnp.float32) * (-1000000000.0)

        w = [r[...] for r in wrefs]
        out2 = _encoder_core(xq_f32, xkv_cdt, mask_bias, *w,
                             num_heads=num_heads, cdt=compute_dtype)
        out_ref[0] = out2.astype(out_ref.dtype)

    return kernel


# ------------------------------- wrapper -------------------------------------

def _pick_query_tile(S, target):
    """Largest tile <= target that divides S (256 feeds v6e/v7x MXU; 128 for v5e)."""
    if S <= target:
        return S
    for t in (target, 128, 64, 32, 16, 8):
        if t <= target and S % t == 0:
            return t
    return S


def _supports_buffered_blockspec():
    try:
        pl.BlockSpec((8, 128), lambda i: (0, 0), pipeline_mode=pl.Buffered(1))
        return True
    except Exception:
        return False


_BUFFERED_OK = _supports_buffered_blockspec()


def encoder_layer(x, padding_mask, params, *, num_heads,
                  compute_dtype=jnp.bfloat16, query_tile=256):
    """x: (B, S, D) float32;  padding_mask: (B, 1, S) float32 (1.0 at pad positions)."""
    B, S, D = x.shape
    dff = params["w1"].shape[-1]
    TQ = _pick_query_tile(S, query_tile)
    n_q = S // TQ
    shared_x = (n_q == 1)

    # Weight matrices go to the MXU in bf16; biases / LayerNorm params stay f32.
    wq = params["wq"].astype(compute_dtype)
    wk = params["wk"].astype(compute_dtype)
    wv = params["wv"].astype(compute_dtype)
    wo = params["wo"].astype(compute_dtype)
    w1 = params["w1"].astype(compute_dtype)
    w2 = params["w2"].astype(compute_dtype)

    weight_shapes = (
        (D, D), (1, D), (D, D), (1, D), (D, D), (1, D),   # Wq/bq, Wk/bk, Wv/bv
        (D, D), (1, D),                                    # Wo/bo
        (1, D), (1, D),                                    # norm1 gamma/beta
        (D, dff), (1, dff), (dff, D), (1, D),              # W1/b1, W2/b2
        (1, D), (1, D),                                    # norm2 gamma/beta
    )

    def _const_spec(shape, single_buffer):
        # Variadic index_map: works for both grid=(B,) and grid=(B, n_q).
        idx = lambda *g, _shape=shape: (0,) * len(_shape)
        if single_buffer and _BUFFERED_OK:
            # Constant index_map => double-buffering is pure VMEM waste.
            return pl.BlockSpec(shape, idx, pipeline_mode=pl.Buffered(1))
        return pl.BlockSpec(shape, idx)

    def _build(single_buffer_weights):
        if shared_x:
            grid = (B,)
            act_specs = [
                pl.BlockSpec((1, S, D), lambda b: (b, 0, 0)),     # x (Q + K/V rows, one DMA)
                pl.BlockSpec((1, 1, S), lambda b: (b, 0, 0)),     # padding mask
            ]
            out_spec = pl.BlockSpec((1, S, D), lambda b: (b, 0, 0))
            dim_sem = ("parallel",)
        else:
            grid = (B, n_q)
            act_specs = [
                pl.BlockSpec((1, TQ, D), lambda b, qi: (b, qi, 0)),   # x (query rows)
                # TODO(synk): for very long S, stream K/V tiles with an online-softmax
                # accumulator instead of keeping the full (S, D) K/V block resident.
                pl.BlockSpec((1, S, D), lambda b, qi: (b, 0, 0)),     # x (K/V rows)
                pl.BlockSpec((1, 1, S), lambda b, qi: (b, 0, 0)),     # padding mask
            ]
            out_spec = pl.BlockSpec((1, TQ, D), lambda b, qi: (b, qi, 0))
            dim_sem = ("parallel", "parallel")

        in_specs = act_specs + [_const_spec(s, single_buffer_weights)
                                for s in weight_shapes]

        # VMEM budget: single-buffered bf16 weights + pipelined activation blocks
        # + in-kernel intermediates, with ~2x headroom (v7x has only 64 MiB VMEM).
        weight_bytes = 2 * (4 * D * D + 2 * D * dff)
        small_bytes = 4 * (8 * D + dff)
        act_bytes = 4 * 2 * (2 * TQ * D + S * D + S)
        live_bytes = 4 * (2 * num_heads * TQ * S + 2 * TQ * dff + 8 * TQ * D + 3 * S * D)
        budget = 2 * (weight_bytes + small_bytes + act_bytes + live_bytes) + (4 << 20)
        vmem_limit = int(min(96 * 1024 * 1024, max(16 * 1024 * 1024, budget)))

        flops = 2 * B * S * (4 * D * D + 2 * D * dff) + 4 * B * S * S * D
        cost = pl.CostEstimate(
            flops=int(flops),
            transcendentals=int(B * num_heads * S * S),
            bytes_accessed=int(2 * B * S * D * 4 + B * S * 4
                               + weight_bytes + small_bytes),
        )

        kernel = _make_kernel(shared_x, num_heads, compute_dtype)

        return pl.pallas_call(
            kernel,
            out_shape=jax.ShapeDtypeStruct((B, S, D), x.dtype),
            grid_spec=pltpu.PrefetchScalarGridSpec(
                num_scalar_prefetch=0,
                grid=grid,
                in_specs=in_specs,
                out_specs=out_spec,
            ),
            compiler_params=pltpu.CompilerParams(
                dimension_semantics=dim_sem,
                vmem_limit_bytes=vmem_limit,
            ),
            cost_estimate=cost,
        )

    weight_args = (
        wq, params["bq"], wk, params["bk"], wv, params["bv"],
        wo, params["bo"],
        params["g1"], params["be1"],
        w1, params["bf1"], w2, params["bf2"],
        params["g2"], params["be2"],
    )
    if shared_x:
        args = (x, padding_mask) + weight_args
    else:
        args = (x, x, padding_mask) + weight_args

    try:
        return _build(single_buffer_weights=True)(*args)
    except Exception:
        # Safety net: some JAX/Mosaic builds reject pl.Buffered(1) on the implicit
        # pallas_call pipeline only at lowering time; fall back to default buffering.
        return _build(single_buffer_weights=False)(*args)


# --------------------------- pure-JAX reference -------------------------------

def encoder_layer_ref(x, padding_mask, params, *, num_heads):
    B, S, D = x.shape
    depth = D // num_heads

    def dense(h, w, b):
        return h @ w + b

    q = dense(x, params["wq"], params["bq"])
    k = dense(x, params["wk"], params["bk"])
    v = dense(x, params["wv"], params["bv"])

    def split(h):  # (B,S,D) -> (B,H,S,depth)
        return h.reshape(B, S, num_heads, depth).transpose(0, 2, 1, 3)

    q, k, v = split(q), split(k), split(v)
    logits = jnp.einsum("bhqd,bhkd->bhqk", q, k) / jnp.sqrt(jnp.float32(depth))
    logits = logits + padding_mask[:, None, :, :] * (-1000000000.0)  # (B,1,1,S)
    w = jax.nn.softmax(logits, axis=-1)
    o = jnp.einsum("bhqk,bhkd->bhqd", w, v)
    concat = o.transpose(0, 2, 1, 3).reshape(B, S, D)
    attn_out = dense(concat, params["wo"], params["bo"])

    def ln(h, g, b):
        mu = jnp.mean(h, -1, keepdims=True)
        var = jnp.mean((h - mu) ** 2, -1, keepdims=True)
        return (h - mu) / jnp.sqrt(var + 1e-6) * g + b

    out1 = ln(x + attn_out, params["g1"], params["be1"])
    ffn = jax.nn.relu(dense(out1, params["w1"], params["bf1"]))
    ffn = dense(ffn, params["w2"], params["bf2"])
    return ln(out1 + ffn, params["g2"], params["be2"])


# --------------------------------- main ---------------------------------------

if __name__ == "__main__":
    B, S, D, H, DFF = 2, 8, 32, 4, 64

    key = jax.random.PRNGKey(0)
    keys = jax.random.split(key, 13)

    def init(k, shape, scale=0.1):
        return jax.random.normal(k, shape, dtype=jnp.float32) * scale

    params = {
        "wq": init(keys[0], (D, D)),  "bq": init(keys[1], (1, D)),
        "wk": init(keys[2], (D, D)),  "bk": init(keys[3], (1, D)),
        "wv": init(keys[4], (D, D)),  "bv": init(keys[5], (1, D)),
        "wo": init(keys[6], (D, D)),  "bo": init(keys[7], (1, D)),
        "g1": jnp.ones((1, D), jnp.float32), "be1": jnp.zeros((1, D), jnp.float32),
        "w1": init(keys[8], (D, DFF)), "bf1": init(keys[9], (1, DFF)),
        "w2": init(keys[10], (DFF, D)), "bf2": init(keys[11], (1, D)),
        "g2": jnp.ones((1, D), jnp.float32), "be2": jnp.zeros((1, D), jnp.float32),
    }

    x = jax.random.normal(keys[12], (B, S, D), dtype=jnp.float32)

    # token ids with trailing zeros -> padding mask (1.0 where token == 0)
    tokens = jnp.array([[3, 7, 2, 9, 1, 0, 0, 0],
                        [5, 4, 0, 0, 0, 0, 0, 0]], dtype=jnp.int32)
    padding_mask = (tokens == 0).astype(jnp.float32)[:, None, :]   # (B, 1, S)

    out = encoder_layer(x, padding_mask, params, num_heads=H)
    out = jax.block_until_ready(out)

    ref = encoder_layer_ref(x, padding_mask, params, num_heads=H)
    # bf16 MXU inputs + approx-reciprocal softmax vs. an all-f32 reference.
    np.testing.assert_allclose(np.asarray(out), np.asarray(ref), rtol=5e-2, atol=5e-2)

    print("KERNEL_OK")
</pallas_src>

<mosaic_0001>
module attributes {stable_mosaic.version = 11 : i64} {
  func.func @kernel(%arg0: i32, %arg1: memref<1x8x32xf32, #tpu.memory_space<vmem>>, %arg2: memref<1x1x8xf32, #tpu.memory_space<vmem>>, %arg3: memref<32x32xbf16, #tpu.memory_space<vmem>>, %arg4: memref<1x32xf32, #tpu.memory_space<vmem>>, %arg5: memref<32x32xbf16, #tpu.memory_space<vmem>>, %arg6: memref<1x32xf32, #tpu.memory_space<vmem>>, %arg7: memref<32x32xbf16, #tpu.memory_space<vmem>>, %arg8: memref<1x32xf32, #tpu.memory_space<vmem>>, %arg9: memref<32x32xbf16, #tpu.memory_space<vmem>>, %arg10: memref<1x32xf32, #tpu.memory_space<vmem>>, %arg11: memref<1x32xf32, #tpu.memory_space<vmem>>, %arg12: memref<1x32xf32, #tpu.memory_space<vmem>>, %arg13: memref<32x64xbf16, #tpu.memory_space<vmem>>, %arg14: memref<1x64xf32, #tpu.memory_space<vmem>>, %arg15: memref<64x32xbf16, #tpu.memory_space<vmem>>, %arg16: memref<1x32xf32, #tpu.memory_space<vmem>>, %arg17: memref<1x32xf32, #tpu.memory_space<vmem>>, %arg18: memref<1x32xf32, #tpu.memory_space<vmem>>, %arg19: memref<1x8x32xf32, #tpu.memory_space<vmem>>) attributes {dimension_semantics = [#tpu.dimension_semantics<parallel>], iteration_bounds = array<i64: 2>, scalar_prefetch = 0 : i64, scratch_operands = 0 : i64, tpu.core_type = #tpu.core_type<tc>, window_params = [{transform_indices = @transform_0, window_bounds = array<i64: 1, 8, 32>}, {transform_indices = @transform_1, window_bounds = array<i64: 1, 1, 8>}, {pipeline_mode = #tpu.pipeline_mode<synchronous>, transform_indices = @transform_2, window_bounds = array<i64: 32, 32>}, {pipeline_mode = #tpu.pipeline_mode<synchronous>, transform_indices = @transform_3, window_bounds = array<i64: 1, 32>}, {pipeline_mode = #tpu.pipeline_mode<synchronous>, transform_indices = @transform_4, window_bounds = array<i64: 32, 32>}, {pipeline_mode = #tpu.pipeline_mode<synchronous>, transform_indices = @transform_5, window_bounds = array<i64: 1, 32>}, {pipeline_mode = #tpu.pipeline_mode<synchronous>, transform_indices = @transform_6, window_bounds = array<i64: 32, 32>}, {pipeline_mode = #tpu.pipeline_mode<synchronous>, transform_indices = @transform_7, window_bounds = array<i64: 1, 32>}, {pipeline_mode = #tpu.pipeline_mode<synchronous>, transform_indices = @transform_8, window_bounds = array<i64: 32, 32>}, {pipeline_mode = #tpu.pipeline_mode<synchronous>, transform_indices = @transform_9, window_bounds = array<i64: 1, 32>}, {pipeline_mode = #tpu.pipeline_mode<synchronous>, transform_indices = @transform_10, window_bounds = array<i64: 1, 32>}, {pipeline_mode = #tpu.pipeline_mode<synchronous>, transform_indices = @transform_11, window_bounds = array<i64: 1, 32>}, {pipeline_mode = #tpu.pipeline_mode<synchronous>, transform_indices = @transform_12, window_bounds = array<i64: 32, 64>}, {pipeline_mode = #tpu.pipeline_mode<synchronous>, transform_indices = @transform_13, window_bounds = array<i64: 1, 64>}, {pipeline_mode = #tpu.pipeline_mode<synchronous>, transform_indices = @transform_14, window_bounds = array<i64: 64, 32>}, {pipeline_mode = #tpu.pipeline_mode<synchronous>, transform_indices = @transform_15, window_bounds = array<i64: 1, 32>}, {pipeline_mode = #tpu.pipeline_mode<synchronous>, transform_indices = @transform_16, window_bounds = array<i64: 1, 32>}, {pipeline_mode = #tpu.pipeline_mode<synchronous>, transform_indices = @transform_17, window_bounds = array<i64: 1, 32>}, {transform_indices = @transform_18, window_bounds = array<i64: 1, 8, 32>}]} {
    %c0 = arith.constant 0 : index
    %c0_0 = arith.constant 0 : index
    %c0_1 = arith.constant 0 : index
    %0 = vector.load %arg1[%c0, %c0_0, %c0_1] : memref<1x8x32xf32, #tpu.memory_space<vmem>>, vector<1x8x32xf32>
    %1 = vector.shape_cast %0 : vector<1x8x32xf32> to vector<8x32xf32>
    %2 = arith.truncf %1 : vector<8x32xf32> to vector<8x32xbf16>
    %c0_2 = arith.constant 0 : index
    %c0_3 = arith.constant 0 : index
    %c0_4 = arith.constant 0 : index
    %3 = vector.load %arg2[%c0_2, %c0_3, %c0_4] : memref<1x1x8xf32, #tpu.memory_space<vmem>>, vector<1x1x8xf32>
    %4 = vector.shape_cast %3 : vector<1x1x8xf32> to vector<1x8xf32>
    %cst = arith.constant -1.000000e+09 : f32
    %5 = vector.broadcast %cst : f32 to vector<1x8xf32>
    %6 = arith.mulf %4, %5 : vector<1x8xf32>
    %c0_5 = arith.constant 0 : index
    %c0_6 = arith.constant 0 : index
    %7 = vector.load %arg3[%c0_5, %c0_6] : memref<32x32xbf16, #tpu.memory_space<vmem>>, vector<32x32xbf16>
    %c0_7 = arith.constant 0 : index
    %c0_8 = arith.constant 0 : index
    %8 = vector.load %arg4[%c0_7, %c0_8] : memref<1x32xf32, #tpu.memory_space<vmem>>, vector<1x32xf32>
    %c0_9 = arith.constant 0 : index
    %c0_10 = arith.constant 0 : index
    %9 = vector.load %arg5[%c0_9, %c0_10] : memref<32x32xbf16, #tpu.memory_space<vmem>>, vector<32x32xbf16>
    %c0_11 = arith.constant 0 : index
    %c0_12 = arith.constant 0 : index
    %10 = vector.load %arg6[%c0_11, %c0_12] : memref<1x32xf32, #tpu.memory_space<vmem>>, vector<1x32xf32>
    %c0_13 = arith.constant 0 : index
    %c0_14 = arith.constant 0 : index
    %11 = vector.load %arg7[%c0_13, %c0_14] : memref<32x32xbf16, #tpu.memory_space<vmem>>, vector<32x32xbf16>
    %c0_15 = arith.constant 0 : index
    %c0_16 = arith.constant 0 : index
    %12 = vector.load %arg8[%c0_15, %c0_16] : memref<1x32xf32, #tpu.memory_space<vmem>>, vector<1x32xf32>
    %c0_17 = arith.constant 0 : index
    %c0_18 = arith.constant 0 : index
    %13 = vector.load %arg9[%c0_17, %c0_18] : memref<32x32xbf16, #tpu.memory_space<vmem>>, vector<32x32xbf16>
    %c0_19 = arith.constant 0 : index
    %c0_20 = arith.constant 0 : index
    %14 = vector.load %arg10[%c0_19, %c0_20] : memref<1x32xf32, #tpu.memory_space<vmem>>, vector<1x32xf32>
    %c0_21 = arith.constant 0 : index
    %c0_22 = arith.constant 0 : index
    %15 = vector.load %arg11[%c0_21, %c0_22] : memref<1x32xf32, #tpu.memory_space<vmem>>, vector<1x32xf32>
    %c0_23 = arith.constant 0 : index
    %c0_24 = arith.constant 0 : index
    %16 = vector.load %arg12[%c0_23, %c0_24] : memref<1x32xf32, #tpu.memory_space<vmem>>, vector<1x32xf32>
    %c0_25 = arith.constant 0 : index
    %c0_26 = arith.constant 0 : index
    %17 = vector.load %arg13[%c0_25, %c0_26] : memref<32x64xbf16, #tpu.memory_space<vmem>>, vector<32x64xbf16>
    %c0_27 = arith.constant 0 : index
    %c0_28 = arith.constant 0 : index
    %18 = vector.load %arg14[%c0_27, %c0_28] : memref<1x64xf32, #tpu.memory_space<vmem>>, vector<1x64xf32>
    %c0_29 = arith.constant 0 : index
    %c0_30 = arith.constant 0 : index
    %19 = vector.load %arg15[%c0_29, %c0_30] : memref<64x32xbf16, #tpu.memory_space<vmem>>, vector<64x32xbf16>
    %c0_31 = arith.constant 0 : index
    %c0_32 = arith.constant 0 : index
    %20 = vector.load %arg16[%c0_31, %c0_32] : memref<1x32xf32, #tpu.memory_space<vmem>>, vector<1x32xf32>
    %c0_33 = arith.constant 0 : index
    %c0_34 = arith.constant 0 : index
    %21 = vector.load %arg17[%c0_33, %c0_34] : memref<1x32xf32, #tpu.memory_space<vmem>>, vector<1x32xf32>
    %c0_35 = arith.constant 0 : index
    %c0_36 = arith.constant 0 : index
    %22 = vector.load %arg18[%c0_35, %c0_36] : memref<1x32xf32, #tpu.memory_space<vmem>>, vector<1x32xf32>
    %cst_37 = arith.constant 8.000000e+00 : f32
    %23 = math.sqrt %cst_37 : f32
    %cst_38 = arith.constant 1.000000e+00 : f32
    %24 = arith.divf %cst_38, %23 : f32
    %25 = arith.truncf %1 : vector<8x32xf32> to vector<8x32xbf16>
    %cst_39 = arith.constant dense<0.000000e+00> : vector<8x32xf32>
    %26 = tpu.matmul %25, %7, %cst_39 {dimension_numbers = #tpu.dot_dimension_numbers<[1], [0], [0], [1], [0, 0, 1, 1], [], []>} : vector<8x32xbf16>, vector<32x32xbf16>, vector<8x32xf32> -> vector<8x32xf32>
    %27 = vector.broadcast %8 : vector<1x32xf32> to vector<8x32xf32>
    %28 = arith.addf %26, %27 : vector<8x32xf32>
    %cst_40 = arith.constant dense<0.000000e+00> : vector<8x32xf32>
    %29 = tpu.matmul %2, %9, %cst_40 {dimension_numbers = #tpu.dot_dimension_numbers<[1], [0], [0], [1], [0, 0, 1, 1], [], []>} : vector<8x32xbf16>, vector<32x32xbf16>, vector<8x32xf32> -> vector<8x32xf32>
    %30 = vector.broadcast %10 : vector<1x32xf32> to vector<8x32xf32>
    %31 = arith.addf %29, %30 : vector<8x32xf32>
    %cst_41 = arith.constant dense<0.000000e+00> : vector<8x32xf32>
    %32 = tpu.matmul %2, %11, %cst_41 {dimension_numbers = #tpu.dot_dimension_numbers<[1], [0], [0], [1], [0, 0, 1, 1], [], []>} : vector<8x32xbf16>, vector<32x32xbf16>, vector<8x32xf32> -> vector<8x32xf32>
    %33 = vector.broadcast %12 : vector<1x32xf32> to vector<8x32xf32>
    %34 = arith.addf %32, %33 : vector<8x32xf32>
    %35 = vector.shape_cast %28 : vector<8x32xf32> to vector<8x4x8xf32>
    %36 = tpu.transpose %35, [1, 0, 2] : vector<8x4x8xf32> -> vector<4x8x8xf32>
    %37 = arith.truncf %36 : vector<4x8x8xf32> to vector<4x8x8xbf16>
    %38 = vector.shape_cast %31 : vector<8x32xf32> to vector<8x4x8xf32>
    %39 = tpu.transpose %38, [1, 0, 2] : vector<8x4x8xf32> -> vector<4x8x8xf32>
    %40 = arith.truncf %39 : vector<4x8x8xf32> to vector<4x8x8xbf16>
    %41 = vector.shape_cast %34 : vector<8x32xf32> to vector<8x4x8xf32>
    %42 = tpu.transpose %41, [1, 0, 2] : vector<8x4x8xf32> -> vector<4x8x8xf32>
    %43 = arith.truncf %42 : vector<4x8x8xf32> to vector<4x8x8xbf16>
    "tpu.trace_start"() <{level = 10 : i32, message = "hqd,hkd->hqk"}> : () -> ()
    %cst_42 = arith.constant dense<0.000000e+00> : vector<4x8x8xf32>
    %44 = tpu.matmul %37, %40, %cst_42 {dimension_numbers = #tpu.dot_dimension_numbers<[2], [2], [1], [1], [0, 0, 0, 1, 1, 1], [0], [0]>} : vector<4x8x8xbf16>, vector<4x8x8xbf16>, vector<4x8x8xf32> -> vector<4x8x8xf32>
    "tpu.trace_stop"() : () -> ()
    %45 = vector.broadcast %24 : f32 to vector<4x8x8xf32>
    %46 = arith.mulf %44, %45 : vector<4x8x8xf32>
    %47 = vector.shape_cast %6 : vector<1x8xf32> to vector<1x1x8xf32>
    %48 = vector.broadcast %47 : vector<1x1x8xf32> to vector<4x8x8xf32>
    %49 = arith.addf %46, %48 : vector<4x8x8xf32>
    %cst_43 = arith.constant dense<0xFF800000> : vector<4x8xf32>
    %50 = vector.multi_reduction <maximumf>, %49, %cst_43 [2] : vector<4x8x8xf32> to vector<4x8xf32>
    %51 = vector.shape_cast %50 : vector<4x8xf32> to vector<4x8x1xf32>
    %52 = vector.broadcast %51 : vector<4x8x1xf32> to vector<4x8x8xf32>
    %53 = arith.subf %49, %52 : vector<4x8x8xf32>
    %54 = math.exp %53 : vector<4x8x8xf32>
    %cst_44 = arith.constant dense<0.000000e+00> : vector<4x8xf32>
    %55 = vector.multi_reduction <add>, %54, %cst_44 [2] : vector<4x8x8xf32> to vector<4x8xf32>
    %56 = vector.shape_cast %55 : vector<4x8xf32> to vector<4x8x1xf32>
    %57 = tpu.reciprocal %56 {approx = true} : vector<4x8x1xf32> -> vector<4x8x1xf32>
    %58 = vector.broadcast %57 : vector<4x8x1xf32> to vector<4x8x8xf32>
    %59 = arith.mulf %54, %58 : vector<4x8x8xf32>
    %60 = arith.truncf %59 : vector<4x8x8xf32> to vector<4x8x8xbf16>
    "tpu.trace_start"() <{level = 10 : i32, message = "hqk,hkd->hqd"}> : () -> ()
    %cst_45 = arith.constant dense<0.000000e+00> : vector<4x8x8xf32>
    %61 = tpu.matmul %60, %43, %cst_45 {dimension_numbers = #tpu.dot_dimension_numbers<[2], [1], [1], [2], [0, 0, 0, 1, 1, 2], [0], [0]>} : vector<4x8x8xbf16>, vector<4x8x8xbf16>, vector<4x8x8xf32> -> vector<4x8x8xf32>
    "tpu.trace_stop"() : () -> ()
    %62 = tpu.transpose %61, [1, 0, 2] : vector<4x8x8xf32> -> vector<8x4x8xf32>
    %63 = vector.shape_cast %62 : vector<8x4x8xf32> to vector<8x32xf32>
    %64 = arith.truncf %63 : vector<8x32xf32> to vector<8x32xbf16>
    %cst_46 = arith.constant dense<0.000000e+00> : vector<8x32xf32>
    %65 = tpu.matmul %64, %13, %cst_46 {dimension_numbers = #tpu.dot_dimension_numbers<[1], [0], [0], [1], [0, 0, 1, 1], [], []>} : vector<8x32xbf16>, vector<32x32xbf16>, vector<8x32xf32> -> vector<8x32xf32>
    %66 = vector.broadcast %14 : vector<1x32xf32> to vector<8x32xf32>
    %67 = arith.addf %65, %66 : vector<8x32xf32>
    %68 = arith.addf %1, %67 : vector<8x32xf32>
    %cst_47 = arith.constant dense<0.000000e+00> : vector<8xf32>
    %69 = vector.multi_reduction <add>, %68, %cst_47 [1] : vector<8x32xf32> to vector<8xf32>
    %70 = vector.shape_cast %69 : vector<8xf32> to vector<8x1xf32>
    %cst_48 = arith.constant 3.200000e+01 : f32
    %71 = vector.broadcast %cst_48 : f32 to vector<8x1xf32>
    %72 = arith.divf %70, %71 : vector<8x1xf32>
    %73 = vector.broadcast %72 : vector<8x1xf32> to vector<8x32xf32>
    %74 = arith.subf %68, %73 : vector<8x32xf32>
    %75 = arith.mulf %74, %74 : vector<8x32xf32>
    %cst_49 = arith.constant dense<0.000000e+00> : vector<8xf32>
    %76 = vector.multi_reduction <add>, %75, %cst_49 [1] : vector<8x32xf32> to vector<8xf32>
    %77 = vector.shape_cast %76 : vector<8xf32> to vector<8x1xf32>
    %cst_50 = arith.constant 3.200000e+01 : f32
    %78 = vector.broadcast %cst_50 : f32 to vector<8x1xf32>
    %79 = arith.divf %77, %78 : vector<8x1xf32>
    %80 = vector.broadcast %72 : vector<8x1xf32> to vector<8x32xf32>
    %81 = arith.subf %68, %80 : vector<8x32xf32>
    %cst_51 = arith.constant 9.99999997E-7 : f32
    %82 = vector.broadcast %cst_51 : f32 to vector<8x1xf32>
    %83 = arith.addf %79, %82 : vector<8x1xf32>
    %84 = math.rsqrt %83 : vector<8x1xf32>
    %85 = vector.broadcast %84 : vector<8x1xf32> to vector<8x32xf32>
    %86 = arith.mulf %81, %85 : vector<8x32xf32>
    %87 = vector.broadcast %15 : vector<1x32xf32> to vector<8x32xf32>
    %88 = arith.mulf %86, %87 : vector<8x32xf32>
    %89 = vector.broadcast %16 : vector<1x32xf32> to vector<8x32xf32>
    %90 = arith.addf %88, %89 : vector<8x32xf32>
    %91 = arith.truncf %90 : vector<8x32xf32> to vector<8x32xbf16>
    %cst_52 = arith.constant dense<0.000000e+00> : vector<8x64xf32>
    %92 = tpu.matmul %91, %17, %cst_52 {dimension_numbers = #tpu.dot_dimension_numbers<[1], [0], [0], [1], [0, 0, 1, 1], [], []>} : vector<8x32xbf16>, vector<32x64xbf16>, vector<8x64xf32> -> vector<8x64xf32>
    %93 = vector.broadcast %18 : vector<1x64xf32> to vector<8x64xf32>
    %94 = arith.addf %92, %93 : vector<8x64xf32>
    %cst_53 = arith.constant 0.000000e+00 : f32
    %95 = vector.broadcast %cst_53 : f32 to vector<8x64xf32>
    %96 = arith.maximumf %94, %95 : vector<8x64xf32>
    %97 = arith.truncf %96 : vector<8x64xf32> to vector<8x64xbf16>
    %cst_54 = arith.constant dense<0.000000e+00> : vector<8x32xf32>
    %98 = tpu.matmul %97, %19, %cst_54 {dimension_numbers = #tpu.dot_dimension_numbers<[1], [0], [0], [1], [0, 0, 1, 1], [], []>} : vector<8x64xbf16>, vector<64x32xbf16>, vector<8x32xf32> -> vector<8x32xf32>
    %99 = vector.broadcast %20 : vector<1x32xf32> to vector<8x32xf32>
    %100 = arith.addf %98, %99 : vector<8x32xf32>
    %101 = arith.addf %90, %100 : vector<8x32xf32>
    %cst_55 = arith.constant dense<0.000000e+00> : vector<8xf32>
    %102 = vector.multi_reduction <add>, %101, %cst_55 [1] : vector<8x32xf32> to vector<8xf32>
    %103 = vector.shape_cast %102 : vector<8xf32> to vector<8x1xf32>
    %cst_56 = arith.constant 3.200000e+01 : f32
    %104 = vector.broadcast %cst_56 : f32 to vector<8x1xf32>
    %105 = arith.divf %103, %104 : vector<8x1xf32>
    %106 = vector.broadcast %105 : vector<8x1xf32> to vector<8x32xf32>
    %107 = arith.subf %101, %106 : vector<8x32xf32>
    %108 = arith.mulf %107, %107 : vector<8x32xf32>
    %cst_57 = arith.constant dense<0.000000e+00> : vector<8xf32>
    %109 = vector.multi_reduction <add>, %108, %cst_57 [1] : vector<8x32xf32> to vector<8xf32>
    %110 = vector.shape_cast %109 : vector<8xf32> to vector<8x1xf32>
    %cst_58 = arith.constant 3.200000e+01 : f32
    %111 = vector.broadcast %cst_58 : f32 to vector<8x1xf32>
    %112 = arith.divf %110, %111 : vector<8x1xf32>
    %113 = vector.broadcast %105 : vector<8x1xf32> to vector<8x32xf32>
    %114 = arith.subf %101, %113 : vector<8x32xf32>
    %cst_59 = arith.constant 9.99999997E-7 : f32
    %115 = vector.broadcast %cst_59 : f32 to vector<8x1xf32>
    %116 = arith.addf %112, %115 : vector<8x1xf32>
    %117 = math.rsqrt %116 : vector<8x1xf32>
    %118 = vector.broadcast %117 : vector<8x1xf32> to vector<8x32xf32>
    %119 = arith.mulf %114, %118 : vector<8x32xf32>
    %120 = vector.broadcast %21 : vector<1x32xf32> to vector<8x32xf32>
    %121 = arith.mulf %119, %120 : vector<8x32xf32>
    %122 = vector.broadcast %22 : vector<1x32xf32> to vector<8x32xf32>
    %123 = arith.addf %121, %122 : vector<8x32xf32>
    %c0_60 = arith.constant 0 : index
    %c0_61 = arith.constant 0 : index
    %c0_62 = arith.constant 0 : index
    %124 = vector.load %arg19[%c0_60, %c0_61, %c0_62] : memref<1x8x32xf32, #tpu.memory_space<vmem>>, vector<1x8x32xf32>
    %125 = vector.shape_cast %124 : vector<1x8x32xf32> to vector<8x32xf32>
    %126 = vector.shape_cast %123 : vector<8x32xf32> to vector<1x8x32xf32>
    tpu.vector_store %arg19[%c0_60, %c0_61, %c0_62], %126 {strides = array<i32>} : memref<1x8x32xf32, #tpu.memory_space<vmem>>, vector<1x8x32xf32>,
    return
  }
  func.func @transform_0(%arg0: i32) -> (i32, i32, i32) {
    %c0_i32 = arith.constant 0 : i32
    %c0_i32_0 = arith.constant 0 : i32
    %c0_i32_1 = arith.constant 0 : i32
    return %arg0, %c0_i32, %c0_i32_0 : i32, i32, i32
  }
  func.func @transform_1(%arg0: i32) -> (i32, i32, i32) {
    %c0_i32 = arith.constant 0 : i32
    %c0_i32_0 = arith.constant 0 : i32
    %c0_i32_1 = arith.constant 0 : i32
    return %arg0, %c0_i32, %c0_i32_0 : i32, i32, i32
  }
  func.func @transform_2(%arg0: i32) -> (i32, i32) {
    %c0_i32 = arith.constant 0 : i32
    %c0_i32_0 = arith.constant 0 : i32
    %c0_i32_1 = arith.constant 0 : i32
    return %c0_i32, %c0_i32_0 : i32, i32
  }
  func.func @transform_3(%arg0: i32) -> (i32, i32) {
    %c0_i32 = arith.constant 0 : i32
    %c0_i32_0 = arith.constant 0 : i32
    %c0_i32_1 = arith.constant 0 : i32
    return %c0_i32, %c0_i32_0 : i32, i32
  }
  func.func @transform_4(%arg0: i32) -> (i32, i32) {
    %c0_i32 = arith.constant 0 : i32
    %c0_i32_0 = arith.constant 0 : i32
    %c0_i32_1 = arith.constant 0 : i32
    return %c0_i32, %c0_i32_0 : i32, i32
  }
  func.func @transform_5(%arg0: i32) -> (i32, i32) {
    %c0_i32 = arith.constant 0 : i32
    %c0_i32_0 = arith.constant 0 : i32
    %c0_i32_1 = arith.constant 0 : i32
    return %c0_i32, %c0_i32_0 : i32, i32
  }
  func.func @transform_6(%arg0: i32) -> (i32, i32) {
    %c0_i32 = arith.constant 0 : i32
    %c0_i32_0 = arith.constant 0 : i32
    %c0_i32_1 = arith.constant 0 : i32
    return %c0_i32, %c0_i32_0 : i32, i32
  }
  func.func @transform_7(%arg0: i32) -> (i32, i32) {
    %c0_i32 = arith.constant 0 : i32
    %c0_i32_0 = arith.constant 0 : i32
    %c0_i32_1 = arith.constant 0 : i32
    return %c0_i32, %c0_i32_0 : i32, i32
  }
  func.func @transform_8(%arg0: i32) -> (i32, i32) {
    %c0_i32 = arith.constant 0 : i32
    %c0_i32_0 = arith.constant 0 : i32
    %c0_i32_1 = arith.constant 0 : i32
    return %c0_i32, %c0_i32_0 : i32, i32
  }
  func.func @transform_9(%arg0: i32) -> (i32, i32) {
    %c0_i32 = arith.constant 0 : i32
    %c0_i32_0 = arith.constant 0 : i32
    %c0_i32_1 = arith.constant 0 : i32
    return %c0_i32, %c0_i32_0 : i32, i32
  }
  func.func @transform_10(%arg0: i32) -> (i32, i32) {
    %c0_i32 = arith.constant 0 : i32
    %c0_i32_0 = arith.constant 0 : i32
    %c0_i32_1 = arith.constant 0 : i32
    return %c0_i32, %c0_i32_0 : i32, i32
  }
  func.func @transform_11(%arg0: i32) -> (i32, i32) {
    %c0_i32 = arith.constant 0 : i32
    %c0_i32_0 = arith.constant 0 : i32
    %c0_i32_1 = arith.constant 0 : i32
    return %c0_i32, %c0_i32_0 : i32, i32
  }
  func.func @transform_12(%arg0: i32) -> (i32, i32) {
    %c0_i32 = arith.constant 0 : i32
    %c0_i32_0 = arith.constant 0 : i32
    %c0_i32_1 = arith.constant 0 : i32
    return %c0_i32, %c0_i32_0 : i32, i32
  }
  func.func @transform_13(%arg0: i32) -> (i32, i32) {
    %c0_i32 = arith.constant 0 : i32
    %c0_i32_0 = arith.constant 0 : i32
    %c0_i32_1 = arith.constant 0 : i32
    return %c0_i32, %c0_i32_0 : i32, i32
  }
  func.func @transform_14(%arg0: i32) -> (i32, i32) {
    %c0_i32 = arith.constant 0 : i32
    %c0_i32_0 = arith.constant 0 : i32
    %c0_i32_1 = arith.constant 0 : i32
    return %c0_i32, %c0_i32_0 : i32, i32
  }
  func.func @transform_15(%arg0: i32) -> (i32, i32) {
    %c0_i32 = arith.constant 0 : i32
    %c0_i32_0 = arith.constant 0 : i32
    %c0_i32_1 = arith.constant 0 : i32
    return %c0_i32, %c0_i32_0 : i32, i32
  }
  func.func @transform_16(%arg0: i32) -> (i32, i32) {
    %c0_i32 = arith.constant 0 : i32
    %c0_i32_0 = arith.constant 0 : i32
    %c0_i32_1 = arith.constant 0 : i32
    return %c0_i32, %c0_i32_0 : i32, i32
  }
  func.func @transform_17(%arg0: i32) -> (i32, i32) {
    %c0_i32 = arith.constant 0 : i32
    %c0_i32_0 = arith.constant 0 : i32
    %c0_i32_1 = arith.constant 0 : i32
    return %c0_i32, %c0_i32_0 : i32, i32
  }
  func.func @transform_18(%arg0: i32) -> (i32, i32, i32) {
    %c0_i32 = arith.constant 0 : i32
    %c0_i32_0 = arith.constant 0 : i32
    %c0_i32_1 = arith.constant 0 : i32
    return %arg0, %c0_i32, %c0_i32_0 : i32, i32, i32
  }
}

module attributes {stable_mosaic.version = 11 : i64} {
  func.func @kernel(%arg0: i32, %arg1: memref<1x8x32xf32, #tpu.memory_space<vmem>>, %arg2: memref<1x1x8xf32, #tpu.memory_space<vmem>>, %arg3: memref<32x32xbf16, #tpu.memory_space<vmem>>, %arg4: memref<1x32xf32, #tpu.memory_space<vmem>>, %arg5: memref<32x32xbf16, #tpu.memory_space<vmem>>, %arg6: memref<1x32xf32, #tpu.memory_space<vmem>>, %arg7: memref<32x32xbf16, #tpu.memory_space<vmem>>, %arg8: memref<1x32xf32, #tpu.memory_space<vmem>>, %arg9: memref<32x32xbf16, #tpu.memory_space<vmem>>, %arg10: memref<1x32xf32, #tpu.memory_space<vmem>>, %arg11: memref<1x32xf32, #tpu.memory_space<vmem>>, %arg12: memref<1x32xf32, #tpu.memory_space<vmem>>, %arg13: memref<32x64xbf16, #tpu.memory_space<vmem>>, %arg14: memref<1x64xf32, #tpu.memory_space<vmem>>, %arg15: memref<64x32xbf16, #tpu.memory_space<vmem>>, %arg16: memref<1x32xf32, #tpu.memory_space<vmem>>, %arg17: memref<1x32xf32, #tpu.memory_space<vmem>>, %arg18: memref<1x32xf32, #tpu.memory_space<vmem>>, %arg19: memref<1x8x32xf32, #tpu.memory_space<vmem>>) attributes {dimension_semantics = [#tpu.dimension_semantics<parallel>], iteration_bounds = array<i64: 2>, scalar_prefetch = 0 : i64, scratch_operands = 0 : i64, tpu.core_type = #tpu.core_type<tc>, window_params = [{transform_indices = @transform_0, window_bounds = array<i64: 1, 8, 32>}, {transform_indices = @transform_1, window_bounds = array<i64: 1, 1, 8>}, {pipeline_mode = #tpu.pipeline_mode<synchronous>, transform_indices = @transform_2, window_bounds = array<i64: 32, 32>}, {pipeline_mode = #tpu.pipeline_mode<synchronous>, transform_indices = @transform_3, window_bounds = array<i64: 1, 32>}, {pipeline_mode = #tpu.pipeline_mode<synchronous>, transform_indices = @transform_4, window_bounds = array<i64: 32, 32>}, {pipeline_mode = #tpu.pipeline_mode<synchronous>, transform_indices = @transform_5, window_bounds = array<i64: 1, 32>}, {pipeline_mode = #tpu.pipeline_mode<synchronous>, transform_indices = @transform_6, window_bounds = array<i64: 32, 32>}, {pipeline_mode = #tpu.pipeline_mode<synchronous>, transform_indices = @transform_7, window_bounds = array<i64: 1, 32>}, {pipeline_mode = #tpu.pipeline_mode<synchronous>, transform_indices = @transform_8, window_bounds = array<i64: 32, 32>}, {pipeline_mode = #tpu.pipeline_mode<synchronous>, transform_indices = @transform_9, window_bounds = array<i64: 1, 32>}, {pipeline_mode = #tpu.pipeline_mode<synchronous>, transform_indices = @transform_10, window_bounds = array<i64: 1, 32>}, {pipeline_mode = #tpu.pipeline_mode<synchronous>, transform_indices = @transform_11, window_bounds = array<i64: 1, 32>}, {pipeline_mode = #tpu.pipeline_mode<synchronous>, transform_indices = @transform_12, window_bounds = array<i64: 32, 64>}, {pipeline_mode = #tpu.pipeline_mode<synchronous>, transform_indices = @transform_13, window_bounds = array<i64: 1, 64>}, {pipeline_mode = #tpu.pipeline_mode<synchronous>, transform_indices = @transform_14, window_bounds = array<i64: 64, 32>}, {pipeline_mode = #tpu.pipeline_mode<synchronous>, transform_indices = @transform_15, window_bounds = array<i64: 1, 32>}, {pipeline_mode = #tpu.pipeline_mode<synchronous>, transform_indices = @transform_16, window_bounds = array<i64: 1, 32>}, {pipeline_mode = #tpu.pipeline_mode<synchronous>, transform_indices = @transform_17, window_bounds = array<i64: 1, 32>}, {transform_indices = @transform_18, window_bounds = array<i64: 1, 8, 32>}]} {
    %c0 = arith.constant 0 : index
    %c0_0 = arith.constant 0 : index
    %c0_1 = arith.constant 0 : index
    %0 = vector.load %arg1[%c0, %c0_0, %c0_1] : memref<1x8x32xf32, #tpu.memory_space<vmem>>, vector<1x8x32xf32>
    %1 = vector.shape_cast %0 : vector<1x8x32xf32> to vector<8x32xf32>
    %2 = arith.truncf %1 : vector<8x32xf32> to vector<8x32xbf16>
    %c0_2 = arith.constant 0 : index
    %c0_3 = arith.constant 0 : index
    %c0_4 = arith.constant 0 : index
    %3 = vector.load %arg2[%c0_2, %c0_3, %c0_4] : memref<1x1x8xf32, #tpu.memory_space<vmem>>, vector<1x1x8xf32>
    %4 = vector.shape_cast %3 : vector<1x1x8xf32> to vector<1x8xf32>
    %cst = arith.constant -1.000000e+09 : f32
    %5 = vector.broadcast %cst : f32 to vector<1x8xf32>
    %6 = arith.mulf %4, %5 : vector<1x8xf32>
    %c0_5 = arith.constant 0 : index
    %c0_6 = arith.constant 0 : index
    %7 = vector.load %arg3[%c0_5, %c0_6] : memref<32x32xbf16, #tpu.memory_space<vmem>>, vector<32x32xbf16>
    %c0_7 = arith.constant 0 : index
    %c0_8 = arith.constant 0 : index
    %8 = vector.load %arg4[%c0_7, %c0_8] : memref<1x32xf32, #tpu.memory_space<vmem>>, vector<1x32xf32>
    %c0_9 = arith.constant 0 : index
    %c0_10 = arith.constant 0 : index
    %9 = vector.load %arg5[%c0_9, %c0_10] : memref<32x32xbf16, #tpu.memory_space<vmem>>, vector<32x32xbf16>
    %c0_11 = arith.constant 0 : index
    %c0_12 = arith.constant 0 : index
    %10 = vector.load %arg6[%c0_11, %c0_12] : memref<1x32xf32, #tpu.memory_space<vmem>>, vector<1x32xf32>
    %c0_13 = arith.constant 0 : index
    %c0_14 = arith.constant 0 : index
    %11 = vector.load %arg7[%c0_13, %c0_14] : memref<32x32xbf16, #tpu.memory_space<vmem>>, vector<32x32xbf16>
    %c0_15 = arith.constant 0 : index
    %c0_16 = arith.constant 0 : index
    %12 = vector.load %arg8[%c0_15, %c0_16] : memref<1x32xf32, #tpu.memory_space<vmem>>, vector<1x32xf32>
    %c0_17 = arith.constant 0 : index
    %c0_18 = arith.constant 0 : index
    %13 = vector.load %arg9[%c0_17, %c0_18] : memref<32x32xbf16, #tpu.memory_space<vmem>>, vector<32x32xbf16>
    %c0_19 = arith.constant 0 : index
    %c0_20 = arith.constant 0 : index
    %14 = vector.load %arg10[%c0_19, %c0_20] : memref<1x32xf32, #tpu.memory_space<vmem>>, vector<1x32xf32>
    %c0_21 = arith.constant 0 : index
    %c0_22 = arith.constant 0 : index
    %15 = vector.load %arg11[%c0_21, %c0_22] : memref<1x32xf32, #tpu.memory_space<vmem>>, vector<1x32xf32>
    %c0_23 = arith.constant 0 : index
    %c0_24 = arith.constant 0 : index
    %16 = vector.load %arg12[%c0_23, %c0_24] : memref<1x32xf32, #tpu.memory_space<vmem>>, vector<1x32xf32>
    %c0_25 = arith.constant 0 : index
    %c0_26 = arith.constant 0 : index
    %17 = vector.load %arg13[%c0_25, %c0_26] : memref<32x64xbf16, #tpu.memory_space<vmem>>, vector<32x64xbf16>
    %c0_27 = arith.constant 0 : index
    %c0_28 = arith.constant 0 : index
    %18 = vector.load %arg14[%c0_27, %c0_28] : memref<1x64xf32, #tpu.memory_space<vmem>>, vector<1x64xf32>
    %c0_29 = arith.constant 0 : index
    %c0_30 = arith.constant 0 : index
    %19 = vector.load %arg15[%c0_29, %c0_30] : memref<64x32xbf16, #tpu.memory_space<vmem>>, vector<64x32xbf16>
    %c0_31 = arith.constant 0 : index
    %c0_32 = arith.constant 0 : index
    %20 = vector.load %arg16[%c0_31, %c0_32] : memref<1x32xf32, #tpu.memory_space<vmem>>, vector<1x32xf32>
    %c0_33 = arith.constant 0 : index
    %c0_34 = arith.constant 0 : index
    %21 = vector.load %arg17[%c0_33, %c0_34] : memref<1x32xf32, #tpu.memory_space<vmem>>, vector<1x32xf32>
    %c0_35 = arith.constant 0 : index
    %c0_36 = arith.constant 0 : index
    %22 = vector.load %arg18[%c0_35, %c0_36] : memref<1x32xf32, #tpu.memory_space<vmem>>, vector<1x32xf32>
    %cst_37 = arith.constant 8.000000e+00 : f32
    %23 = math.sqrt %cst_37 : f32
    %cst_38 = arith.constant 1.000000e+00 : f32
    %24 = arith.divf %cst_38, %23 : f32
    %25 = arith.truncf %1 : vector<8x32xf32> to vector<8x32xbf16>
    %cst_39 = arith.constant dense<0.000000e+00> : vector<8x32xf32>
    %26 = tpu.matmul %25, %7, %cst_39 {dimension_numbers = #tpu.dot_dimension_numbers<[1], [0], [0], [1], [0, 0, 1, 1], [], []>} : vector<8x32xbf16>, vector<32x32xbf16>, vector<8x32xf32> -> vector<8x32xf32>
    %27 = vector.broadcast %8 : vector<1x32xf32> to vector<8x32xf32>
    %28 = arith.addf %26, %27 : vector<8x32xf32>
    %cst_40 = arith.constant dense<0.000000e+00> : vector<8x32xf32>
    %29 = tpu.matmul %2, %9, %cst_40 {dimension_numbers = #tpu.dot_dimension_numbers<[1], [0], [0], [1], [0, 0, 1, 1], [], []>} : vector<8x32xbf16>, vector<32x32xbf16>, vector<8x32xf32> -> vector<8x32xf32>
    %30 = vector.broadcast %10 : vector<1x32xf32> to vector<8x32xf32>
    %31 = arith.addf %29, %30 : vector<8x32xf32>
    %cst_41 = arith.constant dense<0.000000e+00> : vector<8x32xf32>
    %32 = tpu.matmul %2, %11, %cst_41 {dimension_numbers = #tpu.dot_dimension_numbers<[1], [0], [0], [1], [0, 0, 1, 1], [], []>} : vector<8x32xbf16>, vector<32x32xbf16>, vector<8x32xf32> -> vector<8x32xf32>
    %33 = vector.broadcast %12 : vector<1x32xf32> to vector<8x32xf32>
    %34 = arith.addf %32, %33 : vector<8x32xf32>
    %35 = vector.shape_cast %28 : vector<8x32xf32> to vector<8x4x8xf32>
    %36 = tpu.transpose %35, [1, 0, 2] : vector<8x4x8xf32> -> vector<4x8x8xf32>
    %37 = arith.truncf %36 : vector<4x8x8xf32> to vector<4x8x8xbf16>
    %38 = vector.shape_cast %31 : vector<8x32xf32> to vector<8x4x8xf32>
    %39 = tpu.transpose %38, [1, 0, 2] : vector<8x4x8xf32> -> vector<4x8x8xf32>
    %40 = arith.truncf %39 : vector<4x8x8xf32> to vector<4x8x8xbf16>
    %41 = vector.shape_cast %34 : vector<8x32xf32> to vector<8x4x8xf32>
    %42 = tpu.transpose %41, [1, 0, 2] : vector<8x4x8xf32> -> vector<4x8x8xf32>
    %43 = arith.truncf %42 : vector<4x8x8xf32> to vector<4x8x8xbf16>
    "tpu.trace_start"() <{level = 10 : i32, message = "hqd,hkd->hqk"}> : () -> ()
    %cst_42 = arith.constant dense<0.000000e+00> : vector<4x8x8xf32>
    %44 = tpu.matmul %37, %40, %cst_42 {dimension_numbers = #tpu.dot_dimension_numbers<[2], [2], [1], [1], [0, 0, 0, 1, 1, 1], [0], [0]>} : vector<4x8x8xbf16>, vector<4x8x8xbf16>, vector<4x8x8xf32> -> vector<4x8x8xf32>
    "tpu.trace_stop"() : () -> ()
    %45 = vector.broadcast %24 : f32 to vector<4x8x8xf32>
    %46 = arith.mulf %44, %45 : vector<4x8x8xf32>
    %47 = vector.shape_cast %6 : vector<1x8xf32> to vector<1x1x8xf32>
    %48 = vector.broadcast %47 : vector<1x1x8xf32> to vector<4x8x8xf32>
    %49 = arith.addf %46, %48 : vector<4x8x8xf32>
    %cst_43 = arith.constant dense<0xFF800000> : vector<4x8xf32>
    %50 = vector.multi_reduction <maximumf>, %49, %cst_43 [2] : vector<4x8x8xf32> to vector<4x8xf32>
    %51 = vector.shape_cast %50 : vector<4x8xf32> to vector<4x8x1xf32>
    %52 = vector.broadcast %51 : vector<4x8x1xf32> to vector<4x8x8xf32>
    %53 = arith.subf %49, %52 : vector<4x8x8xf32>
    %54 = math.exp %53 : vector<4x8x8xf32>
    %cst_44 = arith.constant dense<0.000000e+00> : vector<4x8xf32>
    %55 = vector.multi_reduction <add>, %54, %cst_44 [2] : vector<4x8x8xf32> to vector<4x8xf32>
    %56 = vector.shape_cast %55 : vector<4x8xf32> to vector<4x8x1xf32>
    %57 = tpu.reciprocal %56 {approx = true} : vector<4x8x1xf32> -> vector<4x8x1xf32>
    %58 = vector.broadcast %57 : vector<4x8x1xf32> to vector<4x8x8xf32>
    %59 = arith.mulf %54, %58 : vector<4x8x8xf32>
    %60 = arith.truncf %59 : vector<4x8x8xf32> to vector<4x8x8xbf16>
    "tpu.trace_start"() <{level = 10 : i32, message = "hqk,hkd->hqd"}> : () -> ()
    %cst_45 = arith.constant dense<0.000000e+00> : vector<4x8x8xf32>
    %61 = tpu.matmul %60, %43, %cst_45 {dimension_numbers = #tpu.dot_dimension_numbers<[2], [1], [1], [2], [0, 0, 0, 1, 1, 2], [0], [0]>} : vector<4x8x8xbf16>, vector<4x8x8xbf16>, vector<4x8x8xf32> -> vector<4x8x8xf32>
    "tpu.trace_stop"() : () -> ()
    %62 = tpu.transpose %61, [1, 0, 2] : vector<4x8x8xf32> -> vector<8x4x8xf32>
    %63 = vector.shape_cast %62 : vector<8x4x8xf32> to vector<8x32xf32>
    %64 = arith.truncf %63 : vector<8x32xf32> to vector<8x32xbf16>
    %cst_46 = arith.constant dense<0.000000e+00> : vector<8x32xf32>
    %65 = tpu.matmul %64, %13, %cst_46 {dimension_numbers = #tpu.dot_dimension_numbers<[1], [0], [0], [1], [0, 0, 1, 1], [], []>} : vector<8x32xbf16>, vector<32x32xbf16>, vector<8x32xf32> -> vector<8x32xf32>
    %66 = vector.broadcast %14 : vector<1x32xf32> to vector<8x32xf32>
    %67 = arith.addf %65, %66 : vector<8x32xf32>
    %68 = arith.addf %1, %67 : vector<8x32xf32>
    %cst_47 = arith.constant dense<0.000000e+00> : vector<8xf32>
    %69 = vector.multi_reduction <add>, %68, %cst_47 [1] : vector<8x32xf32> to vector<8xf32>
    %70 = vector.shape_cast %69 : vector<8xf32> to vector<8x1xf32>
    %cst_48 = arith.constant 3.200000e+01 : f32
    %71 = vector.broadcast %cst_48 : f32 to vector<8x1xf32>
    %72 = arith.divf %70, %71 : vector<8x1xf32>
    %73 = vector.broadcast %72 : vector<8x1xf32> to vector<8x32xf32>
    %74 = arith.subf %68, %73 : vector<8x32xf32>
    %75 = arith.mulf %74, %74 : vector<8x32xf32>
    %cst_49 = arith.constant dense<0.000000e+00> : vector<8xf32>
    %76 = vector.multi_reduction <add>, %75, %cst_49 [1] : vector<8x32xf32> to vector<8xf32>
    %77 = vector.shape_cast %76 : vector<8xf32> to vector<8x1xf32>
    %cst_50 = arith.constant 3.200000e+01 : f32
    %78 = vector.broadcast %cst_50 : f32 to vector<8x1xf32>
    %79 = arith.divf %77, %78 : vector<8x1xf32>
    %80 = vector.broadcast %72 : vector<8x1xf32> to vector<8x32xf32>
    %81 = arith.subf %68, %80 : vector<8x32xf32>
    %cst_51 = arith.constant 9.99999997E-7 : f32
    %82 = vector.broadcast %cst_51 : f32 to vector<8x1xf32>
    %83 = arith.addf %79, %82 : vector<8x1xf32>
    %84 = math.rsqrt %83 : vector<8x1xf32>
    %85 = vector.broadcast %84 : vector<8x1xf32> to vector<8x32xf32>
    %86 = arith.mulf %81, %85 : vector<8x32xf32>
    %87 = vector.broadcast %15 : vector<1x32xf32> to vector<8x32xf32>
    %88 = arith.mulf %86, %87 : vector<8x32xf32>
    %89 = vector.broadcast %16 : vector<1x32xf32> to vector<8x32xf32>
    %90 = arith.addf %88, %89 : vector<8x32xf32>
    %91 = arith.truncf %90 : vector<8x32xf32> to vector<8x32xbf16>
    %cst_52 = arith.constant dense<0.000000e+00> : vector<8x64xf32>
    %92 = tpu.matmul %91, %17, %cst_52 {dimension_numbers = #tpu.dot_dimension_numbers<[1], [0], [0], [1], [0, 0, 1, 1], [], []>} : vector<8x32xbf16>, vector<32x64xbf16>, vector<8x64xf32> -> vector<8x64xf32>
    %93 = vector.broadcast %18 : vector<1x64xf32> to vector<8x64xf32>
    %94 = arith.addf %92, %93 : vector<8x64xf32>
    %cst_53 = arith.constant 0.000000e+00 : f32
    %95 = vector.broadcast %cst_53 : f32 to vector<8x64xf32>
    %96 = arith.maximumf %94, %95 : vector<8x64xf32>
    %97 = arith.truncf %96 : vector<8x64xf32> to vector<8x64xbf16>
    %cst_54 = arith.constant dense<0.000000e+00> : vector<8x32xf32>
    %98 = tpu.matmul %97, %19, %cst_54 {dimension_numbers = #tpu.dot_dimension_numbers<[1], [0], [0], [1], [0, 0, 1, 1], [], []>} : vector<8x64xbf16>, vector<64x32xbf16>, vector<8x32xf32> -> vector<8x32xf32>
    %99 = vector.broadcast %20 : vector<1x32xf32> to vector<8x32xf32>
    %100 = arith.addf %98, %99 : vector<8x32xf32>
    %101 = arith.addf %90, %100 : vector<8x32xf32>
    %cst_55 = arith.constant dense<0.000000e+00> : vector<8xf32>
    %102 = vector.multi_reduction <add>, %101, %cst_55 [1] : vector<8x32xf32> to vector<8xf32>
    %103 = vector.shape_cast %102 : vector<8xf32> to vector<8x1xf32>
    %cst_56 = arith.constant 3.200000e+01 : f32
    %104 = vector.broadcast %cst_56 : f32 to vector<8x1xf32>
    %105 = arith.divf %103, %104 : vector<8x1xf32>
    %106 = vector.broadcast %105 : vector<8x1xf32> to vector<8x32xf32>
    %107 = arith.subf %101, %106 : vector<8x32xf32>
    %108 = arith.mulf %107, %107 : vector<8x32xf32>
    %cst_57 = arith.constant dense<0.000000e+00> : vector<8xf32>
    %109 = vector.multi_reduction <add>, %108, %cst_57 [1] : vector<8x32xf32> to vector<8xf32>
    %110 = vector.shape_cast %109 : vector<8xf32> to vector<8x1xf32>
    %cst_58 = arith.constant 3.200000e+01 : f32
    %111 = vector.broadcast %cst_58 : f32 to vector<8x1xf32>
    %112 = arith.divf %110, %111 : vector<8x1xf32>
    %113 = vector.broadcast %105 : vector<8x1xf32> to vector<8x32xf32>
    %114 = arith.subf %101, %113 : vector<8x32xf32>
    %cst_59 = arith.constant 9.99999997E-7 : f32
    %115 = vector.broadcast %cst_59 : f32 to vector<8x1xf32>
    %116 = arith.addf %112, %115 : vector<8x1xf32>
    %117 = math.rsqrt %116 : vector<8x1xf32>
    %118 = vector.broadcast %117 : vector<8x1xf32> to vector<8x32xf32>
    %119 = arith.mulf %114, %118 : vector<8x32xf32>
    %120 = vector.broadcast %21 : vector<1x32xf32> to vector<8x32xf32>
    %121 = arith.mulf %119, %120 : vector<8x32xf32>
    %122 = vector.broadcast %22 : vector<1x32xf32> to vector<8x32xf32>
    %123 = arith.addf %121, %122 : vector<8x32xf32>
    %c0_60 = arith.constant 0 : index
    %c0_61 = arith.constant 0 : index
    %c0_62 = arith.constant 0 : index
    %124 = vector.load %arg19[%c0_60, %c0_61, %c0_62] : memref<1x8x32xf32, #tpu.memory_space<vmem>>, vector<1x8x32xf32>
    %125 = vector.shape_cast %124 : vector<1x8x32xf32> to vector<8x32xf32>
    %126 = vector.shape_cast %123 : vector<8x32xf32> to vector<1x8x32xf32>
    tpu.vector_store %arg19[%c0_60, %c0_61, %c0_62], %126 {strides = array<i32>} : memref<1x8x32xf32, #tpu.memory_space<vmem>>, vector<1x8x32xf32>,
    return
  }
  func.func @transform_0(%arg0: i32) -> (i32, i32, i32) {
    %c0_i32 = arith.constant 0 : i32
    %c0_i32_0 = arith.constant 0 : i32
    %c0_i32_1 = arith.constant 0 : i32
    return %arg0, %c0_i32, %c0_i32_0 : i32, i32, i32
  }
  func.func @transform_1(%arg0: i32) -> (i32, i32, i32) {
    %c0_i32 = arith.constant 0 : i32
    %c0_i32_0 = arith.constant 0 : i32
    %c0_i32_1 = arith.constant 0 : i32
    return %arg0, %c0_i32, %c0_i32_0 : i32, i32, i32
  }
  func.func @transform_2(%arg0: i32) -> (i32, i32) {
    %c0_i32 = arith.constant 0 : i32
    %c0_i32_0 = arith.constant 0 : i32
    %c0_i32_1 = arith.constant 0 : i32
    return %c0_i32, %c0_i32_0 : i32, i32
  }
  func.func @transform_3(%arg0: i32) -> (i32, i32) {
    %c0_i32 = arith.constant 0 : i32
    %c0_i32_0 = arith.constant 0 : i32
    %c0_i32_1 = arith.constant 0 : i32
    return %c0_i32, %c0_i32_0 : i32, i32
  }
  func.func @transform_4(%arg0: i32) -> (i32, i32) {
    %c0_i32 = arith.constant 0 : i32
    %c0_i32_0 = arith.constant 0 : i32
    %c0_i32_1 = arith.constant 0 : i32
    return %c0_i32, %c0_i32_0 : i32, i32
  }
  func.func @transform_5(%arg0: i32) -> (i32, i32) {
    %c0_i32 = arith.constant 0 : i32
    %c0_i32_0 = arith.constant 0 : i32
    %c0_i32_1 = arith.constant 0 : i32
    return %c0_i32, %c0_i32_0 : i32, i32
  }
  func.func @transform_6(%arg0: i32) -> (i32, i32) {
    %c0_i32 = arith.constant 0 : i32
    %c0_i32_0 = arith.constant 0 : i32
    %c0_i32_1 = arith.constant 0 : i32
    return %c0_i32, %c0_i32_0 : i32, i32
  }
  func.func @transform_7(%arg0: i32) -> (i32, i32) {
    %c0_i32 = arith.constant 0 : i32
    %c0_i32_0 = arith.constant 0 : i32
    %c0_i32_1 = arith.constant 0 : i32
    return %c0_i32, %c0_i32_0 : i32, i32
  }
  func.func @transform_8(%arg0: i32) -> (i32, i32) {
    %c0_i32 = arith.constant 0 : i32
    %c0_i32_0 = arith.constant 0 : i32
    %c0_i32_1 = arith.constant 0 : i32
    return %c0_i32, %c0_i32_0 : i32, i32
  }
  func.func @transform_9(%arg0: i32) -> (i32, i32) {
    %c0_i32 = arith.constant 0 : i32
    %c0_i32_0 = arith.constant 0 : i32
    %c0_i32_1 = arith.constant 0 : i32
    return %c0_i32, %c0_i32_0 : i32, i32
  }
  func.func @transform_10(%arg0: i32) -> (i32, i32) {
    %c0_i32 = arith.constant 0 : i32
    %c0_i32_0 = arith.constant 0 : i32
    %c0_i32_1 = arith.constant 0 : i32
    return %c0_i32, %c0_i32_0 : i32, i32
  }
  func.func @transform_11(%arg0: i32) -> (i32, i32) {
    %c0_i32 = arith.constant 0 : i32
    %c0_i32_0 = arith.constant 0 : i32
    %c0_i32_1 = arith.constant 0 : i32
    return %c0_i32, %c0_i32_0 : i32, i32
  }
  func.func @transform_12(%arg0: i32) -> (i32, i32) {
    %c0_i32 = arith.constant 0 : i32
    %c0_i32_0 = arith.constant 0 : i32
    %c0_i32_1 = arith.constant 0 : i32
    return %c0_i32, %c0_i32_0 : i32, i32
  }
  func.func @transform_13(%arg0: i32) -> (i32, i32) {
    %c0_i32 = arith.constant 0 : i32
    %c0_i32_0 = arith.constant 0 : i32
    %c0_i32_1 = arith.constant 0 : i32
    return %c0_i32, %c0_i32_0 : i32, i32
  }
  func.func @transform_14(%arg0: i32) -> (i32, i32) {
    %c0_i32 = arith.constant 0 : i32
    %c0_i32_0 = arith.constant 0 : i32
    %c0_i32_1 = arith.constant 0 : i32
    return %c0_i32, %c0_i32_0 : i32, i32
  }
  func.func @transform_15(%arg0: i32) -> (i32, i32) {
    %c0_i32 = arith.constant 0 : i32
    %c0_i32_0 = arith.constant 0 : i32
    %c0_i32_1 = arith.constant 0 : i32
    return %c0_i32, %c0_i32_0 : i32, i32
  }
  func.func @transform_16(%arg0: i32) -> (i32, i32) {
    %c0_i32 = arith.constant 0 : i32
    %c0_i32_0 = arith.constant 0 : i32
    %c0_i32_1 = arith.constant 0 : i32
    return %c0_i32, %c0_i32_0 : i32, i32
  }
  func.func @transform_17(%arg0: i32) -> (i32, i32) {
    %c0_i32 = arith.constant 0 : i32
    %c0_i32_0 = arith.constant 0 : i32
    %c0_i32_1 = arith.constant 0 : i32
    return %c0_i32, %c0_i32_0 : i32, i32
  }
  func.func @transform_18(%arg0: i32) -> (i32, i32, i32) {
    %c0_i32 = arith.constant 0 : i32
    %c0_i32_0 = arith.constant 0 : i32
    %c0_i32_1 = arith.constant 0 : i32
    return %arg0, %c0_i32, %c0_i32_0 : i32, i32, i32
  }
}

</mosaic_0001>

<llo_original>
// kernel: tpu_custom_call.1
$region0: #{tpu_custom_call.1}
  #allocation0 [shape = 'u32[]', space=smem, size = 0x4, offset = 0x4, fixed_abs, tag = 'smem constant byte address 0x4 - core index']
  #allocation1 [shape = 'u32[144,128]{1,0:T(1,128)}', space=vmem, size = 0x12000, scoped, tag = 'internal scratch']
  %s0 = inlined_call_operand.vmem [shape: f32[2,8,32], index: 0, kind: input, shape index: {}]
  %s1 = inlined_call_operand.hbm [shape: f32[2,1,8], index: 1, kind: input, shape index: {}]
  %s2 = inlined_call_operand.vmem [shape: bf16[32,32], index: 2, kind: input, shape index: {}]
  %s3 = inlined_call_operand.hbm [shape: f32[1,32], index: 3, kind: input, shape index: {}]
  %s4 = inlined_call_operand.vmem [shape: bf16[32,32], index: 4, kind: input, shape index: {}]
  %s5 = inlined_call_operand.hbm [shape: f32[1,32], index: 5, kind: input, shape index: {}]
  %s6 = inlined_call_operand.hbm [shape: bf16[32,32], index: 6, kind: input, shape index: {}]
  %s7 = inlined_call_operand.hbm [shape: f32[1,32], index: 7, kind: input, shape index: {}]
  %s8 = inlined_call_operand.hbm [shape: bf16[32,32], index: 8, kind: input, shape index: {}]
  %s9 = inlined_call_operand.hbm [shape: f32[1,32], index: 9, kind: input, shape index: {}]
  %s10 = inlined_call_operand.vmem [shape: f32[1,32], index: 10, kind: input, shape index: {}]
  %s11 = inlined_call_operand.vmem [shape: f32[1,32], index: 11, kind: input, shape index: {}]
  %s12 = inlined_call_operand.vmem [shape: bf16[32,64], index: 12, kind: input, shape index: {}]
  %s13 = inlined_call_operand.vmem [shape: f32[1,64], index: 13, kind: input, shape index: {}]
  %s14 = inlined_call_operand.vmem [shape: bf16[64,32], index: 14, kind: input, shape index: {}]
  %s15 = inlined_call_operand.vmem [shape: f32[1,32], index: 15, kind: input, shape index: {}]
  %s16 = inlined_call_operand.vmem [shape: f32[1,32], index: 16, kind: input, shape index: {}]
  %s17 = inlined_call_operand.vmem [shape: f32[1,32], index: 17, kind: input, shape index: {}]
  %s18 = inlined_call_operand.hbm [shape: f32[2,8,32], index: 18, kind: output, shape index: {}]
  %s19 = sld [smem:[#allocation0]]
  $region133: #{tpu_custom_call.1} parent=0
    _
  %s21 = ssub.s32 1, %s19
  %s22 = scalar_select 0, %s21, %s19
  $region1: #{tpu_custom_call.1} parent=0
    #allocation2 [shape = 'u8[1024]{0}', space=vmem, size = 0x400, scoped, tag = 'input window, operand 1']
    #allocation3 [shape = 's32[2]{0}', space=sflag, size = 0x8, scoped, tag = 'scoped memory for tpu_custom_call.1']
    #allocation4 [shape = 's32[2]{0}', space=sflag, size = 0x8, scoped, tag = 'scoped memory for tpu_custom_call.1']
    #allocation5 [shape = 'u8[512]{0}', space=vmem, size = 0x400, scoped, tag = 'input window, operand 3, single buffered']
    #allocation6 [shape = 's32[1]{0}', space=sflag, size = 0x4, scoped, tag = 'scoped memory for tpu_custom_call.1']
    #allocation7 [shape = 'u8[512]{0}', space=vmem, size = 0x400, scoped, tag = 'input window, operand 5, single buffered']
    #allocation8 [shape = 'u8[8192]{0}', space=vmem, size = 0x2000, scoped, tag = 'input window, operand 6, single buffered']
    #allocation9 [shape = 's32[1]{0}', space=sflag, size = 0x4, scoped, tag = 'scoped memory for tpu_custom_call.1']
    #allocation10 [shape = 'u8[512]{0}', space=vmem, size = 0x400, scoped, tag = 'input window, operand 7, single buffered']
    #allocation11 [shape = 'u8[8192]{0}', space=vmem, size = 0x2000, scoped, tag = 'input window, operand 8, single buffered']
    #allocation12 [shape = 's32[1]{0}', space=sflag, size = 0x4, scoped, tag = 'scoped memory for tpu_custom_call.1']
    #allocation13 [shape = 'u8[512]{0}', space=vmem, size = 0x400, scoped, tag = 'input window, operand 9, single buffered']
    #allocation14 [shape = 'u8[8192]{0}', space=vmem, size = 0x2000, scoped, tag = 'output window, operand 0']
    %23 = vsyncpa [#allocation3], 0
    %s24 = scalar_lea.sflag [#allocation3], 1
    %25 = vsyncpa %s24, 0
    %26 = vsyncpa [#allocation6], 0
    %27 = vsyncpa [#allocation9], 0
    %28 = vsyncpa [#allocation12], 0
    %29 = vsyncpa [#allocation4], 0
    %s30 = scalar_lea.sflag [#allocation4], 1
    %31 = vsyncpa %s30, 0
    loop: start=0, step=1, limit=4
    $region2: #{tpu_custom_call.1} parent=1 // loop_pre_header
      _
    $region3: #{tpu_custom_call.1} parent=1 // loop_header
      %s33 = sphi 0, %s37
      %p34 = scmp.ge.s32.totalorder %s33, 4
      %s43 = sphi 0, %s45
      %s46 = sphi 0, %s43
      %s47 = sphi 0, %s46
      %s63 = sphi 0, %s47
      %s69 = sphi 0, %s71
      %s72 = sphi 0, %s69
      %s73 = sphi 0, %s72
      %s89 = sphi 0, %s73
      %s93 = sphi 0, %s93
      %s95 = sphi 0, %s93
      %s96 = sphi 0, %s95
      %s110 = sphi 0, %s96
      %s114 = sphi 0, %s114
      %s116 = sphi 0, %s114
      %s117 = sphi 0, %s116
      %s131 = sphi 0, %s117
      %s135 = sphi 0, %s135
      %s137 = sphi 0, %s135
      %s138 = sphi 0, %s137
      %s152 = sphi 0, %s138
      %s156 = sphi 0, %s156
      %s158 = sphi 0, %s156
      %s159 = sphi 0, %s158
      %s173 = sphi 0, %s159
      %s177 = sphi 0, %s177
      %s179 = sphi 0, %s177
      %s180 = sphi 0, %s179
      %s194 = sphi 0, %s180
      %s198 = sphi 0, %s198
      %s200 = sphi 0, %s198
      %s201 = sphi 0, %s200
      %s215 = sphi 0, %s201
      %s219 = sphi 0, %s219
      %s221 = sphi 0, %s219
      %s222 = sphi 0, %s221
      %s236 = sphi 0, %s222
      %s240 = sphi 0, %s240
      %s242 = sphi 0, %s240
      %s243 = sphi 0, %s242
      %s257 = sphi 0, %s243
      %s261 = sphi 0, %s261
      %s263 = sphi 0, %s261
      %s264 = sphi 0, %s263
      %s278 = sphi 0, %s264
      %s282 = sphi 0, %s282
      %s284 = sphi 0, %s282
      %s285 = sphi 0, %s284
      %s299 = sphi 0, %s285
      %s303 = sphi 0, %s303
      %s305 = sphi 0, %s303
      %s306 = sphi 0, %s305
      %s320 = sphi 0, %s306
      %s324 = sphi 0, %s324
      %s326 = sphi 0, %s324
      %s327 = sphi 0, %s326
      %s341 = sphi 0, %s327
      %s345 = sphi 0, %s345
      %s347 = sphi 0, %s345
      %s348 = sphi 0, %s347
      %s362 = sphi 0, %s348
      %s366 = sphi 0, %s366
      %s368 = sphi 0, %s366
      %s369 = sphi 0, %s368
      %s383 = sphi 0, %s369
      %s387 = sphi 0, %s387
      %s389 = sphi 0, %s387
      %s390 = sphi 0, %s389
      %s404 = sphi 0, %s390
      %s408 = sphi 0, %s408
      %s410 = sphi 0, %s408
      %s411 = sphi 0, %s410
      %s425 = sphi 0, %s411
      %s431 = sphi 0, %s433
      %s434 = sphi 0, %s431
      %s435 = sphi 0, %s434
      %s451 = sphi 0, %s435
    $region4: #{tpu_custom_call.1} parent=1 // loop_header_branch
      %36 = sbr.rel (%p34) target = $region8
    $region5: #{tpu_custom_call.1} parent=1 // loop_body
      %s38 = ssub.s32 %s33, 1
      %s39 = ssub.s32 %s33, 2
      %s40 = sadd.s32 %s33, 1
      %s41 = ssub.s32 %s33, %s40
      %p42 = scmp.eq.s32.totalorder %s41, 0
      %s44 = sadd.s32 %s43, 1
      %s45 = scalar_select %p42, %s43, %s44
      %p48 = pneg %p42
      %p49 = scmp.eq.s32.totalorder %s33, 1
      %p50 = por %p48, %p49
      %p51 = scmp.ne.s32.totalorder %s43, %s46
      %p52 = scmp.eq.s32.totalorder %s33, 0
      %p53 = por %p51, %p52
      %p54 = scmp.ne.s32.totalorder %s43, %s46
      %p55 = scmp.eq.s32.totalorder %s38, 1
      %p56 = por %p54, %p55
      %p57 = scmp.ne.s32.totalorder %s46, %s47
      %p58 = scmp.eq.s32.totalorder %s38, 0
      %p59 = por %p57, %p58
      %p60 = scmp.ne.s32.totalorder %s46, %s47
      %p61 = scmp.eq.s32.totalorder %s39, 1
      %p62 = por %p60, %p61
      %p64 = scmp.ne.s32.totalorder %s47, %s63
      %p65 = scmp.eq.s32.totalorder %s39, 0
      %p66 = por %p64, %p65
      %s67 = ssub.s32 %s33, %s40
      %p68 = scmp.eq.s32.totalorder %s67, 0
      %s70 = sadd.s32 %s69, 1
      %s71 = scalar_select %p68, %s69, %s70
      %p74 = pneg %p68
      %p75 = scmp.eq.s32.totalorder %s33, 1
      %p76 = por %p74, %p75
      %p77 = scmp.ne.s32.totalorder %s69, %s72
      %p78 = scmp.eq.s32.totalorder %s33, 0
      %p79 = por %p77, %p78
      %p80 = scmp.ne.s32.totalorder %s69, %s72
      %p81 = scmp.eq.s32.totalorder %s38, 1
      %p82 = por %p80, %p81
      %p83 = scmp.ne.s32.totalorder %s72, %s73
      %p84 = scmp.eq.s32.totalorder %s38, 0
      %p85 = por %p83, %p84
      %p86 = scmp.ne.s32.totalorder %s72, %s73
      %p87 = scmp.eq.s32.totalorder %s39, 1
      %p88 = por %p86, %p87
      %p90 = scmp.ne.s32.totalorder %s73, %s89
      %p91 = scmp.eq.s32.totalorder %s39, 0
      %p92 = por %p90, %p91
      %s94 = sadd.s32 %s93, 1
      %p97 = scmp.eq.s32.totalorder %s33, 1
      %p98 = scmp.ne.s32.totalorder %s93, %s95
      %p99 = scmp.eq.s32.totalorder %s33, 0
      %p100 = por %p98, %p99
      %p101 = scmp.ne.s32.totalorder %s93, %s95
      %p102 = scmp.eq.s32.totalorder %s38, 1
      %p103 = por %p101, %p102
      %p104 = scmp.ne.s32.totalorder %s95, %s96
      %p105 = scmp.eq.s32.totalorder %s38, 0
      %p106 = por %p104, %p105
      %p107 = scmp.ne.s32.totalorder %s95, %s96
      %p108 = scmp.eq.s32.totalorder %s39, 1
      %p109 = por %p107, %p108
      %p111 = scmp.ne.s32.totalorder %s96, %s110
      %p112 = scmp.eq.s32.totalorder %s39, 0
      %p113 = por %p111, %p112
      %s115 = sadd.s32 %s114, 1
      %p118 = scmp.eq.s32.totalorder %s33, 1
      %p119 = scmp.ne.s32.totalorder %s114, %s116
      %p120 = scmp.eq.s32.totalorder %s33, 0
      %p121 = por %p119, %p120
      %p122 = scmp.ne.s32.totalorder %s114, %s116
      %p123 = scmp.eq.s32.totalorder %s38, 1
      %p124 = por %p122, %p123
      %p125 = scmp.ne.s32.totalorder %s116, %s117
      %p126 = scmp.eq.s32.totalorder %s38, 0
      %p127 = por %p125, %p126
      %p128 = scmp.ne.s32.totalorder %s116, %s117
      %p129 = scmp.eq.s32.totalorder %s39, 1
      %p130 = por %p128, %p129
      %p132 = scmp.ne.s32.totalorder %s117, %s131
      %p133 = scmp.eq.s32.totalorder %s39, 0
      %p134 = por %p132, %p133
      %s136 = sadd.s32 %s135, 1
      %p139 = scmp.eq.s32.totalorder %s33, 1
      %p140 = scmp.ne.s32.totalorder %s135, %s137
      %p141 = scmp.eq.s32.totalorder %s33, 0
      %p142 = por %p140, %p141
      %p143 = scmp.ne.s32.totalorder %s135, %s137
      %p144 = scmp.eq.s32.totalorder %s38, 1
      %p145 = por %p143, %p144
      %p146 = scmp.ne.s32.totalorder %s137, %s138
      %p147 = scmp.eq.s32.totalorder %s38, 0
      %p148 = por %p146, %p147
      %p149 = scmp.ne.s32.totalorder %s137, %s138
      %p150 = scmp.eq.s32.totalorder %s39, 1
      %p151 = por %p149, %p150
      %p153 = scmp.ne.s32.totalorder %s138, %s152
      %p154 = scmp.eq.s32.totalorder %s39, 0
      %p155 = por %p153, %p154
      %s157 = sadd.s32 %s156, 1
      %p160 = scmp.eq.s32.totalorder %s33, 1
      %p161 = scmp.ne.s32.totalorder %s156, %s158
      %p162 = scmp.eq.s32.totalorder %s33, 0
      %p163 = por %p161, %p162
      %p164 = scmp.ne.s32.totalorder %s156, %s158
      %p165 = scmp.eq.s32.totalorder %s38, 1
      %p166 = por %p164, %p165
      %p167 = scmp.ne.s32.totalorder %s158, %s159
      %p168 = scmp.eq.s32.totalorder %s38, 0
      %p169 = por %p167, %p168
      %p170 = scmp.ne.s32.totalorder %s158, %s159
      %p171 = scmp.eq.s32.totalorder %s39, 1
      %p172 = por %p170, %p171
      %p174 = scmp.ne.s32.totalorder %s159, %s173
      %p175 = scmp.eq.s32.totalorder %s39, 0
      %p176 = por %p174, %p175
      %s178 = sadd.s32 %s177, 1
      %p181 = scmp.eq.s32.totalorder %s33, 1
      %p182 = scmp.ne.s32.totalorder %s177, %s179
      %p183 = scmp.eq.s32.totalorder %s33, 0
      %p184 = por %p182, %p183
      %p185 = scmp.ne.s32.totalorder %s177, %s179
      %p186 = scmp.eq.s32.totalorder %s38, 1
      %p187 = por %p185, %p186
      %p188 = scmp.ne.s32.totalorder %s179, %s180
      %p189 = scmp.eq.s32.totalorder %s38, 0
      %p190 = por %p188, %p189
      %p191 = scmp.ne.s32.totalorder %s179, %s180
      %p192 = scmp.eq.s32.totalorder %s39, 1
      %p193 = por %p191, %p192
      %p195 = scmp.ne.s32.totalorder %s180, %s194
      %p196 = scmp.eq.s32.totalorder %s39, 0
      %p197 = por %p195, %p196
      %s199 = sadd.s32 %s198, 1
      %p202 = scmp.eq.s32.totalorder %s33, 1
      %p203 = scmp.ne.s32.totalorder %s198, %s200
      %p204 = scmp.eq.s32.totalorder %s33, 0
      %p205 = por %p203, %p204
      %p206 = scmp.ne.s32.totalorder %s198, %s200
      %p207 = scmp.eq.s32.totalorder %s38, 1
      %p208 = por %p206, %p207
      %p209 = scmp.ne.s32.totalorder %s200, %s201
      %p210 = scmp.eq.s32.totalorder %s38, 0
      %p211 = por %p209, %p210
      %p212 = scmp.ne.s32.totalorder %s200, %s201
      %p213 = scmp.eq.s32.totalorder %s39, 1
      %p214 = por %p212, %p213
      %p216 = scmp.ne.s32.totalorder %s201, %s215
      %p217 = scmp.eq.s32.totalorder %s39, 0
      %p218 = por %p216, %p217
      %s220 = sadd.s32 %s219, 1
      %p223 = scmp.eq.s32.totalorder %s33, 1
      %p224 = scmp.ne.s32.totalorder %s219, %s221
      %p225 = scmp.eq.s32.totalorder %s33, 0
      %p226 = por %p224, %p225
      %p227 = scmp.ne.s32.totalorder %s219, %s221
      %p228 = scmp.eq.s32.totalorder %s38, 1
      %p229 = por %p227, %p228
      %p230 = scmp.ne.s32.totalorder %s221, %s222
      %p231 = scmp.eq.s32.totalorder %s38, 0
      %p232 = por %p230, %p231
      %p233 = scmp.ne.s32.totalorder %s221, %s222
      %p234 = scmp.eq.s32.totalorder %s39, 1
      %p235 = por %p233, %p234
      %p237 = scmp.ne.s32.totalorder %s222, %s236
      %p238 = scmp.eq.s32.totalorder %s39, 0
      %p239 = por %p237, %p238
      %s241 = sadd.s32 %s240, 1
      %p244 = scmp.eq.s32.totalorder %s33, 1
      %p245 = scmp.ne.s32.totalorder %s240, %s242
      %p246 = scmp.eq.s32.totalorder %s33, 0
      %p247 = por %p245, %p246
      %p248 = scmp.ne.s32.totalorder %s240, %s242
      %p249 = scmp.eq.s32.totalorder %s38, 1
      %p250 = por %p248, %p249
      %p251 = scmp.ne.s32.totalorder %s242, %s243
      %p252 = scmp.eq.s32.totalorder %s38, 0
      %p253 = por %p251, %p252
      %p254 = scmp.ne.s32.totalorder %s242, %s243
      %p255 = scmp.eq.s32.totalorder %s39, 1
      %p256 = por %p254, %p255
      %p258 = scmp.ne.s32.totalorder %s243, %s257
      %p259 = scmp.eq.s32.totalorder %s39, 0
      %p260 = por %p258, %p259
      %s262 = sadd.s32 %s261, 1
      %p265 = scmp.eq.s32.totalorder %s33, 1
      %p266 = scmp.ne.s32.totalorder %s261, %s263
      %p267 = scmp.eq.s32.totalorder %s33, 0
      %p268 = por %p266, %p267
      %p269 = scmp.ne.s32.totalorder %s261, %s263
      %p270 = scmp.eq.s32.totalorder %s38, 1
      %p271 = por %p269, %p270
      %p272 = scmp.ne.s32.totalorder %s263, %s264
      %p273 = scmp.eq.s32.totalorder %s38, 0
      %p274 = por %p272, %p273
      %p275 = scmp.ne.s32.totalorder %s263, %s264
      %p276 = scmp.eq.s32.totalorder %s39, 1
      %p277 = por %p275, %p276
      %p279 = scmp.ne.s32.totalorder %s264, %s278
      %p280 = scmp.eq.s32.totalorder %s39, 0
      %p281 = por %p279, %p280
      %s283 = sadd.s32 %s282, 1
      %p286 = scmp.eq.s32.totalorder %s33, 1
      %p287 = scmp.ne.s32.totalorder %s282, %s284
      %p288 = scmp.eq.s32.totalorder %s33, 0
      %p289 = por %p287, %p288
      %p290 = scmp.ne.s32.totalorder %s282, %s284
      %p291 = scmp.eq.s32.totalorder %s38, 1
      %p292 = por %p290, %p291
      %p293 = scmp.ne.s32.totalorder %s284, %s285
      %p294 = scmp.eq.s32.totalorder %s38, 0
      %p295 = por %p293, %p294
      %p296 = scmp.ne.s32.totalorder %s284, %s285
      %p297 = scmp.eq.s32.totalorder %s39, 1
      %p298 = por %p296, %p297
      %p300 = scmp.ne.s32.totalorder %s285, %s299
      %p301 = scmp.eq.s32.totalorder %s39, 0
      %p302 = por %p300, %p301
      %s304 = sadd.s32 %s303, 1
      %p307 = scmp.eq.s32.totalorder %s33, 1
      %p308 = scmp.ne.s32.totalorder %s303, %s305
      %p309 = scmp.eq.s32.totalorder %s33, 0
      %p310 = por %p308, %p309
      %p311 = scmp.ne.s32.totalorder %s303, %s305
      %p312 = scmp.eq.s32.totalorder %s38, 1
      %p313 = por %p311, %p312
      %p314 = scmp.ne.s32.totalorder %s305, %s306
      %p315 = scmp.eq.s32.totalorder %s38, 0
      %p316 = por %p314, %p315
      %p317 = scmp.ne.s32.totalorder %s305, %s306
      %p318 = scmp.eq.s32.totalorder %s39, 1
      %p319 = por %p317, %p318
      %p321 = scmp.ne.s32.totalorder %s306, %s320
      %p322 = scmp.eq.s32.totalorder %s39, 0
      %p323 = por %p321, %p322
      %s325 = sadd.s32 %s324, 1
      %p328 = scmp.eq.s32.totalorder %s33, 1
      %p329 = scmp.ne.s32.totalorder %s324, %s326
      %p330 = scmp.eq.s32.totalorder %s33, 0
      %p331 = por %p329, %p330
      %p332 = scmp.ne.s32.totalorder %s324, %s326
      %p333 = scmp.eq.s32.totalorder %s38, 1
      %p334 = por %p332, %p333
      %p335 = scmp.ne.s32.totalorder %s326, %s327
      %p336 = scmp.eq.s32.totalorder %s38, 0
      %p337 = por %p335, %p336
      %p338 = scmp.ne.s32.totalorder %s326, %s327
      %p339 = scmp.eq.s32.totalorder %s39, 1
      %p340 = por %p338, %p339
      %p342 = scmp.ne.s32.totalorder %s327, %s341
      %p343 = scmp.eq.s32.totalorder %s39, 0
      %p344 = por %p342, %p343
      %s346 = sadd.s32 %s345, 1
      %p349 = scmp.eq.s32.totalorder %s33, 1
      %p350 = scmp.ne.s32.totalorder %s345, %s347
      %p351 = scmp.eq.s32.totalorder %s33, 0
      %p352 = por %p350, %p351
      %p353 = scmp.ne.s32.totalorder %s345, %s347
      %p354 = scmp.eq.s32.totalorder %s38, 1
      %p355 = por %p353, %p354
      %p356 = scmp.ne.s32.totalorder %s347, %s348
      %p357 = scmp.eq.s32.totalorder %s38, 0
      %p358 = por %p356, %p357
      %p359 = scmp.ne.s32.totalorder %s347, %s348
      %p360 = scmp.eq.s32.totalorder %s39, 1
      %p361 = por %p359, %p360
      %p363 = scmp.ne.s32.totalorder %s348, %s362
      %p364 = scmp.eq.s32.totalorder %s39, 0
      %p365 = por %p363, %p364
      %s367 = sadd.s32 %s366, 1
      %p370 = scmp.eq.s32.totalorder %s33, 1
      %p371 = scmp.ne.s32.totalorder %s366, %s368
      %p372 = scmp.eq.s32.totalorder %s33, 0
      %p373 = por %p371, %p372
      %p374 = scmp.ne.s32.totalorder %s366, %s368
      %p375 = scmp.eq.s32.totalorder %s38, 1
      %p376 = por %p374, %p375
      %p377 = scmp.ne.s32.totalorder %s368, %s369
      %p378 = scmp.eq.s32.totalorder %s38, 0
      %p379 = por %p377, %p378
      %p380 = scmp.ne.s32.totalorder %s368, %s369
      %p381 = scmp.eq.s32.totalorder %s39, 1
      %p382 = por %p380, %p381
      %p384 = scmp.ne.s32.totalorder %s369, %s383
      %p385 = scmp.eq.s32.totalorder %s39, 0
      %p386 = por %p384, %p385
      %s388 = sadd.s32 %s387, 1
      %p391 = scmp.eq.s32.totalorder %s33, 1
      %p392 = scmp.ne.s32.totalorder %s387, %s389
      %p393 = scmp.eq.s32.totalorder %s33, 0
      %p394 = por %p392, %p393
      %p395 = scmp.ne.s32.totalorder %s387, %s389
      %p396 = scmp.eq.s32.totalorder %s38, 1
      %p397 = por %p395, %p396
      %p398 = scmp.ne.s32.totalorder %s389, %s390
      %p399 = scmp.eq.s32.totalorder %s38, 0
      %p400 = por %p398, %p399
      %p401 = scmp.ne.s32.totalorder %s389, %s390
      %p402 = scmp.eq.s32.totalorder %s39, 1
      %p403 = por %p401, %p402
      %p405 = scmp.ne.s32.totalorder %s390, %s404
      %p406 = scmp.eq.s32.totalorder %s39, 0
      %p407 = por %p405, %p406
      %s409 = sadd.s32 %s408, 1
      %p412 = scmp.eq.s32.totalorder %s33, 1
      %p413 = scmp.ne.s32.totalorder %s408, %s410
      %p414 = scmp.eq.s32.totalorder %s33, 0
      %p415 = por %p413, %p414
      %p416 = scmp.ne.s32.totalorder %s408, %s410
      %p417 = scmp.eq.s32.totalorder %s38, 1
      %p418 = por %p416, %p417
      %p419 = scmp.ne.s32.totalorder %s410, %s411
      %p420 = scmp.eq.s32.totalorder %s38, 0
      %p421 = por %p419, %p420
      %p422 = scmp.ne.s32.totalorder %s410, %s411
      %p423 = scmp.eq.s32.totalorder %s39, 1
      %p424 = por %p422, %p423
      %p426 = scmp.ne.s32.totalorder %s411, %s425
      %p427 = scmp.eq.s32.totalorder %s39, 0
      %p428 = por %p426, %p427
      %s429 = ssub.s32 %s33, %s40
      %p430 = scmp.eq.s32.totalorder %s429, 0
      %s432 = sadd.s32 %s431, 1
      %s433 = scalar_select %p430, %s431, %s432
      %p436 = pneg %p430
      %p437 = scmp.eq.s32.totalorder %s33, 1
      %p438 = por %p436, %p437
      %p439 = scmp.ne.s32.totalorder %s431, %s434
      %p440 = scmp.eq.s32.totalorder %s33, 0
      %p441 = por %p439, %p440
      %p442 = scmp.ne.s32.totalorder %s431, %s434
      %p443 = scmp.eq.s32.totalorder %s38, 1
      %p444 = por %p442, %p443
      %p445 = scmp.ne.s32.totalorder %s434, %s435
      %p446 = scmp.eq.s32.totalorder %s38, 0
      %p447 = por %p445, %p446
      %p448 = scmp.ne.s32.totalorder %s434, %s435
      %p449 = scmp.eq.s32.totalorder %s39, 1
      %p450 = por %p448, %p449
      %p452 = scmp.ne.s32.totalorder %s435, %s451
      %p453 = scmp.eq.s32.totalorder %s39, 0
      %p454 = por %p452, %p453
      %p455 = scmp.le.s32.totalorder 1, %s33
      %p456 = scmp.lt.s32.totalorder %s33, 3
      %p457 = pnand %p455, %p456
      %p458 = pneg %p457
      // Predicated region
      $region9: #{tpu_custom_call.1} parent=5 // pred_check
        _
      $region10: #{tpu_custom_call.1} parent=5 // pred_check_branch
        %460 = sbr.rel (%p457) target = $region12
      $region11: #{tpu_custom_call.1} parent=5 // pred_region
        %s461 = ssub.s32 %s33, 1
        // Predicated region
        $region13: #{tpu_custom_call.1} parent=11 // pred_check
          %p462 = pneg %p106
        $region14: #{tpu_custom_call.1} parent=11 // pred_check_branch
          %464 = sbr.rel (%p462) target = $region16
        $region15: #{tpu_custom_call.1} parent=11 // pred_region
          _
        $region16: #{tpu_custom_call.1} parent=11 // pred_fallthru
          _
        // Predicated region
        $region17: #{tpu_custom_call.1} parent=11 // pred_check
          %p465 = pneg %p127
        $region18: #{tpu_custom_call.1} parent=11 // pred_check_branch
          %467 = sbr.rel (%p465) target = $region20
        $region19: #{tpu_custom_call.1} parent=11 // pred_region
          %s469 = ssub.s32 16, 16
          %470 = vsyncadd [#allocation6], %s469
          %s472 = sshll.u32 [#allocation5], 4
          %s473 = int_to_ptr.vmem [resolvable:$true] %s472
          %475 = dma.hbm_to_vmem [thread:$0]  %s3, 16, %s473, [#allocation6]
        $region20: #{tpu_custom_call.1} parent=11 // pred_fallthru
          _
        // Predicated region
        $region21: #{tpu_custom_call.1} parent=11 // pred_check
          %p476 = pneg %p148
        $region22: #{tpu_custom_call.1} parent=11 // pred_check_branch
          %478 = sbr.rel (%p476) target = $region24
        $region23: #{tpu_custom_call.1} parent=11 // pred_region
          _
        $region24: #{tpu_custom_call.1} parent=11 // pred_fallthru
          _
        // Predicated region
        $region25: #{tpu_custom_call.1} parent=11 // pred_check
          %p479 = pneg %p169
        $region26: #{tpu_custom_call.1} parent=11 // pred_check_branch
          %481 = sbr.rel (%p479) target = $region28
        $region27: #{tpu_custom_call.1} parent=11 // pred_region
          %s483 = ssub.s32 16, 16
          %484 = vsyncadd [#allocation6], %s483
          %s486 = sshll.u32 [#allocation7], 4
          %s487 = int_to_ptr.vmem [resolvable:$true] %s486
          %489 = dma.hbm_to_vmem [thread:$0]  %s5, 16, %s487, [#allocation6]
        $region28: #{tpu_custom_call.1} parent=11 // pred_fallthru
          _
        // Predicated region
        $region29: #{tpu_custom_call.1} parent=11 // pred_check
          %p490 = pneg %p190
        $region30: #{tpu_custom_call.1} parent=11 // pred_check_branch
          %492 = sbr.rel (%p490) target = $region32
        $region31: #{tpu_custom_call.1} parent=11 // pred_region
          %s494 = ssub.s32 256, 256
          %495 = vsyncadd [#allocation9], %s494
          %s496 = sshll.u32 [#allocation8], 4
          %s497 = int_to_ptr.vmem [resolvable:$true] %s496
          %502 = dma.hbm_to_vmem [thread:$0]  %s6, 256, %s497, [#allocation9], 64, 64, 4
        $region32: #{tpu_custom_call.1} parent=11 // pred_fallthru
          _
        // Predicated region
        $region33: #{tpu_custom_call.1} parent=11 // pred_check
          %p503 = pneg %p211
        $region34: #{tpu_custom_call.1} parent=11 // pred_check_branch
          %505 = sbr.rel (%p503) target = $region36
        $region35: #{tpu_custom_call.1} parent=11 // pred_region
          %s507 = ssub.s32 16, 16
          %508 = vsyncadd [#allocation9], %s507
          %s510 = sshll.u32 [#allocation10], 4
          %s511 = int_to_ptr.vmem [resolvable:$true] %s510
          %513 = dma.hbm_to_vmem [thread:$0]  %s7, 16, %s511, [#allocation9]
        $region36: #{tpu_custom_call.1} parent=11 // pred_fallthru
          _
        // Predicated region
        $region37: #{tpu_custom_call.1} parent=11 // pred_check
          %p514 = pneg %p232
        $region38: #{tpu_custom_call.1} parent=11 // pred_check_branch
          %516 = sbr.rel (%p514) target = $region40
        $region39: #{tpu_custom_call.1} parent=11 // pred_region
          %s518 = ssub.s32 256, 256
          %519 = vsyncadd [#allocation12], %s518
          %s520 = sshll.u32 [#allocation11], 4
          %s521 = int_to_ptr.vmem [resolvable:$true] %s520
          %526 = dma.hbm_to_vmem [thread:$0]  %s8, 256, %s521, [#allocation12], 64, 64, 4
        $region40: #{tpu_custom_call.1} parent=11 // pred_fallthru
          _
        // Predicated region
        $region41: #{tpu_custom_call.1} parent=11 // pred_check
          %p527 = pneg %p253
        $region42: #{tpu_custom_call.1} parent=11 // pred_check_branch
          %529 = sbr.rel (%p527) target = $region44
        $region43: #{tpu_custom_call.1} parent=11 // pred_region
          %s531 = ssub.s32 16, 16
          %532 = vsyncadd [#allocation12], %s531
          %s534 = sshll.u32 [#allocation13], 4
          %s535 = int_to_ptr.vmem [resolvable:$true] %s534
          %537 = dma.hbm_to_vmem [thread:$0]  %s9, 16, %s535, [#allocation12]
        $region44: #{tpu_custom_call.1} parent=11 // pred_fallthru
          _
        // Predicated region
        $region45: #{tpu_custom_call.1} parent=11 // pred_check
          %p538 = pneg %p274
        $region46: #{tpu_custom_call.1} parent=11 // pred_check_branch
          %540 = sbr.rel (%p538) target = $region48
        $region47: #{tpu_custom_call.1} parent=11 // pred_region
          _
        $region48: #{tpu_custom_call.1} parent=11 // pred_fallthru
          _
        // Predicated region
        $region49: #{tpu_custom_call.1} parent=11 // pred_check
          %p541 = pneg %p295
        $region50: #{tpu_custom_call.1} parent=11 // pred_check_branch
          %543 = sbr.rel (%p541) target = $region52
        $region51: #{tpu_custom_call.1} parent=11 // pred_region
          _
        $region52: #{tpu_custom_call.1} parent=11 // pred_fallthru
          _
        // Predicated region
        $region53: #{tpu_custom_call.1} parent=11 // pred_check
          %p544 = pneg %p316
        $region54: #{tpu_custom_call.1} parent=11 // pred_check_branch
          %546 = sbr.rel (%p544) target = $region56
        $region55: #{tpu_custom_call.1} parent=11 // pred_region
          _
        $region56: #{tpu_custom_call.1} parent=11 // pred_fallthru
          _
        // Predicated region
        $region57: #{tpu_custom_call.1} parent=11 // pred_check
          %p547 = pneg %p337
        $region58: #{tpu_custom_call.1} parent=11 // pred_check_branch
          %549 = sbr.rel (%p547) target = $region60
        $region59: #{tpu_custom_call.1} parent=11 // pred_region
          _
        $region60: #{tpu_custom_call.1} parent=11 // pred_fallthru
          _
        // Predicated region
        $region61: #{tpu_custom_call.1} parent=11 // pred_check
          %p550 = pneg %p358
        $region62: #{tpu_custom_call.1} parent=11 // pred_check_branch
          %552 = sbr.rel (%p550) target = $region64
        $region63: #{tpu_custom_call.1} parent=11 // pred_region
          _
        $region64: #{tpu_custom_call.1} parent=11 // pred_fallthru
          _
        // Predicated region
        $region65: #{tpu_custom_call.1} parent=11 // pred_check
          %p553 = pneg %p379
        $region66: #{tpu_custom_call.1} parent=11 // pred_check_branch
          %555 = sbr.rel (%p553) target = $region68
        $region67: #{tpu_custom_call.1} parent=11 // pred_region
          _
        $region68: #{tpu_custom_call.1} parent=11 // pred_fallthru
          _
        // Predicated region
        $region69: #{tpu_custom_call.1} parent=11 // pred_check
          %p556 = pneg %p400
        $region70: #{tpu_custom_call.1} parent=11 // pred_check_branch
          %558 = sbr.rel (%p556) target = $region72
        $region71: #{tpu_custom_call.1} parent=11 // pred_region
          _
        $region72: #{tpu_custom_call.1} parent=11 // pred_fallthru
          _
        // Predicated region
        $region73: #{tpu_custom_call.1} parent=11 // pred_check
          %p559 = pneg %p421
        $region74: #{tpu_custom_call.1} parent=11 // pred_check_branch
          %561 = sbr.rel (%p559) target = $region76
        $region75: #{tpu_custom_call.1} parent=11 // pred_region
          _
        $region76: #{tpu_custom_call.1} parent=11 // pred_fallthru
          _
      $region12: #{tpu_custom_call.1} parent=5 // pred_fallthru
        _
      %p562 = scmp.lt.s32.totalorder %s33, 2
      // Predicated region
      $region77: #{tpu_custom_call.1} parent=5 // pred_check
        %p563 = pneg %p562
      $region78: #{tpu_custom_call.1} parent=5 // pred_check_branch
        %565 = sbr.rel (%p563) target = $region80
      $region79: #{tpu_custom_call.1} parent=5 // pred_region
        // Predicated region
        $region81: #{tpu_custom_call.1} parent=79 // pred_check
          %p566 = pneg %p53
        $region82: #{tpu_custom_call.1} parent=79 // pred_check_branch
          %568 = sbr.rel (%p566) target = $region84
        $region83: #{tpu_custom_call.1} parent=79 // pred_region
          %p569 = scmp.lt.s32.totalorder %s33, 1
          %s570 = scalar_select %p569, %s33, 1
          %s571 = smul.addr %s570, 8
          %s572 = scalar_lea.vmem %s0, %s571
        $region84: #{tpu_custom_call.1} parent=79 // pred_fallthru
          _
        // Predicated region
        $region85: #{tpu_custom_call.1} parent=79 // pred_check
          %p573 = pneg %p79
        $region86: #{tpu_custom_call.1} parent=79 // pred_check_branch
          %575 = sbr.rel (%p573) target = $region88
        $region87: #{tpu_custom_call.1} parent=79 // pred_region
          %s576 = sand.u32 %s69, 1
          %s577 = scalar_lea.sflag [#allocation3], %s576
          %s578 = sand.u32 %s69, 1
          %s579 = scalar_lea.vmem [#allocation2], %s578
          %s581 = ssub.s32 16, 16
          %582 = vsyncadd %s577, %s581
          %s583 = smul.addr %s33, 16
          %s584 = scalar_lea.hbm %s1, %s583
          %s586 = sshll.u32 %s579, 4
          %s587 = int_to_ptr.vmem [resolvable:$true] %s586
          %589 = dma.hbm_to_vmem [thread:$0]  %s584, 16, %s587, %s577
        $region88: #{tpu_custom_call.1} parent=79 // pred_fallthru
          _
      $region80: #{tpu_custom_call.1} parent=5 // pred_fallthru
        _
      %p590 = scmp.le.s32.totalorder 1, %s33
      %p591 = scmp.lt.s32.totalorder %s33, 3
      %p592 = pnand %p590, %p591
      %p593 = pneg %p592
      // Predicated region
      $region89: #{tpu_custom_call.1} parent=5 // pred_check
        _
      $region90: #{tpu_custom_call.1} parent=5 // pred_check_branch
        %595 = sbr.rel (%p592) target = $region92
      $region91: #{tpu_custom_call.1} parent=5 // pred_region
        %s596 = ssub.s32 %s33, 1
        %s597 = sand.u32 %s72, 1
        %s598 = scalar_lea.sflag [#allocation3], %s597
        %s599 = sand.u32 %s72, 1
        %s600 = scalar_lea.vmem [#allocation2], %s599
        // Predicated region
        $region93: #{tpu_custom_call.1} parent=91 // pred_check
          %p601 = pneg %p85
        $region94: #{tpu_custom_call.1} parent=91 // pred_check_branch
          %603 = sbr.rel (%p601) target = $region96
        $region95: #{tpu_custom_call.1} parent=91 // pred_region
          %604 = dma.done %s598, 16
        $region96: #{tpu_custom_call.1} parent=91 // pred_fallthru
          _
        // Predicated region
        $region97: #{tpu_custom_call.1} parent=91 // pred_check
          %p605 = pneg %p127
        $region98: #{tpu_custom_call.1} parent=91 // pred_check_branch
          %607 = sbr.rel (%p605) target = $region100
        $region99: #{tpu_custom_call.1} parent=91 // pred_region
          %608 = dma.done [#allocation6], 16
        $region100: #{tpu_custom_call.1} parent=91 // pred_fallthru
          _
        // Predicated region
        $region101: #{tpu_custom_call.1} parent=91 // pred_check
          %p609 = pneg %p169
        $region102: #{tpu_custom_call.1} parent=91 // pred_check_branch
          %611 = sbr.rel (%p609) target = $region104
        $region103: #{tpu_custom_call.1} parent=91 // pred_region
          %612 = dma.done [#allocation6], 16
        $region104: #{tpu_custom_call.1} parent=91 // pred_fallthru
          _
        // Predicated region
        $region105: #{tpu_custom_call.1} parent=91 // pred_check
          %p613 = pneg %p190
        $region106: #{tpu_custom_call.1} parent=91 // pred_check_branch
          %615 = sbr.rel (%p613) target = $region108
        $region107: #{tpu_custom_call.1} parent=91 // pred_region
          %616 = dma.done [#allocation9], 256
        $region108: #{tpu_custom_call.1} parent=91 // pred_fallthru
          _
        // Predicated region
        $region109: #{tpu_custom_call.1} parent=91 // pred_check
          %p617 = pneg %p211
        $region110: #{tpu_custom_call.1} parent=91 // pred_check_branch
          %619 = sbr.rel (%p617) target = $region112
        $region111: #{tpu_custom_call.1} parent=91 // pred_region
          %620 = dma.done [#allocation9], 16
        $region112: #{tpu_custom_call.1} parent=91 // pred_fallthru
          _
        // Predicated region
        $region113: #{tpu_custom_call.1} parent=91 // pred_check
          %p621 = pneg %p232
        $region114: #{tpu_custom_call.1} parent=91 // pred_check_branch
          %623 = sbr.rel (%p621) target = $region116
        $region115: #{tpu_custom_call.1} parent=91 // pred_region
          %624 = dma.done [#allocation12], 256
        $region116: #{tpu_custom_call.1} parent=91 // pred_fallthru
          _
        // Predicated region
        $region117: #{tpu_custom_call.1} parent=91 // pred_check
          %p625 = pneg %p253
        $region118: #{tpu_custom_call.1} parent=91 // pred_check_branch
          %627 = sbr.rel (%p625) target = $region120
        $region119: #{tpu_custom_call.1} parent=91 // pred_region
          %628 = dma.done [#allocation12], 16
        $region120: #{tpu_custom_call.1} parent=91 // pred_fallthru
          _
        %p629 = scmp.lt.s32.totalorder %s38, 1
        %s630 = scalar_select %p629, %s38, 1
        %s631 = smul.addr %s630, 8
        %s632 = scalar_lea.vmem %s0, %s631
        %p633 = pneg %p59
        %p634 = pneg %p56
        %s635 = sand.u32 %s72, 1
        %s636 = scalar_lea.sflag [#allocation3], %s635
        %s637 = sand.u32 %s72, 1
        %s638 = scalar_lea.vmem [#allocation2], %s637
        %p639 = pneg %p85
        %p640 = pneg %p82
        %p641 = pneg %p106
        %p642 = pneg %p103
        %p643 = pneg %p127
        %p644 = pneg %p124
        %p645 = pneg %p148
        %p646 = pneg %p145
        %p647 = pneg %p169
        %p648 = pneg %p166
        %p649 = pneg %p190
        %p650 = pneg %p187
        %p651 = pneg %p211
        %p652 = pneg %p208
        %p653 = pneg %p232
        %p654 = pneg %p229
        %p655 = pneg %p253
        %p656 = pneg %p250
        %p657 = pneg %p274
        %p658 = pneg %p271
        %p659 = pneg %p295
        %p660 = pneg %p292
        %p661 = pneg %p316
        %p662 = pneg %p313
        %p663 = pneg %p337
        %p664 = pneg %p334
        %p665 = pneg %p358
        %p666 = pneg %p355
        %p667 = pneg %p379
        %p668 = pneg %p376
        %p669 = pneg %p400
        %p670 = pneg %p397
        %p671 = pneg %p421
        %p672 = pneg %p418
        %p673 = pneg %p447
        %p674 = pneg %p444
        %s675 = sand.u32 %s434, 1
        %s676 = scalar_lea.sflag [#allocation4], %s675
        %s677 = sand.u32 %s434, 1
        %s678 = smul.addr %s677, 8
        %s679 = scalar_lea.vmem [#allocation14], %s678
        %p680 = scmp.lt.s32.totalorder %s38, 1
        %s681 = scalar_select %p680, %s38, 1
        %s682 = smul.addr %s681, 8
        %s683 = scalar_lea.vmem %s0, %s682
        %v685 = vld [vmem:[%s683] sm:$0xff]
        %v686 = vpack.c.bf16 %v685, %v685
        %v687 = vld [vmem:[%s600] sm:$0x1]
        %v688 = vmul.f32 %v687, -1e+09
        %v689 = vld [vmem:[%s2] sm:$0xf]
        %v690 = vld [vmem:[%s2 + $0x4] sm:$0xf]
        %v691 = vld [vmem:[%s2 + $0x8] sm:$0xf]
        %v692 = vld [vmem:[%s2 + $0xc] sm:$0xf]
        %v693 = vld [vmem:[#allocation5] sm:$0x1]
        %v694 = vld [vmem:[%s4] sm:$0xf]
        %v695 = vld [vmem:[%s4 + $0x4] sm:$0xf]
        %v696 = vld [vmem:[%s4 + $0x8] sm:$0xf]
        %v697 = vld [vmem:[%s4 + $0xc] sm:$0xf]
        %v698 = vld [vmem:[#allocation7] sm:$0x1]
        %v699 = vld [vmem:[#allocation8] sm:$0xf]
        %v700 = vld [vmem:[#allocation8 + $0x4] sm:$0xf]
        %v701 = vld [vmem:[#allocation8 + $0x8] sm:$0xf]
        %v702 = vld [vmem:[#allocation8 + $0xc] sm:$0xf]
        %v703 = vld [vmem:[#allocation10] sm:$0x1]
        %v704 = vld [vmem:[#allocation11] sm:$0xf]
        %v705 = vld [vmem:[#allocation11 + $0x4] sm:$0xf]
        %v706 = vld [vmem:[#allocation11 + $0x8] sm:$0xf]
        %v707 = vld [vmem:[#allocation11 + $0xc] sm:$0xf]
        %v708 = vld [vmem:[#allocation13] sm:$0x1]
        %v709 = vld [vmem:[%s10] sm:$0x1]
        %v710 = vld [vmem:[%s11] sm:$0x1]
        %v711 = vld [vmem:[%s12] sm:$0xf]
        %v712 = vld [vmem:[%s12 + $0x4] sm:$0xf]
        %v713 = vld [vmem:[%s12 + $0x8] sm:$0xf]
        %v714 = vld [vmem:[%s12 + $0xc] sm:$0xf]
        %v715 = vld [vmem:[%s13] sm:$0x1]
        %v716 = vld [vmem:[%s14] sm:$0xf]
        %v717 = vld [vmem:[%s14 + $0x4] sm:$0xf]
        %v718 = vld [vmem:[%s14 + $0x8] sm:$0xf]
        %v719 = vld [vmem:[%s14 + $0xc] sm:$0xf]
        %v720 = vld [vmem:[%s14 + $0x10] sm:$0xf]
        %v721 = vld [vmem:[%s14 + $0x14] sm:$0xf]
        %v722 = vld [vmem:[%s14 + $0x18] sm:$0xf]
        %v723 = vld [vmem:[%s14 + $0x1c] sm:$0xf]
        %v724 = vld [vmem:[%s15] sm:$0x1]
        %v725 = vld [vmem:[%s16] sm:$0x1]
        %v726 = vld [vmem:[%s17] sm:$0x1]
        %v728 = vlaneseq
        %v729 = vshrl.u32 %v728, 7
        %v730 = vsub.s32 0, %v729
        %v731 = vrot.slane %v693, %v730
        %v737 = vunpack.c.l.b16 %v689
        %v738 = vunpack.c.l.b16 %v690
        %v739 = vunpack.c.l.b16 %v691
        %v740 = vunpack.c.l.b16 %v692
        %v741 = vpack.c.b16 %v738, %v737
        %v742 = vpack.c.b16 %v740, %v739
        %vm745 = vcmask 261120
        %v747 = vsel %vm745, %v686, 0
        %749 = vmatprep.subr.bf16.mxu0 0
        %750 = vmatpush1.bf16.msra.mxu0 0
        %751 = vmatprep.subr.bf16.mxu0 0
        %752 = vmatpush1.bf16.msra.mxu0 0
        %753 = vmatprep.subr.bf16.mxu0 0
        %754 = vmatpush1.bf16.msra.mxu0 0
        %755 = vmatprep.subr.bf16.mxu0 0
        %756 = vmatpush1.bf16.msra.mxu0 0
        %757 = vmatprep.subr.bf16.mxu0 0
        %758 = vmatpush1.bf16.msra.mxu0 0
        %759 = vmatprep.subr.bf16.mxu0 0
        %760 = vmatpush1.bf16.msra.mxu0 0
        %761 = vmatprep.subr.bf16.mxu0 0
        %762 = vmatpush1.bf16.msra.mxu0 %v742
        %763 = vmatprep.subr.bf16.mxu0 0
        %764 = vmatpush1.bf16.msra.mxu0 %v741
        %765 = vmatprep.subr.bf16.mxu0 0
        %766 = vmatpush2.bf16.msra.mxu0 0
        %767 = vmatprep.subr.bf16.mxu0 0
        %768 = vmatpush2.bf16.msra.mxu0 0
        %769 = vmatprep.subr.bf16.mxu0 0
        %770 = vmatpush2.bf16.msra.mxu0 0
        %771 = vmatprep.subr.bf16.mxu0 0
        %772 = vmatpush2.bf16.msra.mxu0 0
        %773 = vmatprep.subr.bf16.mxu0 0
        %774 = vmatpush2.bf16.msra.mxu0 0
        %775 = vmatprep.subr.bf16.mxu0 0
        %776 = vmatpush2.bf16.msra.mxu0 0
        %777 = vmatprep.subr.bf16.mxu0 0
        %778 = vmatpush2.bf16.msra.mxu0 0
        %779 = vmatprep.subr.bf16.mxu0 0
        %780 = vmatpush2.bf16.msra.mxu0 0
        %781 = vmatprep.mubr.bf16.mxu0 0
        %782 = vmatmul.mubr.bf16.gmra.mxu0 %v747
        %v783 = vpop.f32.mrf.mxu0
        %v784 = vadd.f32 %v731, %v783
        %v785 = vpop.f32.mrf.mxu0
        %v786 = vpop.f32.mrf.mxu0
        %v787 = vpop.f32.mrf.mxu0
        %788 = vdwg.mxu0
        %v790 = vlaneseq
        %v791 = vshrl.u32 %v790, 7
        %v792 = vsub.s32 0, %v791
        %v793 = vrot.slane %v698, %v792
        %v799 = vunpack.c.l.b16 %v694
        %v800 = vunpack.c.l.b16 %v695
        %v801 = vunpack.c.l.b16 %v696
        %v802 = vunpack.c.l.b16 %v697
        %v803 = vpack.c.b16 %v800, %v799
        %v804 = vpack.c.b16 %v802, %v801
        %807 = vmatprep.subr.bf16.mxu0 0
        %808 = vmatpush1.bf16.msra.mxu0 0
        %809 = vmatprep.subr.bf16.mxu0 0
        %810 = vmatpush1.bf16.msra.mxu0 0
        %811 = vmatprep.subr.bf16.mxu0 0
        %812 = vmatpush1.bf16.msra.mxu0 0
        %813 = vmatprep.subr.bf16.mxu0 0
        %814 = vmatpush1.bf16.msra.mxu0 0
        %815 = vmatprep.subr.bf16.mxu0 0
        %816 = vmatpush1.bf16.msra.mxu0 0
        %817 = vmatprep.subr.bf16.mxu0 0
        %818 = vmatpush1.bf16.msra.mxu0 0
        %819 = vmatprep.subr.bf16.mxu0 0
        %820 = vmatpush1.bf16.msra.mxu0 %v804
        %821 = vmatprep.subr.bf16.mxu0 0
        %822 = vmatpush1.bf16.msra.mxu0 %v803
        %823 = vmatprep.subr.bf16.mxu0 0
        %824 = vmatpush2.bf16.msra.mxu0 0
        %825 = vmatprep.subr.bf16.mxu0 0
        %826 = vmatpush2.bf16.msra.mxu0 0
        %827 = vmatprep.subr.bf16.mxu0 0
        %828 = vmatpush2.bf16.msra.mxu0 0
        %829 = vmatprep.subr.bf16.mxu0 0
        %830 = vmatpush2.bf16.msra.mxu0 0
        %831 = vmatprep.subr.bf16.mxu0 0
        %832 = vmatpush2.bf16.msra.mxu0 0
        %833 = vmatprep.subr.bf16.mxu0 0
        %834 = vmatpush2.bf16.msra.mxu0 0
        %835 = vmatprep.subr.bf16.mxu0 0
        %836 = vmatpush2.bf16.msra.mxu0 0
        %837 = vmatprep.subr.bf16.mxu0 0
        %838 = vmatpush2.bf16.msra.mxu0 0
        %839 = vmatprep.mubr.bf16.mxu0 0
        %840 = vmatmul.mubr.bf16.gmra.mxu0 %v747
        %v841 = vpop.f32.mrf.mxu0
        %v842 = vadd.f32 %v793, %v841
        %v843 = vpop.f32.mrf.mxu0
        %v844 = vpop.f32.mrf.mxu0
        %v845 = vpop.f32.mrf.mxu0
        %846 = vdwg.mxu0
        %v848 = vlaneseq
        %v849 = vshrl.u32 %v848, 7
        %v850 = vsub.s32 0, %v849
        %v851 = vrot.slane %v703, %v850
        %v857 = vunpack.c.l.b16 %v699
        %v858 = vunpack.c.l.b16 %v700
        %v859 = vunpack.c.l.b16 %v701
        %v860 = vunpack.c.l.b16 %v702
        %v861 = vpack.c.b16 %v858, %v857
        %v862 = vpack.c.b16 %v860, %v859
        %865 = vmatprep.subr.bf16.mxu0 0
        %866 = vmatpush1.bf16.msra.mxu0 0
        %867 = vmatprep.subr.bf16.mxu0 0
        %868 = vmatpush1.bf16.msra.mxu0 0
        %869 = vmatprep.subr.bf16.mxu0 0
        %870 = vmatpush1.bf16.msra.mxu0 0
        %871 = vmatprep.subr.bf16.mxu0 0
        %872 = vmatpush1.bf16.msra.mxu0 0
        %873 = vmatprep.subr.bf16.mxu0 0
        %874 = vmatpush1.bf16.msra.mxu0 0
        %875 = vmatprep.subr.bf16.mxu0 0
        %876 = vmatpush1.bf16.msra.mxu0 0
        %877 = vmatprep.subr.bf16.mxu0 0
        %878 = vmatpush1.bf16.msra.mxu0 %v862
        %879 = vmatprep.subr.bf16.mxu0 0
        %880 = vmatpush1.bf16.msra.mxu0 %v861
        %881 = vmatprep.subr.bf16.mxu0 0
        %882 = vmatpush2.bf16.msra.mxu0 0
        %883 = vmatprep.subr.bf16.mxu0 0
        %884 = vmatpush2.bf16.msra.mxu0 0
        %885 = vmatprep.subr.bf16.mxu0 0
        %886 = vmatpush2.bf16.msra.mxu0 0
        %887 = vmatprep.subr.bf16.mxu0 0
        %888 = vmatpush2.bf16.msra.mxu0 0
        %889 = vmatprep.subr.bf16.mxu0 0
        %890 = vmatpush2.bf16.msra.mxu0 0
        %891 = vmatprep.subr.bf16.mxu0 0
        %892 = vmatpush2.bf16.msra.mxu0 0
        %893 = vmatprep.subr.bf16.mxu0 0
        %894 = vmatpush2.bf16.msra.mxu0 0
        %895 = vmatprep.subr.bf16.mxu0 0
        %896 = vmatpush2.bf16.msra.mxu0 0
        %897 = vmatprep.mubr.bf16.mxu0 0
        %898 = vmatmul.mubr.bf16.gmra.mxu0 %v747
        %v899 = vpop.f32.mrf.mxu0
        %v900 = vadd.f32 %v851, %v899
        %v901 = vpop.f32.mrf.mxu0
        %v902 = vpop.f32.mrf.mxu0
        %v903 = vpop.f32.mrf.mxu0
        %904 = vdwg.mxu0
        %906 = vrot.lane.b32.xlu0 %v784, 120
        %v907 = vpop.permute.xlu0 %906
        %909 = vrot.lane.b32.xlu0 %v784, 112
        %v910 = vpop.permute.xlu0 %909
        %912 = vrot.lane.b32.xlu0 %v784, 104
        %v913 = vpop.permute.xlu0 %912
        %v915 = vcombine.low %v784, %v910
        %v916 = vcombine.high %v784, %v910
        %v918 = vunpack.c.l.s4 1983009808
        %v919 = vunpack.c.0.s8 %v918
        %v920 = vlaneseq
        %v921 = vshrl.u32 %v920, 7
        %v922 = vsub.s32 %v919, %v921
        %v923 = vrot.slane %v915, %v922
        %v925 = vunpack.c.l.s4 1983009808
        %v926 = vunpack.c.0.s8 %v925
        %v927 = vlaneseq
        %v928 = vshrl.u32 %v927, 7
        %v929 = vsub.s32 %v926, %v928
        %v930 = vrot.slane %v916, %v929
        %v931 = vcombine.low %v907, %v913
        %v932 = vcombine.high %v907, %v913
        %v934 = vunpack.c.l.s4 1983009808
        %v935 = vunpack.c.0.s8 %v934
        %v936 = vlaneseq
        %v937 = vshrl.u32 %v936, 7
        %v938 = vsub.s32 %v935, %v937
        %v939 = vrot.slane %v931, %v938
        %v941 = vunpack.c.l.s4 1983009808
        %v942 = vunpack.c.0.s8 %v941
        %v943 = vlaneseq
        %v944 = vshrl.u32 %v943, 7
        %v945 = vsub.s32 %v942, %v944
        %v946 = vrot.slane %v932, %v945
        %v947 = vcombine.low %v923, %v939
        %v948 = vcombine.high %v923, %v939
        %v950 = vunpack.c.l.s4 1934713408
        %v951 = vunpack.c.0.s8 %v950
        %v952 = vlaneseq
        %v953 = vshrl.u32 %v952, 7
        %v954 = vsub.s32 %v951, %v953
        %v955 = vrot.slane %v947, %v954
        %v957 = vunpack.c.l.s4 1934713408
        %v958 = vunpack.c.0.s8 %v957
        %v959 = vlaneseq
        %v960 = vshrl.u32 %v959, 7
        %v961 = vsub.s32 %v958, %v960
        %v962 = vrot.slane %v948, %v961
        %v963 = vcombine.low %v930, %v946
        %v964 = vcombine.high %v930, %v946
        %v966 = vunpack.c.l.s4 1934713408
        %v967 = vunpack.c.0.s8 %v966
        %v968 = vlaneseq
        %v969 = vshrl.u32 %v968, 7
        %v970 = vsub.s32 %v967, %v969
        %v971 = vrot.slane %v963, %v970
        %v973 = vunpack.c.l.s4 1934713408
        %v974 = vunpack.c.0.s8 %v973
        %v975 = vlaneseq
        %v976 = vshrl.u32 %v975, 7
        %v977 = vsub.s32 %v974, %v976
        %v978 = vrot.slane %v964, %v977
        %v979 = vcombine.high %v955, 0.0
        %v980 = vcombine.high %v962, 0.0
        %v981 = vcombine.high %v971, 0.0
        %v982 = vcombine.high %v978, 0.0
        %v983 = vcombine.low %v955, %v962
        %v985 = vunpack.c.l.s4 1983009808
        %v986 = vunpack.c.0.s8 %v985
        %v987 = vlaneseq
        %v988 = vshrl.u32 %v987, 7
        %v989 = vsub.s32 %v986, %v988
        %v990 = vrot.slane %v983, %v989
        %v991 = vcombine.low %v979, %v980
        %v993 = vunpack.c.l.s4 1983009808
        %v994 = vunpack.c.0.s8 %v993
        %v995 = vlaneseq
        %v996 = vshrl.u32 %v995, 7
        %v997 = vsub.s32 %v994, %v996
        %v998 = vrot.slane %v991, %v997
        %v999 = vcombine.low %v971, %v978
        %v1001 = vunpack.c.l.s4 1983009808
        %v1002 = vunpack.c.0.s8 %v1001
        %v1003 = vlaneseq
        %v1004 = vshrl.u32 %v1003, 7
        %v1005 = vsub.s32 %v1002, %v1004
        %v1006 = vrot.slane %v999, %v1005
        %v1007 = vcombine.low %v981, %v982
        %v1009 = vunpack.c.l.s4 1983009808
        %v1010 = vunpack.c.0.s8 %v1009
        %v1011 = vlaneseq
        %v1012 = vshrl.u32 %v1011, 7
        %v1013 = vsub.s32 %v1010, %v1012
        %v1014 = vrot.slane %v1007, %v1013
        %v1015 = vcombine.low %v990, %v998
        %v1016 = vcombine.high %v990, %v998
        %v1018 = vunpack.c.l.s4 1934713408
        %v1019 = vunpack.c.0.s8 %v1018
        %v1020 = vlaneseq
        %v1021 = vshrl.u32 %v1020, 7
        %v1022 = vsub.s32 %v1019, %v1021
        %v1023 = vrot.slane %v1015, %v1022
        %v1025 = vunpack.c.l.s4 1934713408
        %v1026 = vunpack.c.0.s8 %v1025
        %v1027 = vlaneseq
        %v1028 = vshrl.u32 %v1027, 7
        %v1029 = vsub.s32 %v1026, %v1028
        %v1030 = vrot.slane %v1016, %v1029
        %v1031 = vcombine.low %v1006, %v1014
        %v1032 = vcombine.high %v1006, %v1014
        %v1034 = vunpack.c.l.s4 1934713408
        %v1035 = vunpack.c.0.s8 %v1034
        %v1036 = vlaneseq
        %v1037 = vshrl.u32 %v1036, 7
        %v1038 = vsub.s32 %v1035, %v1037
        %v1039 = vrot.slane %v1031, %v1038
        %v1041 = vunpack.c.l.s4 1934713408
        %v1042 = vunpack.c.0.s8 %v1041
        %v1043 = vlaneseq
        %v1044 = vshrl.u32 %v1043, 7
        %v1045 = vsub.s32 %v1042, %v1044
        %v1046 = vrot.slane %v1032, %v1045
        %v1047 = vcombine.low %v1023, %v1039
        %v1048 = vcombine.high %v1023, %v1039
        %v1049 = vcombine.low %v1030, %v1046
        %v1050 = vcombine.high %v1030, %v1046
        %v1051 = vpack.c.bf16 %v1047, %v1047
        %v1052 = vpack.c.bf16 %v1048, %v1048
        %v1053 = vpack.c.bf16 %v1049, %v1049
        %v1054 = vpack.c.bf16 %v1050, %v1050
        %1056 = vrot.lane.b32.xlu0 %v842, 120
        %v1057 = vpop.permute.xlu0 %1056
        %1059 = vrot.lane.b32.xlu0 %v842, 112
        %v1060 = vpop.permute.xlu0 %1059
        %1062 = vrot.lane.b32.xlu0 %v842, 104
        %v1063 = vpop.permute.xlu0 %1062
        %v1065 = vcombine.low %v842, %v1060
        %v1066 = vcombine.high %v842, %v1060
        %v1068 = vunpack.c.l.s4 1983009808
        %v1069 = vunpack.c.0.s8 %v1068
        %v1070 = vlaneseq
        %v1071 = vshrl.u32 %v1070, 7
        %v1072 = vsub.s32 %v1069, %v1071
        %v1073 = vrot.slane %v1065, %v1072
        %v1075 = vunpack.c.l.s4 1983009808
        %v1076 = vunpack.c.0.s8 %v1075
        %v1077 = vlaneseq
        %v1078 = vshrl.u32 %v1077, 7
        %v1079 = vsub.s32 %v1076, %v1078
        %v1080 = vrot.slane %v1066, %v1079
        %v1081 = vcombine.low %v1057, %v1063
        %v1082 = vcombine.high %v1057, %v1063
        %v1084 = vunpack.c.l.s4 1983009808
        %v1085 = vunpack.c.0.s8 %v1084
        %v1086 = vlaneseq
        %v1087 = vshrl.u32 %v1086, 7
        %v1088 = vsub.s32 %v1085, %v1087
        %v1089 = vrot.slane %v1081, %v1088
        %v1091 = vunpack.c.l.s4 1983009808
        %v1092 = vunpack.c.0.s8 %v1091
        %v1093 = vlaneseq
        %v1094 = vshrl.u32 %v1093, 7
        %v1095 = vsub.s32 %v1092, %v1094
        %v1096 = vrot.slane %v1082, %v1095
        %v1097 = vcombine.low %v1073, %v1089
        %v1098 = vcombine.high %v1073, %v1089
        %v1100 = vunpack.c.l.s4 1934713408
        %v1101 = vunpack.c.0.s8 %v1100
        %v1102 = vlaneseq
        %v1103 = vshrl.u32 %v1102, 7
        %v1104 = vsub.s32 %v1101, %v1103
        %v1105 = vrot.slane %v1097, %v1104
        %v1107 = vunpack.c.l.s4 1934713408
        %v1108 = vunpack.c.0.s8 %v1107
        %v1109 = vlaneseq
        %v1110 = vshrl.u32 %v1109, 7
        %v1111 = vsub.s32 %v1108, %v1110
        %v1112 = vrot.slane %v1098, %v1111
        %v1113 = vcombine.low %v1080, %v1096
        %v1114 = vcombine.high %v1080, %v1096
        %v1116 = vunpack.c.l.s4 1934713408
        %v1117 = vunpack.c.0.s8 %v1116
        %v1118 = vlaneseq
        %v1119 = vshrl.u32 %v1118, 7
        %v1120 = vsub.s32 %v1117, %v1119
        %v1121 = vrot.slane %v1113, %v1120
        %v1123 = vunpack.c.l.s4 1934713408
        %v1124 = vunpack.c.0.s8 %v1123
        %v1125 = vlaneseq
        %v1126 = vshrl.u32 %v1125, 7
        %v1127 = vsub.s32 %v1124, %v1126
        %v1128 = vrot.slane %v1114, %v1127
        %v1129 = vcombine.high %v1105, 0.0
        %v1130 = vcombine.high %v1112, 0.0
        %v1131 = vcombine.high %v1121, 0.0
        %v1132 = vcombine.high %v1128, 0.0
        %v1133 = vcombine.low %v1105, %v1112
        %v1135 = vunpack.c.l.s4 1983009808
        %v1136 = vunpack.c.0.s8 %v1135
        %v1137 = vlaneseq
        %v1138 = vshrl.u32 %v1137, 7
        %v1139 = vsub.s32 %v1136, %v1138
        %v1140 = vrot.slane %v1133, %v1139
        %v1141 = vcombine.low %v1129, %v1130
        %v1143 = vunpack.c.l.s4 1983009808
        %v1144 = vunpack.c.0.s8 %v1143
        %v1145 = vlaneseq
        %v1146 = vshrl.u32 %v1145, 7
        %v1147 = vsub.s32 %v1144, %v1146
        %v1148 = vrot.slane %v1141, %v1147
        %v1149 = vcombine.low %v1121, %v1128
        %v1151 = vunpack.c.l.s4 1983009808
        %v1152 = vunpack.c.0.s8 %v1151
        %v1153 = vlaneseq
        %v1154 = vshrl.u32 %v1153, 7
        %v1155 = vsub.s32 %v1152, %v1154
        %v1156 = vrot.slane %v1149, %v1155
        %v1157 = vcombine.low %v1131, %v1132
        %v1159 = vunpack.c.l.s4 1983009808
        %v1160 = vunpack.c.0.s8 %v1159
        %v1161 = vlaneseq
        %v1162 = vshrl.u32 %v1161, 7
        %v1163 = vsub.s32 %v1160, %v1162
        %v1164 = vrot.slane %v1157, %v1163
        %v1165 = vcombine.low %v1140, %v1148
        %v1166 = vcombine.high %v1140, %v1148
        %v1168 = vunpack.c.l.s4 1934713408
        %v1169 = vunpack.c.0.s8 %v1168
        %v1170 = vlaneseq
        %v1171 = vshrl.u32 %v1170, 7
        %v1172 = vsub.s32 %v1169, %v1171
        %v1173 = vrot.slane %v1165, %v1172
        %v1175 = vunpack.c.l.s4 1934713408
        %v1176 = vunpack.c.0.s8 %v1175
        %v1177 = vlaneseq
        %v1178 = vshrl.u32 %v1177, 7
        %v1179 = vsub.s32 %v1176, %v1178
        %v1180 = vrot.slane %v1166, %v1179
        %v1181 = vcombine.low %v1156, %v1164
        %v1182 = vcombine.high %v1156, %v1164
        %v1184 = vunpack.c.l.s4 1934713408
        %v1185 = vunpack.c.0.s8 %v1184
        %v1186 = vlaneseq
        %v1187 = vshrl.u32 %v1186, 7
        %v1188 = vsub.s32 %v1185, %v1187
        %v1189 = vrot.slane %v1181, %v1188
        %v1191 = vunpack.c.l.s4 1934713408
        %v1192 = vunpack.c.0.s8 %v1191
        %v1193 = vlaneseq
        %v1194 = vshrl.u32 %v1193, 7
        %v1195 = vsub.s32 %v1192, %v1194
        %v1196 = vrot.slane %v1182, %v1195
        %v1197 = vcombine.low %v1173, %v1189
        %v1198 = vcombine.high %v1173, %v1189
        %v1199 = vcombine.low %v1180, %v1196
        %v1200 = vcombine.high %v1180, %v1196
        %v1201 = vpack.c.bf16 %v1197, %v1197
        %v1202 = vpack.c.bf16 %v1198, %v1198
        %v1203 = vpack.c.bf16 %v1199, %v1199
        %v1204 = vpack.c.bf16 %v1200, %v1200
        %1206 = vrot.lane.b32.xlu0 %v900, 120
        %v1207 = vpop.permute.xlu0 %1206
        %1209 = vrot.lane.b32.xlu0 %v900, 112
        %v1210 = vpop.permute.xlu0 %1209
        %1212 = vrot.lane.b32.xlu0 %v900, 104
        %v1213 = vpop.permute.xlu0 %1212
        %v1215 = vcombine.low %v900, %v1210
        %v1216 = vcombine.high %v900, %v1210
        %v1218 = vunpack.c.l.s4 1983009808
        %v1219 = vunpack.c.0.s8 %v1218
        %v1220 = vlaneseq
        %v1221 = vshrl.u32 %v1220, 7
        %v1222 = vsub.s32 %v1219, %v1221
        %v1223 = vrot.slane %v1215, %v1222
        %v1225 = vunpack.c.l.s4 1983009808
        %v1226 = vunpack.c.0.s8 %v1225
        %v1227 = vlaneseq
        %v1228 = vshrl.u32 %v1227, 7
        %v1229 = vsub.s32 %v1226, %v1228
        %v1230 = vrot.slane %v1216, %v1229
        %v1231 = vcombine.low %v1207, %v1213
        %v1232 = vcombine.high %v1207, %v1213
        %v1234 = vunpack.c.l.s4 1983009808
        %v1235 = vunpack.c.0.s8 %v1234
        %v1236 = vlaneseq
        %v1237 = vshrl.u32 %v1236, 7
        %v1238 = vsub.s32 %v1235, %v1237
        %v1239 = vrot.slane %v1231, %v1238
        %v1241 = vunpack.c.l.s4 1983009808
        %v1242 = vunpack.c.0.s8 %v1241
        %v1243 = vlaneseq
        %v1244 = vshrl.u32 %v1243, 7
        %v1245 = vsub.s32 %v1242, %v1244
        %v1246 = vrot.slane %v1232, %v1245
        %v1247 = vcombine.low %v1223, %v1239
        %v1248 = vcombine.high %v1223, %v1239
        %v1250 = vunpack.c.l.s4 1934713408
        %v1251 = vunpack.c.0.s8 %v1250
        %v1252 = vlaneseq
        %v1253 = vshrl.u32 %v1252, 7
        %v1254 = vsub.s32 %v1251, %v1253
        %v1255 = vrot.slane %v1247, %v1254
        %v1257 = vunpack.c.l.s4 1934713408
        %v1258 = vunpack.c.0.s8 %v1257
        %v1259 = vlaneseq
        %v1260 = vshrl.u32 %v1259, 7
        %v1261 = vsub.s32 %v1258, %v1260
        %v1262 = vrot.slane %v1248, %v1261
        %v1263 = vcombine.low %v1230, %v1246
        %v1264 = vcombine.high %v1230, %v1246
        %v1266 = vunpack.c.l.s4 1934713408
        %v1267 = vunpack.c.0.s8 %v1266
        %v1268 = vlaneseq
        %v1269 = vshrl.u32 %v1268, 7
        %v1270 = vsub.s32 %v1267, %v1269
        %v1271 = vrot.slane %v1263, %v1270
        %v1273 = vunpack.c.l.s4 1934713408
        %v1274 = vunpack.c.0.s8 %v1273
        %v1275 = vlaneseq
        %v1276 = vshrl.u32 %v1275, 7
        %v1277 = vsub.s32 %v1274, %v1276
        %v1278 = vrot.slane %v1264, %v1277
        %v1279 = vcombine.high %v1255, 0.0
        %v1280 = vcombine.high %v1262, 0.0
        %v1281 = vcombine.high %v1271, 0.0
        %v1282 = vcombine.high %v1278, 0.0
        %v1283 = vcombine.low %v1255, %v1262
        %v1285 = vunpack.c.l.s4 1983009808
        %v1286 = vunpack.c.0.s8 %v1285
        %v1287 = vlaneseq
        %v1288 = vshrl.u32 %v1287, 7
        %v1289 = vsub.s32 %v1286, %v1288
        %v1290 = vrot.slane %v1283, %v1289
        %v1291 = vcombine.low %v1279, %v1280
        %v1293 = vunpack.c.l.s4 1983009808
        %v1294 = vunpack.c.0.s8 %v1293
        %v1295 = vlaneseq
        %v1296 = vshrl.u32 %v1295, 7
        %v1297 = vsub.s32 %v1294, %v1296
        %v1298 = vrot.slane %v1291, %v1297
        %v1299 = vcombine.low %v1271, %v1278
        %v1301 = vunpack.c.l.s4 1983009808
        %v1302 = vunpack.c.0.s8 %v1301
        %v1303 = vlaneseq
        %v1304 = vshrl.u32 %v1303, 7
        %v1305 = vsub.s32 %v1302, %v1304
        %v1306 = vrot.slane %v1299, %v1305
        %v1307 = vcombine.low %v1281, %v1282
        %v1309 = vunpack.c.l.s4 1983009808
        %v1310 = vunpack.c.0.s8 %v1309
        %v1311 = vlaneseq
        %v1312 = vshrl.u32 %v1311, 7
        %v1313 = vsub.s32 %v1310, %v1312
        %v1314 = vrot.slane %v1307, %v1313
        %v1315 = vcombine.low %v1290, %v1298
        %v1316 = vcombine.high %v1290, %v1298
        %v1318 = vunpack.c.l.s4 1934713408
        %v1319 = vunpack.c.0.s8 %v1318
        %v1320 = vlaneseq
        %v1321 = vshrl.u32 %v1320, 7
        %v1322 = vsub.s32 %v1319, %v1321
        %v1323 = vrot.slane %v1315, %v1322
        %v1325 = vunpack.c.l.s4 1934713408
        %v1326 = vunpack.c.0.s8 %v1325
        %v1327 = vlaneseq
        %v1328 = vshrl.u32 %v1327, 7
        %v1329 = vsub.s32 %v1326, %v1328
        %v1330 = vrot.slane %v1316, %v1329
        %v1331 = vcombine.low %v1306, %v1314
        %v1332 = vcombine.high %v1306, %v1314
        %v1334 = vunpack.c.l.s4 1934713408
        %v1335 = vunpack.c.0.s8 %v1334
        %v1336 = vlaneseq
        %v1337 = vshrl.u32 %v1336, 7
        %v1338 = vsub.s32 %v1335, %v1337
        %v1339 = vrot.slane %v1331, %v1338
        %v1341 = vunpack.c.l.s4 1934713408
        %v1342 = vunpack.c.0.s8 %v1341
        %v1343 = vlaneseq
        %v1344 = vshrl.u32 %v1343, 7
        %v1345 = vsub.s32 %v1342, %v1344
        %v1346 = vrot.slane %v1332, %v1345
        %v1347 = vcombine.low %v1323, %v1339
        %v1348 = vcombine.high %v1323, %v1339
        %v1349 = vcombine.low %v1330, %v1346
        %v1350 = vcombine.high %v1330, %v1346
        %v1351 = vpack.c.bf16 %v1347, %v1347
        %v1352 = vpack.c.bf16 %v1348, %v1348
        %v1353 = vpack.c.bf16 %v1349, %v1349
        %v1354 = vpack.c.bf16 %v1350, %v1350
        %vm1355 = vcmask 64512
        %v1357 = vsel %vm1355, %v1051, 0
        %v1360 = vsel %vm1355, %v1201, 0
        %1362 = vmatprep.subr.bf16.mxu0 0
        %1363 = vmatpush1.bf16.xpose.msra.mxu0 0
        %1364 = vmatprep.subr.bf16.mxu0 0
        %1365 = vmatpush1.bf16.xpose.msra.mxu0 0
        %1366 = vmatprep.subr.bf16.mxu0 0
        %1367 = vmatpush1.bf16.xpose.msra.mxu0 0
        %1368 = vmatprep.subr.bf16.mxu0 0
        %1369 = vmatpush1.bf16.xpose.msra.mxu0 0
        %1370 = vmatprep.subr.bf16.mxu0 0
        %1371 = vmatpush1.bf16.xpose.msra.mxu0 0
        %1372 = vmatprep.subr.bf16.mxu0 0
        %1373 = vmatpush1.bf16.xpose.msra.mxu0 0
        %1374 = vmatprep.subr.bf16.mxu0 0
        %1375 = vmatpush1.bf16.xpose.msra.mxu0 0
        %1376 = vmatprep.subr.bf16.mxu0 0
        %1377 = vmatpush1.bf16.xpose.msra.mxu0 %v1360
        %1378 = vmatprep.subr.bf16.mxu0 0
        %1379 = vmatpush2.bf16.xpose.msra.mxu0 0
        %1380 = vmatprep.subr.bf16.mxu0 0
        %1381 = vmatpush2.bf16.xpose.msra.mxu0 0
        %1382 = vmatprep.subr.bf16.mxu0 0
        %1383 = vmatpush2.bf16.xpose.msra.mxu0 0
        %1384 = vmatprep.subr.bf16.mxu0 0
        %1385 = vmatpush2.bf16.xpose.msra.mxu0 0
        %1386 = vmatprep.subr.bf16.mxu0 0
        %1387 = vmatpush2.bf16.xpose.msra.mxu0 0
        %1388 = vmatprep.subr.bf16.mxu0 0
        %1389 = vmatpush2.bf16.xpose.msra.mxu0 0
        %1390 = vmatprep.subr.bf16.mxu0 0
        %1391 = vmatpush2.bf16.xpose.msra.mxu0 0
        %1392 = vmatprep.subr.bf16.mxu0 0
        %1393 = vmatpush2.bf16.xpose.msra.mxu0 0
        %1394 = vmatprep.mubr.bf16.mxu0 0
        %1395 = vmatmul.mubr.bf16.gmra.mxu0 %v1357
        %v1396 = vpop.f32.mrf.mxu0
        %v1397 = vadd.f32 0.0, %v1396
        %v1398 = vpop.f32.mrf.mxu0
        %v1399 = vpop.f32.mrf.mxu0
        %v1400 = vpop.f32.mrf.mxu0
        %1401 = vdwg.mxu0
        %v1403 = vsel %vm1355, %v1052, 0
        %v1406 = vsel %vm1355, %v1202, 0
        %1408 = vmatprep.subr.bf16.mxu0 0
        %1409 = vmatpush1.bf16.xpose.msra.mxu0 0
        %1410 = vmatprep.subr.bf16.mxu0 0
        %1411 = vmatpush1.bf16.xpose.msra.mxu0 0
        %1412 = vmatprep.subr.bf16.mxu0 0
        %1413 = vmatpush1.bf16.xpose.msra.mxu0 0
        %1414 = vmatprep.subr.bf16.mxu0 0
        %1415 = vmatpush1.bf16.xpose.msra.mxu0 0
        %1416 = vmatprep.subr.bf16.mxu0 0
        %1417 = vmatpush1.bf16.xpose.msra.mxu0 0
        %1418 = vmatprep.subr.bf16.mxu0 0
        %1419 = vmatpush1.bf16.xpose.msra.mxu0 0
        %1420 = vmatprep.subr.bf16.mxu0 0
        %1421 = vmatpush1.bf16.xpose.msra.mxu0 0
        %1422 = vmatprep.subr.bf16.mxu0 0
        %1423 = vmatpush1.bf16.xpose.msra.mxu0 %v1406
        %1424 = vmatprep.subr.bf16.mxu0 0
        %1425 = vmatpush2.bf16.xpose.msra.mxu0 0
        %1426 = vmatprep.subr.bf16.mxu0 0
        %1427 = vmatpush2.bf16.xpose.msra.mxu0 0
        %1428 = vmatprep.subr.bf16.mxu0 0
        %1429 = vmatpush2.bf16.xpose.msra.mxu0 0
        %1430 = vmatprep.subr.bf16.mxu0 0
        %1431 = vmatpush2.bf16.xpose.msra.mxu0 0
        %1432 = vmatprep.subr.bf16.mxu0 0
        %1433 = vmatpush2.bf16.xpose.msra.mxu0 0
        %1434 = vmatprep.subr.bf16.mxu0 0
        %1435 = vmatpush2.bf16.xpose.msra.mxu0 0
        %1436 = vmatprep.subr.bf16.mxu0 0
        %1437 = vmatpush2.bf16.xpose.msra.mxu0 0
        %1438 = vmatprep.subr.bf16.mxu0 0
        %1439 = vmatpush2.bf16.xpose.msra.mxu0 0
        %1440 = vmatprep.mubr.bf16.mxu0 0
        %1441 = vmatmul.mubr.bf16.gmra.mxu0 %v1403
        %v1442 = vpop.f32.mrf.mxu0
        %v1443 = vadd.f32 0.0, %v1442
        %v1444 = vpop.f32.mrf.mxu0
        %v1445 = vpop.f32.mrf.mxu0
        %v1446 = vpop.f32.mrf.mxu0
        %1447 = vdwg.mxu0
        %v1449 = vsel %vm1355, %v1053, 0
        %v1452 = vsel %vm1355, %v1203, 0
        %1454 = vmatprep.subr.bf16.mxu0 0
        %1455 = vmatpush1.bf16.xpose.msra.mxu0 0
        %1456 = vmatprep.subr.bf16.mxu0 0
        %1457 = vmatpush1.bf16.xpose.msra.mxu0 0
        %1458 = vmatprep.subr.bf16.mxu0 0
        %1459 = vmatpush1.bf16.xpose.msra.mxu0 0
        %1460 = vmatprep.subr.bf16.mxu0 0
        %1461 = vmatpush1.bf16.xpose.msra.mxu0 0
        %1462 = vmatprep.subr.bf16.mxu0 0
        %1463 = vmatpush1.bf16.xpose.msra.mxu0 0
        %1464 = vmatprep.subr.bf16.mxu0 0
        %1465 = vmatpush1.bf16.xpose.msra.mxu0 0
        %1466 = vmatprep.subr.bf16.mxu0 0
        %1467 = vmatpush1.bf16.xpose.msra.mxu0 0
        %1468 = vmatprep.subr.bf16.mxu0 0
        %1469 = vmatpush1.bf16.xpose.msra.mxu0 %v1452
        %1470 = vmatprep.subr.bf16.mxu0 0
        %1471 = vmatpush2.bf16.xpose.msra.mxu0 0
        %1472 = vmatprep.subr.bf16.mxu0 0
        %1473 = vmatpush2.bf16.xpose.msra.mxu0 0
        %1474 = vmatprep.subr.bf16.mxu0 0
        %1475 = vmatpush2.bf16.xpose.msra.mxu0 0
        %1476 = vmatprep.subr.bf16.mxu0 0
        %1477 = vmatpush2.bf16.xpose.msra.mxu0 0
        %1478 = vmatprep.subr.bf16.mxu0 0
        %1479 = vmatpush2.bf16.xpose.msra.mxu0 0
        %1480 = vmatprep.subr.bf16.mxu0 0
        %1481 = vmatpush2.bf16.xpose.msra.mxu0 0
        %1482 = vmatprep.subr.bf16.mxu0 0
        %1483 = vmatpush2.bf16.xpose.msra.mxu0 0
        %1484 = vmatprep.subr.bf16.mxu0 0
        %1485 = vmatpush2.bf16.xpose.msra.mxu0 0
        %1486 = vmatprep.mubr.bf16.mxu0 0
        %1487 = vmatmul.mubr.bf16.gmra.mxu0 %v1449
        %v1488 = vpop.f32.mrf.mxu0
        %v1489 = vadd.f32 0.0, %v1488
        %v1490 = vpop.f32.mrf.mxu0
        %v1491 = vpop.f32.mrf.mxu0
        %v1492 = vpop.f32.mrf.mxu0
        %1493 = vdwg.mxu0
        %v1495 = vsel %vm1355, %v1054, 0
        %v1498 = vsel %vm1355, %v1204, 0
        %1500 = vmatprep.subr.bf16.mxu0 0
        %1501 = vmatpush1.bf16.xpose.msra.mxu0 0
        %1502 = vmatprep.subr.bf16.mxu0 0
        %1503 = vmatpush1.bf16.xpose.msra.mxu0 0
        %1504 = vmatprep.subr.bf16.mxu0 0
        %1505 = vmatpush1.bf16.xpose.msra.mxu0 0
        %1506 = vmatprep.subr.bf16.mxu0 0
        %1507 = vmatpush1.bf16.xpose.msra.mxu0 0
        %1508 = vmatprep.subr.bf16.mxu0 0
        %1509 = vmatpush1.bf16.xpose.msra.mxu0 0
        %1510 = vmatprep.subr.bf16.mxu0 0
        %1511 = vmatpush1.bf16.xpose.msra.mxu0 0
        %1512 = vmatprep.subr.bf16.mxu0 0
        %1513 = vmatpush1.bf16.xpose.msra.mxu0 0
        %1514 = vmatprep.subr.bf16.mxu0 0
        %1515 = vmatpush1.bf16.xpose.msra.mxu0 %v1498
        %1516 = vmatprep.subr.bf16.mxu0 0
        %1517 = vmatpush2.bf16.xpose.msra.mxu0 0
        %1518 = vmatprep.subr.bf16.mxu0 0
        %1519 = vmatpush2.bf16.xpose.msra.mxu0 0
        %1520 = vmatprep.subr.bf16.mxu0 0
        %1521 = vmatpush2.bf16.xpose.msra.mxu0 0
        %1522 = vmatprep.subr.bf16.mxu0 0
        %1523 = vmatpush2.bf16.xpose.msra.mxu0 0
        %1524 = vmatprep.subr.bf16.mxu0 0
        %1525 = vmatpush2.bf16.xpose.msra.mxu0 0
        %1526 = vmatprep.subr.bf16.mxu0 0
        %1527 = vmatpush2.bf16.xpose.msra.mxu0 0
        %1528 = vmatprep.subr.bf16.mxu0 0
        %1529 = vmatpush2.bf16.xpose.msra.mxu0 0
        %1530 = vmatprep.subr.bf16.mxu0 0
        %1531 = vmatpush2.bf16.xpose.msra.mxu0 0
        %1532 = vmatprep.mubr.bf16.mxu0 0
        %1533 = vmatmul.mubr.bf16.gmra.mxu0 %v1495
        %v1534 = vpop.f32.mrf.mxu0
        %v1535 = vadd.f32 0.0, %v1534
        %v1536 = vpop.f32.mrf.mxu0
        %v1537 = vpop.f32.mrf.mxu0
        %v1538 = vpop.f32.mrf.mxu0
        %1539 = vdwg.mxu0
        %v1540 = vmul.f32 %v1397, 0.35355338
        %v1541 = vmul.f32 %v1443, 0.35355338
        %v1542 = vmul.f32 %v1489, 0.35355338
        %v1543 = vmul.f32 %v1535, 0.35355338
        %v1545 = vlaneseq
        %v1546 = vshrl.u32 %v1545, 7
        %v1547 = vsub.s32 0, %v1546
        %v1548 = vrot.slane %v688, %v1547
        %v1550 = vadd.f32 %v1540, %v1548
        %v1551 = vadd.f32 %v1541, %v1548
        %v1552 = vadd.f32 %v1542, %v1548
        %v1553 = vadd.f32 %v1543, %v1548
        %v1554 = vsel %vm1355, %v1550, -inf
        %1555 = vmax.xlane.f32.xlu0 %v1554
        %v1556 = vpop.xlane.xlu0 %1555
        %v1557 = vsel %vm1355, %v1551, -inf
        %1558 = vmax.xlane.f32.xlu0 %v1557
        %v1559 = vpop.xlane.xlu0 %1558
        %v1560 = vsel %vm1355, %v1552, -inf
        %1561 = vmax.xlane.f32.xlu0 %v1560
        %v1562 = vpop.xlane.xlu0 %1561
        %v1563 = vsel %vm1355, %v1553, -inf
        %1564 = vmax.xlane.f32.xlu0 %v1563
        %v1565 = vpop.xlane.xlu0 %1564
        %v1566 = vsub.f32 %v1550, %v1556
        %v1567 = vsub.f32 %v1551, %v1559
        %v1568 = vsub.f32 %v1552, %v1562
        %v1569 = vsub.f32 %v1553, %v1565
        %v1570 = vmul.f32 %v1566, 1.442695
        %v1571 = vpow.pop %v1570
        %v1572 = vmul.f32 %v1567, 1.442695
        %v1573 = vpow.pop %v1572
        %v1574 = vmul.f32 %v1568, 1.442695
        %v1575 = vpow.pop %v1574
        %v1576 = vmul.f32 %v1569, 1.442695
        %v1577 = vpow.pop %v1576
        %v1578 = vsel %vm1355, %v1571, 0.0
        %1579 = vadd.xlane.f32.xlu0 %v1578
        %v1580 = vpop.xlane.xlu0 %1579
        %v1581 = vsel %vm1355, %v1573, 0.0
        %1582 = vadd.xlane.f32.xlu0 %v1581
        %v1583 = vpop.xlane.xlu0 %1582
        %v1584 = vsel %vm1355, %v1575, 0.0
        %1585 = vadd.xlane.f32.xlu0 %v1584
        %v1586 = vpop.xlane.xlu0 %1585
        %v1587 = vsel %vm1355, %v1577, 0.0
        %1588 = vadd.xlane.f32.xlu0 %v1587
        %v1589 = vpop.xlane.xlu0 %1588
        %v1590 = vrcp.pop %v1580
        %v1591 = vrcp.pop %v1583
        %v1592 = vrcp.pop %v1586
        %v1593 = vrcp.pop %v1589
        %v1594 = vmul.f32 %v1571, %v1590
        %v1595 = vmul.f32 %v1573, %v1591
        %v1596 = vmul.f32 %v1575, %v1592
        %v1597 = vmul.f32 %v1577, %v1593
        %v1598 = vpack.c.bf16 %v1594, %v1594
        %v1599 = vpack.c.bf16 %v1595, %v1595
        %v1600 = vpack.c.bf16 %v1596, %v1596
        %v1601 = vpack.c.bf16 %v1597, %v1597
        %v1603 = vsel %vm1355, %v1598, 0
        %vm1605 = vcmask 1043456
        %v1607 = vsel %vm1605, %v1351, 0
        %1609 = vmatprep.subr.bf16.mxu0 0
        %1610 = vmatpush1.bf16.msra.mxu0 0
        %1611 = vmatprep.subr.bf16.mxu0 0
        %1612 = vmatpush1.bf16.msra.mxu0 0
        %1613 = vmatprep.subr.bf16.mxu0 0
        %1614 = vmatpush1.bf16.msra.mxu0 0
        %1615 = vmatprep.subr.bf16.mxu0 0
        %1616 = vmatpush1.bf16.msra.mxu0 0
        %1617 = vmatprep.subr.bf16.mxu0 0
        %1618 = vmatpush1.bf16.msra.mxu0 0
        %1619 = vmatprep.subr.bf16.mxu0 0
        %1620 = vmatpush1.bf16.msra.mxu0 0
        %1621 = vmatprep.subr.bf16.mxu0 0
        %1622 = vmatpush1.bf16.msra.mxu0 0
        %1623 = vmatprep.subr.bf16.mxu0 0
        %1624 = vmatpush1.bf16.msra.mxu0 %v1607
        %1625 = vmatprep.subr.bf16.mxu0 0
        %1626 = vmatpush2.bf16.msra.mxu0 0
        %1627 = vmatprep.subr.bf16.mxu0 0
        %1628 = vmatpush2.bf16.msra.mxu0 0
        %1629 = vmatprep.subr.bf16.mxu0 0
        %1630 = vmatpush2.bf16.msra.mxu0 0
        %1631 = vmatprep.subr.bf16.mxu0 0
        %1632 = vmatpush2.bf16.msra.mxu0 0
        %1633 = vmatprep.subr.bf16.mxu0 0
        %1634 = vmatpush2.bf16.msra.mxu0 0
        %1635 = vmatprep.subr.bf16.mxu0 0
        %1636 = vmatpush2.bf16.msra.mxu0 0
        %1637 = vmatprep.subr.bf16.mxu0 0
        %1638 = vmatpush2.bf16.msra.mxu0 0
        %1639 = vmatprep.subr.bf16.mxu0 0
        %1640 = vmatpush2.bf16.msra.mxu0 0
        %1641 = vmatprep.mubr.bf16.mxu0 0
        %1642 = vmatmul.mubr.bf16.gmra.mxu0 %v1603
        %v1643 = vpop.f32.mrf.mxu0
        %v1644 = vadd.f32 0.0, %v1643
        %v1645 = vpop.f32.mrf.mxu0
        %v1646 = vpop.f32.mrf.mxu0
        %v1647 = vpop.f32.mrf.mxu0
        %1648 = vdwg.mxu0
        %v1650 = vsel %vm1355, %v1599, 0
        %v1653 = vsel %vm1605, %v1352, 0
        %1655 = vmatprep.subr.bf16.mxu0 0
        %1656 = vmatpush1.bf16.msra.mxu0 0
        %1657 = vmatprep.subr.bf16.mxu0 0
        %1658 = vmatpush1.bf16.msra.mxu0 0
        %1659 = vmatprep.subr.bf16.mxu0 0
        %1660 = vmatpush1.bf16.msra.mxu0 0
        %1661 = vmatprep.subr.bf16.mxu0 0
        %1662 = vmatpush1.bf16.msra.mxu0 0
        %1663 = vmatprep.subr.bf16.mxu0 0
        %1664 = vmatpush1.bf16.msra.mxu0 0
        %1665 = vmatprep.subr.bf16.mxu0 0
        %1666 = vmatpush1.bf16.msra.mxu0 0
        %1667 = vmatprep.subr.bf16.mxu0 0
        %1668 = vmatpush1.bf16.msra.mxu0 0
        %1669 = vmatprep.subr.bf16.mxu0 0
        %1670 = vmatpush1.bf16.msra.mxu0 %v1653
        %1671 = vmatprep.subr.bf16.mxu0 0
        %1672 = vmatpush2.bf16.msra.mxu0 0
        %1673 = vmatprep.subr.bf16.mxu0 0
        %1674 = vmatpush2.bf16.msra.mxu0 0
        %1675 = vmatprep.subr.bf16.mxu0 0
        %1676 = vmatpush2.bf16.msra.mxu0 0
        %1677 = vmatprep.subr.bf16.mxu0 0
        %1678 = vmatpush2.bf16.msra.mxu0 0
        %1679 = vmatprep.subr.bf16.mxu0 0
        %1680 = vmatpush2.bf16.msra.mxu0 0
        %1681 = vmatprep.subr.bf16.mxu0 0
        %1682 = vmatpush2.bf16.msra.mxu0 0
        %1683 = vmatprep.subr.bf16.mxu0 0
        %1684 = vmatpush2.bf16.msra.mxu0 0
        %1685 = vmatprep.subr.bf16.mxu0 0
        %1686 = vmatpush2.bf16.msra.mxu0 0
        %1687 = vmatprep.mubr.bf16.mxu0 0
        %1688 = vmatmul.mubr.bf16.gmra.mxu0 %v1650
        %v1689 = vpop.f32.mrf.mxu0
        %v1690 = vadd.f32 0.0, %v1689
        %v1691 = vpop.f32.mrf.mxu0
        %v1692 = vpop.f32.mrf.mxu0
        %v1693 = vpop.f32.mrf.mxu0
        %1694 = vdwg.mxu0
        %v1696 = vsel %vm1355, %v1600, 0
        %v1699 = vsel %vm1605, %v1353, 0
        %1701 = vmatprep.subr.bf16.mxu0 0
        %1702 = vmatpush1.bf16.msra.mxu0 0
        %1703 = vmatprep.subr.bf16.mxu0 0
        %1704 = vmatpush1.bf16.msra.mxu0 0
        %1705 = vmatprep.subr.bf16.mxu0 0
        %1706 = vmatpush1.bf16.msra.mxu0 0
        %1707 = vmatprep.subr.bf16.mxu0 0
        %1708 = vmatpush1.bf16.msra.mxu0 0
        %1709 = vmatprep.subr.bf16.mxu0 0
        %1710 = vmatpush1.bf16.msra.mxu0 0
        %1711 = vmatprep.subr.bf16.mxu0 0
        %1712 = vmatpush1.bf16.msra.mxu0 0
        %1713 = vmatprep.subr.bf16.mxu0 0
        %1714 = vmatpush1.bf16.msra.mxu0 0
        %1715 = vmatprep.subr.bf16.mxu0 0
        %1716 = vmatpush1.bf16.msra.mxu0 %v1699
        %1717 = vmatprep.subr.bf16.mxu0 0
        %1718 = vmatpush2.bf16.msra.mxu0 0
        %1719 = vmatprep.subr.bf16.mxu0 0
        %1720 = vmatpush2.bf16.msra.mxu0 0
        %1721 = vmatprep.subr.bf16.mxu0 0
        %1722 = vmatpush2.bf16.msra.mxu0 0
        %1723 = vmatprep.subr.bf16.mxu0 0
        %1724 = vmatpush2.bf16.msra.mxu0 0
        %1725 = vmatprep.subr.bf16.mxu0 0
        %1726 = vmatpush2.bf16.msra.mxu0 0
        %1727 = vmatprep.subr.bf16.mxu0 0
        %1728 = vmatpush2.bf16.msra.mxu0 0
        %1729 = vmatprep.subr.bf16.mxu0 0
        %1730 = vmatpush2.bf16.msra.mxu0 0
        %1731 = vmatprep.subr.bf16.mxu0 0
        %1732 = vmatpush2.bf16.msra.mxu0 0
        %1733 = vmatprep.mubr.bf16.mxu0 0
        %1734 = vmatmul.mubr.bf16.gmra.mxu0 %v1696
        %v1735 = vpop.f32.mrf.mxu0
        %v1736 = vadd.f32 0.0, %v1735
        %v1737 = vpop.f32.mrf.mxu0
        %v1738 = vpop.f32.mrf.mxu0
        %v1739 = vpop.f32.mrf.mxu0
        %1740 = vdwg.mxu0
        %v1742 = vsel %vm1355, %v1601, 0
        %v1745 = vsel %vm1605, %v1354, 0
        %1747 = vmatprep.subr.bf16.mxu0 0
        %1748 = vmatpush1.bf16.msra.mxu0 0
        %1749 = vmatprep.subr.bf16.mxu0 0
        %1750 = vmatpush1.bf16.msra.mxu0 0
        %1751 = vmatprep.subr.bf16.mxu0 0
        %1752 = vmatpush1.bf16.msra.mxu0 0
        %1753 = vmatprep.subr.bf16.mxu0 0
        %1754 = vmatpush1.bf16.msra.mxu0 0
        %1755 = vmatprep.subr.bf16.mxu0 0
        %1756 = vmatpush1.bf16.msra.mxu0 0
        %1757 = vmatprep.subr.bf16.mxu0 0
        %1758 = vmatpush1.bf16.msra.mxu0 0
        %1759 = vmatprep.subr.bf16.mxu0 0
        %1760 = vmatpush1.bf16.msra.mxu0 0
        %1761 = vmatprep.subr.bf16.mxu0 0
        %1762 = vmatpush1.bf16.msra.mxu0 %v1745
        %1763 = vmatprep.subr.bf16.mxu0 0
        %1764 = vmatpush2.bf16.msra.mxu0 0
        %1765 = vmatprep.subr.bf16.mxu0 0
        %1766 = vmatpush2.bf16.msra.mxu0 0
        %1767 = vmatprep.subr.bf16.mxu0 0
        %1768 = vmatpush2.bf16.msra.mxu0 0
        %1769 = vmatprep.subr.bf16.mxu0 0
        %1770 = vmatpush2.bf16.msra.mxu0 0
        %1771 = vmatprep.subr.bf16.mxu0 0
        %1772 = vmatpush2.bf16.msra.mxu0 0
        %1773 = vmatprep.subr.bf16.mxu0 0
        %1774 = vmatpush2.bf16.msra.mxu0 0
        %1775 = vmatprep.subr.bf16.mxu0 0
        %1776 = vmatpush2.bf16.msra.mxu0 0
        %1777 = vmatprep.subr.bf16.mxu0 0
        %1778 = vmatpush2.bf16.msra.mxu0 0
        %1779 = vmatprep.mubr.bf16.mxu0 0
        %1780 = vmatmul.mubr.bf16.gmra.mxu0 %v1742
        %v1781 = vpop.f32.mrf.mxu0
        %v1782 = vadd.f32 0.0, %v1781
        %v1783 = vpop.f32.mrf.mxu0
        %v1784 = vpop.f32.mrf.mxu0
        %v1785 = vpop.f32.mrf.mxu0
        %1786 = vdwg.mxu0
        %v1787 = vcombine.low %v1644, %v1736
        %v1788 = vcombine.high %v1644, %v1736
        %v1790 = vunpack.c.l.s4 1983009808
        %v1791 = vunpack.c.0.s8 %v1790
        %v1792 = vlaneseq
        %v1793 = vshrl.u32 %v1792, 7
        %v1794 = vsub.s32 %v1791, %v1793
        %v1795 = vrot.slane %v1787, %v1794
        %v1797 = vunpack.c.l.s4 1983009808
        %v1798 = vunpack.c.0.s8 %v1797
        %v1799 = vlaneseq
        %v1800 = vshrl.u32 %v1799, 7
        %v1801 = vsub.s32 %v1798, %v1800
        %v1802 = vrot.slane %v1788, %v1801
        %v1803 = vcombine.low %v1690, %v1782
        %v1804 = vcombine.high %v1690, %v1782
        %v1806 = vunpack.c.l.s4 1983009808
        %v1807 = vunpack.c.0.s8 %v1806
        %v1808 = vlaneseq
        %v1809 = vshrl.u32 %v1808, 7
        %v1810 = vsub.s32 %v1807, %v1809
        %v1811 = vrot.slane %v1803, %v1810
        %v1813 = vunpack.c.l.s4 1983009808
        %v1814 = vunpack.c.0.s8 %v1813
        %v1815 = vlaneseq
        %v1816 = vshrl.u32 %v1815, 7
        %v1817 = vsub.s32 %v1814, %v1816
        %v1818 = vrot.slane %v1804, %v1817
        %v1819 = vcombine.low %v1795, %v1811
        %v1820 = vcombine.high %v1795, %v1811
        %v1822 = vunpack.c.l.s4 1934713408
        %v1823 = vunpack.c.0.s8 %v1822
        %v1824 = vlaneseq
        %v1825 = vshrl.u32 %v1824, 7
        %v1826 = vsub.s32 %v1823, %v1825
        %v1827 = vrot.slane %v1819, %v1826
        %v1829 = vunpack.c.l.s4 1934713408
        %v1830 = vunpack.c.0.s8 %v1829
        %v1831 = vlaneseq
        %v1832 = vshrl.u32 %v1831, 7
        %v1833 = vsub.s32 %v1830, %v1832
        %v1834 = vrot.slane %v1820, %v1833
        %v1835 = vcombine.low %v1802, %v1818
        %v1836 = vcombine.high %v1802, %v1818
        %v1838 = vunpack.c.l.s4 1934713408
        %v1839 = vunpack.c.0.s8 %v1838
        %v1840 = vlaneseq
        %v1841 = vshrl.u32 %v1840, 7
        %v1842 = vsub.s32 %v1839, %v1841
        %v1843 = vrot.slane %v1835, %v1842
        %v1845 = vunpack.c.l.s4 1934713408
        %v1846 = vunpack.c.0.s8 %v1845
        %v1847 = vlaneseq
        %v1848 = vshrl.u32 %v1847, 7
        %v1849 = vsub.s32 %v1846, %v1848
        %v1850 = vrot.slane %v1836, %v1849
        %v1851 = vcombine.high %v1827, 0.0
        %v1852 = vcombine.high %v1834, 0.0
        %v1853 = vcombine.high %v1843, 0.0
        %v1854 = vcombine.high %v1850, 0.0
        %v1855 = vcombine.low %v1827, %v1834
        %v1857 = vunpack.c.l.s4 1983009808
        %v1858 = vunpack.c.0.s8 %v1857
        %v1859 = vlaneseq
        %v1860 = vshrl.u32 %v1859, 7
        %v1861 = vsub.s32 %v1858, %v1860
        %v1862 = vrot.slane %v1855, %v1861
        %v1863 = vcombine.low %v1851, %v1852
        %v1865 = vunpack.c.l.s4 1983009808
        %v1866 = vunpack.c.0.s8 %v1865
        %v1867 = vlaneseq
        %v1868 = vshrl.u32 %v1867, 7
        %v1869 = vsub.s32 %v1866, %v1868
        %v1870 = vrot.slane %v1863, %v1869
        %v1871 = vcombine.low %v1843, %v1850
        %v1873 = vunpack.c.l.s4 1983009808
        %v1874 = vunpack.c.0.s8 %v1873
        %v1875 = vlaneseq
        %v1876 = vshrl.u32 %v1875, 7
        %v1877 = vsub.s32 %v1874, %v1876
        %v1878 = vrot.slane %v1871, %v1877
        %v1879 = vcombine.low %v1853, %v1854
        %v1881 = vunpack.c.l.s4 1983009808
        %v1882 = vunpack.c.0.s8 %v1881
        %v1883 = vlaneseq
        %v1884 = vshrl.u32 %v1883, 7
        %v1885 = vsub.s32 %v1882, %v1884
        %v1886 = vrot.slane %v1879, %v1885
        %v1887 = vcombine.low %v1862, %v1870
        %v1888 = vcombine.high %v1862, %v1870
        %v1890 = vunpack.c.l.s4 1934713408
        %v1891 = vunpack.c.0.s8 %v1890
        %v1892 = vlaneseq
        %v1893 = vshrl.u32 %v1892, 7
        %v1894 = vsub.s32 %v1891, %v1893
        %v1895 = vrot.slane %v1887, %v1894
        %v1897 = vunpack.c.l.s4 1934713408
        %v1898 = vunpack.c.0.s8 %v1897
        %v1899 = vlaneseq
        %v1900 = vshrl.u32 %v1899, 7
        %v1901 = vsub.s32 %v1898, %v1900
        %v1902 = vrot.slane %v1888, %v1901
        %v1903 = vcombine.low %v1878, %v1886
        %v1904 = vcombine.high %v1878, %v1886
        %v1906 = vunpack.c.l.s4 1934713408
        %v1907 = vunpack.c.0.s8 %v1906
        %v1908 = vlaneseq
        %v1909 = vshrl.u32 %v1908, 7
        %v1910 = vsub.s32 %v1907, %v1909
        %v1911 = vrot.slane %v1903, %v1910
        %v1913 = vunpack.c.l.s4 1934713408
        %v1914 = vunpack.c.0.s8 %v1913
        %v1915 = vlaneseq
        %v1916 = vshrl.u32 %v1915, 7
        %v1917 = vsub.s32 %v1914, %v1916
        %v1918 = vrot.slane %v1904, %v1917
        %v1919 = vcombine.low %v1895, %v1911
        %v1920 = vcombine.high %v1895, %v1911
        %v1921 = vcombine.low %v1902, %v1918
        %v1922 = vcombine.high %v1902, %v1918
        %1924 = vrot.lane.b32.xlu0 %v1920, 8
        %v1925 = vpop.permute.xlu0 %1924
        %1928 = vrot.lane.b32.xlu0 %v1921, 16
        %v1929 = vpop.permute.xlu0 %1928
        %1932 = vrot.lane.b32.xlu0 %v1922, 24
        %v1933 = vpop.permute.xlu0 %1932
        %v1935 = vsel %vm1355, %v1919, %v1925
        %vm1936 = vcmask 130048
        %v1937 = vsel %vm1936, %v1935, %v1929
        %vm1938 = vcmask 195584
        %v1939 = vsel %vm1938, %v1937, %v1933
        %v1940 = vpack.c.bf16 %v1939, %v1939
        %v1942 = vlaneseq
        %v1943 = vshrl.u32 %v1942, 7
        %v1944 = vsub.s32 0, %v1943
        %v1945 = vrot.slane %v708, %v1944
        %v1951 = vunpack.c.l.b16 %v704
        %v1952 = vunpack.c.l.b16 %v705
        %v1953 = vunpack.c.l.b16 %v706
        %v1954 = vunpack.c.l.b16 %v707
        %v1955 = vpack.c.b16 %v1952, %v1951
        %v1956 = vpack.c.b16 %v1954, %v1953
        %v1960 = vsel %vm745, %v1940, 0
        %1962 = vmatprep.subr.bf16.mxu0 0
        %1963 = vmatpush1.bf16.msra.mxu0 0
        %1964 = vmatprep.subr.bf16.mxu0 0
        %1965 = vmatpush1.bf16.msra.mxu0 0
        %1966 = vmatprep.subr.bf16.mxu0 0
        %1967 = vmatpush1.bf16.msra.mxu0 0
        %1968 = vmatprep.subr.bf16.mxu0 0
        %1969 = vmatpush1.bf16.msra.mxu0 0
        %1970 = vmatprep.subr.bf16.mxu0 0
        %1971 = vmatpush1.bf16.msra.mxu0 0
        %1972 = vmatprep.subr.bf16.mxu0 0
        %1973 = vmatpush1.bf16.msra.mxu0 0
        %1974 = vmatprep.subr.bf16.mxu0 0
        %1975 = vmatpush1.bf16.msra.mxu0 %v1956
        %1976 = vmatprep.subr.bf16.mxu0 0
        %1977 = vmatpush1.bf16.msra.mxu0 %v1955
        %1978 = vmatprep.subr.bf16.mxu0 0
        %1979 = vmatpush2.bf16.msra.mxu0 0
        %1980 = vmatprep.subr.bf16.mxu0 0
        %1981 = vmatpush2.bf16.msra.mxu0 0
        %1982 = vmatprep.subr.bf16.mxu0 0
        %1983 = vmatpush2.bf16.msra.mxu0 0
        %1984 = vmatprep.subr.bf16.mxu0 0
        %1985 = vmatpush2.bf16.msra.mxu0 0
        %1986 = vmatprep.subr.bf16.mxu0 0
        %1987 = vmatpush2.bf16.msra.mxu0 0
        %1988 = vmatprep.subr.bf16.mxu0 0
        %1989 = vmatpush2.bf16.msra.mxu0 0
        %1990 = vmatprep.subr.bf16.mxu0 0
        %1991 = vmatpush2.bf16.msra.mxu0 0
        %1992 = vmatprep.subr.bf16.mxu0 0
        %1993 = vmatpush2.bf16.msra.mxu0 0
        %1994 = vmatprep.mubr.bf16.mxu0 0
        %1995 = vmatmul.mubr.bf16.gmra.mxu0 %v1960
        %v1996 = vpop.f32.mrf.mxu0
        %v1997 = vadd.f32 %v1945, %v1996
        %v1998 = vpop.f32.mrf.mxu0
        %v1999 = vpop.f32.mrf.mxu0
        %v2000 = vpop.f32.mrf.mxu0
        %2001 = vdwg.mxu0
        %v2002 = vadd.f32 %v685, %v1997
        %v2003 = vsel %vm745, %v2002, 0.0
        %2004 = vadd.xlane.f32.xlu0 %v2003
        %v2005 = vpop.xlane.xlu0 %2004
        %v2006 = vrcp.pop 32.0
        %v2007 = vmul.f32 %v2005, %v2006
        %v2008 = vsub.f32 %v2002, %v2007
        %v2009 = vmul.f32 %v2008, %v2008
        %v2010 = vsel %vm745, %v2009, 0.0
        %2011 = vadd.xlane.f32.xlu0 %v2010
        %v2012 = vpop.xlane.xlu0 %2011
        %v2013 = vmul.f32 %v2012, %v2006
        %v2014 = vadd.f32 %v2013, 1e-06
        %v2015 = vrsqrt.pop %v2014
        %v2016 = vmul.f32 %v2008, %v2015
        %v2018 = vlaneseq
        %v2019 = vshrl.u32 %v2018, 7
        %v2020 = vsub.s32 0, %v2019
        %v2021 = vrot.slane %v709, %v2020
        %v2023 = vmul.f32 %v2016, %v2021
        %v2025 = vlaneseq
        %v2026 = vshrl.u32 %v2025, 7
        %v2027 = vsub.s32 0, %v2026
        %v2028 = vrot.slane %v710, %v2027
        %v2030 = vadd.f32 %v2023, %v2028
        %v2031 = vpack.c.bf16 %v2030, %v2030
        %v2033 = vlaneseq
        %v2034 = vshrl.u32 %v2033, 7
        %v2035 = vsub.s32 0, %v2034
        %v2036 = vrot.slane %v715, %v2035
        %v2042 = vunpack.c.l.b16 %v711
        %v2043 = vunpack.c.l.b16 %v712
        %v2044 = vunpack.c.l.b16 %v713
        %v2045 = vunpack.c.l.b16 %v714
        %v2046 = vpack.c.b16 %v2043, %v2042
        %v2047 = vpack.c.b16 %v2045, %v2044
        %v2051 = vsel %vm745, %v2031, 0
        %2053 = vmatprep.subr.bf16.mxu0 0
        %2054 = vmatpush1.bf16.msra.mxu0 0
        %2055 = vmatprep.subr.bf16.mxu0 0
        %2056 = vmatpush1.bf16.msra.mxu0 0
        %2057 = vmatprep.subr.bf16.mxu0 0
        %2058 = vmatpush1.bf16.msra.mxu0 0
        %2059 = vmatprep.subr.bf16.mxu0 0
        %2060 = vmatpush1.bf16.msra.mxu0 0
        %2061 = vmatprep.subr.bf16.mxu0 0
        %2062 = vmatpush1.bf16.msra.mxu0 0
        %2063 = vmatprep.subr.bf16.mxu0 0
        %2064 = vmatpush1.bf16.msra.mxu0 0
        %2065 = vmatprep.subr.bf16.mxu0 0
        %2066 = vmatpush1.bf16.msra.mxu0 %v2047
        %2067 = vmatprep.subr.bf16.mxu0 0
        %2068 = vmatpush1.bf16.msra.mxu0 %v2046
        %2069 = vmatprep.subr.bf16.mxu0 0
        %2070 = vmatpush2.bf16.msra.mxu0 0
        %2071 = vmatprep.subr.bf16.mxu0 0
        %2072 = vmatpush2.bf16.msra.mxu0 0
        %2073 = vmatprep.subr.bf16.mxu0 0
        %2074 = vmatpush2.bf16.msra.mxu0 0
        %2075 = vmatprep.subr.bf16.mxu0 0
        %2076 = vmatpush2.bf16.msra.mxu0 0
        %2077 = vmatprep.subr.bf16.mxu0 0
        %2078 = vmatpush2.bf16.msra.mxu0 0
        %2079 = vmatprep.subr.bf16.mxu0 0
        %2080 = vmatpush2.bf16.msra.mxu0 0
        %2081 = vmatprep.subr.bf16.mxu0 0
        %2082 = vmatpush2.bf16.msra.mxu0 0
        %2083 = vmatprep.subr.bf16.mxu0 0
        %2084 = vmatpush2.bf16.msra.mxu0 0
        %2085 = vmatprep.mubr.bf16.mxu0 0
        %2086 = vmatmul.mubr.bf16.gmra.mxu0 %v2051
        %v2087 = vpop.f32.mrf.mxu0
        %v2088 = vadd.f32 %v2036, %v2087
        %v2089 = vpop.f32.mrf.mxu0
        %v2090 = vpop.f32.mrf.mxu0
        %v2091 = vpop.f32.mrf.mxu0
        %2092 = vdwg.mxu0
        %v2093 = vmax.f32 %v2088, 0.0
        %v2094 = vpack.c.bf16 %v2093, %v2093
        %v2096 = vlaneseq
        %v2097 = vshrl.u32 %v2096, 7
        %v2098 = vsub.s32 0, %v2097
        %v2099 = vrot.slane %v724, %v2098
        %v2109 = vunpack.c.l.b16 %v716
        %v2110 = vunpack.c.l.b16 %v717
        %v2111 = vunpack.c.l.b16 %v718
        %v2112 = vunpack.c.l.b16 %v719
        %v2113 = vunpack.c.l.b16 %v720
        %v2114 = vunpack.c.l.b16 %v721
        %v2115 = vunpack.c.l.b16 %v722
        %v2116 = vunpack.c.l.b16 %v723
        %v2117 = vpack.c.b16 %v2110, %v2109
        %v2118 = vpack.c.b16 %v2112, %v2111
        %v2119 = vpack.c.b16 %v2114, %v2113
        %v2120 = vpack.c.b16 %v2116, %v2115
        %vm2125 = vcmask 523264
        %v2127 = vsel %vm2125, %v2094, 0
        %2129 = vmatprep.subr.bf16.mxu0 0
        %2130 = vmatpush1.bf16.msra.mxu0 0
        %2131 = vmatprep.subr.bf16.mxu0 0
        %2132 = vmatpush1.bf16.msra.mxu0 0
        %2133 = vmatprep.subr.bf16.mxu0 0
        %2134 = vmatpush1.bf16.msra.mxu0 0
        %2135 = vmatprep.subr.bf16.mxu0 0
        %2136 = vmatpush1.bf16.msra.mxu0 0
        %2137 = vmatprep.subr.bf16.mxu0 0
        %2138 = vmatpush1.bf16.msra.mxu0 %v2120
        %2139 = vmatprep.subr.bf16.mxu0 0
        %2140 = vmatpush1.bf16.msra.mxu0 %v2119
        %2141 = vmatprep.subr.bf16.mxu0 0
        %2142 = vmatpush1.bf16.msra.mxu0 %v2118
        %2143 = vmatprep.subr.bf16.mxu0 0
        %2144 = vmatpush1.bf16.msra.mxu0 %v2117
        %2145 = vmatprep.subr.bf16.mxu0 0
        %2146 = vmatpush2.bf16.msra.mxu0 0
        %2147 = vmatprep.subr.bf16.mxu0 0
        %2148 = vmatpush2.bf16.msra.mxu0 0
        %2149 = vmatprep.subr.bf16.mxu0 0
        %2150 = vmatpush2.bf16.msra.mxu0 0
        %2151 = vmatprep.subr.bf16.mxu0 0
        %2152 = vmatpush2.bf16.msra.mxu0 0
        %2153 = vmatprep.subr.bf16.mxu0 0
        %2154 = vmatpush2.bf16.msra.mxu0 0
        %2155 = vmatprep.subr.bf16.mxu0 0
        %2156 = vmatpush2.bf16.msra.mxu0 0
        %2157 = vmatprep.subr.bf16.mxu0 0
        %2158 = vmatpush2.bf16.msra.mxu0 0
        %2159 = vmatprep.subr.bf16.mxu0 0
        %2160 = vmatpush2.bf16.msra.mxu0 0
        %2161 = vmatprep.mubr.bf16.mxu0 0
        %2162 = vmatmul.mubr.bf16.gmra.mxu0 %v2127
        %v2163 = vpop.f32.mrf.mxu0
        %v2164 = vadd.f32 %v2099, %v2163
        %v2165 = vpop.f32.mrf.mxu0
        %v2166 = vpop.f32.mrf.mxu0
        %v2167 = vpop.f32.mrf.mxu0
        %2168 = vdwg.mxu0
        %v2169 = vadd.f32 %v2030, %v2164
        %v2170 = vsel %vm745, %v2169, 0.0
        %2171 = vadd.xlane.f32.xlu0 %v2170
        %v2172 = vpop.xlane.xlu0 %2171
        %v2173 = vmul.f32 %v2172, %v2006
        %v2174 = vsub.f32 %v2169, %v2173
        %v2175 = vmul.f32 %v2174, %v2174
        %v2176 = vsel %vm745, %v2175, 0.0
        %2177 = vadd.xlane.f32.xlu0 %v2176
        %v2178 = vpop.xlane.xlu0 %2177
        %v2179 = vmul.f32 %v2178, %v2006
        %v2180 = vadd.f32 %v2179, 1e-06
        %v2181 = vrsqrt.pop %v2180
        %v2182 = vmul.f32 %v2174, %v2181
        %v2184 = vlaneseq
        %v2185 = vshrl.u32 %v2184, 7
        %v2186 = vsub.s32 0, %v2185
        %v2187 = vrot.slane %v725, %v2186
        %v2189 = vmul.f32 %v2182, %v2187
        %v2191 = vlaneseq
        %v2192 = vshrl.u32 %v2191, 7
        %v2193 = vsub.s32 0, %v2192
        %v2194 = vrot.slane %v726, %v2193
        %v2196 = vadd.f32 %v2189, %v2194
        %2197 = vst.msk [vmem:[%s679] sm:$0xff] %vm745, %v2196
        %s2198 = sand.u32 %s434, 1
        %s2199 = scalar_lea.sflag [#allocation4], %s2198
        %s2200 = sand.u32 %s434, 1
        %s2201 = smul.addr %s2200, 8
        %s2202 = scalar_lea.vmem [#allocation14], %s2201
        // Predicated region
        $region121: #{tpu_custom_call.1} parent=91 // pred_check
          %p2203 = pneg %p444
        $region122: #{tpu_custom_call.1} parent=91 // pred_check_branch
          %2205 = sbr.rel (%p2203) target = $region124
        $region123: #{tpu_custom_call.1} parent=91 // pred_region
          %s2207 = ssub.s32 128, 128
          %2208 = vsyncadd %s2199, %s2207
          %s2209 = smul.addr %s38, 128
          %s2210 = scalar_lea.hbm %s18, %s2209
          %s2212 = sshll.u32 %s2202, 4
          %s2213 = int_to_ptr.vmem [resolvable:$true] %s2212
          %2215 = dma.vmem_to_hbm [thread:$0]  %s2213, 128, %s2210, %s2199
        $region124: #{tpu_custom_call.1} parent=91 // pred_fallthru
          _
      $region92: #{tpu_custom_call.1} parent=5 // pred_fallthru
        _
      %p2216 = scmp.le.s32.totalorder 2, %s33
      // Predicated region
      $region125: #{tpu_custom_call.1} parent=5 // pred_check
        %p2217 = pneg %p2216
      $region126: #{tpu_custom_call.1} parent=5 // pred_check_branch
        %2219 = sbr.rel (%p2217) target = $region128
      $region127: #{tpu_custom_call.1} parent=5 // pred_region
        %s2220 = ssub.s32 %s33, 2
        // Predicated region
        $region129: #{tpu_custom_call.1} parent=127 // pred_check
          %p2221 = pneg %p450
        $region130: #{tpu_custom_call.1} parent=127 // pred_check_branch
          %2223 = sbr.rel (%p2221) target = $region132
        $region131: #{tpu_custom_call.1} parent=127 // pred_region
          %s2224 = sand.u32 %s435, 1
          %s2225 = scalar_lea.sflag [#allocation4], %s2224
          %s2226 = sand.u32 %s435, 1
          %s2227 = smul.addr %s2226, 8
          %s2228 = scalar_lea.vmem [#allocation14], %s2227
          %2229 = dma.done %s2225, 128
        $region132: #{tpu_custom_call.1} parent=127 // pred_fallthru
          _
      $region128: #{tpu_custom_call.1} parent=5 // pred_fallthru
        _
    $region6: #{tpu_custom_call.1} parent=1 // loop_footer
      %s37 = sadd.s32 1, %s33
    $region7: #{tpu_custom_call.1} parent=1 // loop_footer_branch
      %32 = sbr.rel target = $region3
    $region8: #{tpu_custom_call.1} parent=1 // loop_exit
      _
    %2230 = vsyncpa [#allocation3], 1
    %s2231 = scalar_lea.sflag [#allocation3], 1
    %2232 = vsyncpa %s2231, 1
    %2233 = vsyncpa [#allocation6], 1
    %2234 = vsyncpa [#allocation9], 1
    %2235 = vsyncpa [#allocation12], 1
    %2236 = vsyncpa [#allocation4], 1
    %s2237 = scalar_lea.sflag [#allocation4], 1
    %2238 = vsyncpa %s2237, 1

// kernel: tpu_custom_call.1
$region0: #{tpu_custom_call.1}
  #allocation0 [shape = 'u32[]', space=smem, size = 0x4, offset = 0x4, fixed_abs, tag = 'smem constant byte address 0x4 - core index']
  #allocation1 [shape = 'u32[144,128]{1,0:T(1,128)}', space=vmem, size = 0x12000, scoped, tag = 'internal scratch']
  %s0 = inlined_call_operand.vmem [shape: f32[2,8,32], index: 0, kind: input, shape index: {}]
  %s1 = inlined_call_operand.hbm [shape: f32[2,1,8], index: 1, kind: input, shape index: {}]
  %s2 = inlined_call_operand.vmem [shape: bf16[32,32], index: 2, kind: input, shape index: {}]
  %s3 = inlined_call_operand.hbm [shape: f32[1,32], index: 3, kind: input, shape index: {}]
  %s4 = inlined_call_operand.vmem [shape: bf16[32,32], index: 4, kind: input, shape index: {}]
  %s5 = inlined_call_operand.hbm [shape: f32[1,32], index: 5, kind: input, shape index: {}]
  %s6 = inlined_call_operand.hbm [shape: bf16[32,32], index: 6, kind: input, shape index: {}]
  %s7 = inlined_call_operand.hbm [shape: f32[1,32], index: 7, kind: input, shape index: {}]
  %s8 = inlined_call_operand.hbm [shape: bf16[32,32], index: 8, kind: input, shape index: {}]
  %s9 = inlined_call_operand.hbm [shape: f32[1,32], index: 9, kind: input, shape index: {}]
  %s10 = inlined_call_operand.vmem [shape: f32[1,32], index: 10, kind: input, shape index: {}]
  %s11 = inlined_call_operand.vmem [shape: f32[1,32], index: 11, kind: input, shape index: {}]
  %s12 = inlined_call_operand.vmem [shape: bf16[32,64], index: 12, kind: input, shape index: {}]
  %s13 = inlined_call_operand.vmem [shape: f32[1,64], index: 13, kind: input, shape index: {}]
  %s14 = inlined_call_operand.vmem [shape: bf16[64,32], index: 14, kind: input, shape index: {}]
  %s15 = inlined_call_operand.vmem [shape: f32[1,32], index: 15, kind: input, shape index: {}]
  %s16 = inlined_call_operand.vmem [shape: f32[1,32], index: 16, kind: input, shape index: {}]
  %s17 = inlined_call_operand.vmem [shape: f32[1,32], index: 17, kind: input, shape index: {}]
  %s18 = inlined_call_operand.hbm [shape: f32[2,8,32], index: 18, kind: output, shape index: {}]
  %s19 = sld [smem:[#allocation0]]
  $region133: #{tpu_custom_call.1} parent=0
    _
  %s21 = ssub.s32 1, %s19
  %s22 = scalar_select 0, %s21, %s19
  $region1: #{tpu_custom_call.1} parent=0
    #allocation2 [shape = 'u8[1024]{0}', space=vmem, size = 0x400, scoped, tag = 'input window, operand 1']
    #allocation3 [shape = 's32[2]{0}', space=sflag, size = 0x8, scoped, tag = 'scoped memory for tpu_custom_call.1']
    #allocation4 [shape = 's32[2]{0}', space=sflag, size = 0x8, scoped, tag = 'scoped memory for tpu_custom_call.1']
    #allocation5 [shape = 'u8[512]{0}', space=vmem, size = 0x400, scoped, tag = 'input window, operand 3, single buffered']
    #allocation6 [shape = 's32[1]{0}', space=sflag, size = 0x4, scoped, tag = 'scoped memory for tpu_custom_call.1']
    #allocation7 [shape = 'u8[512]{0}', space=vmem, size = 0x400, scoped, tag = 'input window, operand 5, single buffered']
    #allocation8 [shape = 'u8[8192]{0}', space=vmem, size = 0x2000, scoped, tag = 'input window, operand 6, single buffered']
    #allocation9 [shape = 's32[1]{0}', space=sflag, size = 0x4, scoped, tag = 'scoped memory for tpu_custom_call.1']
    #allocation10 [shape = 'u8[512]{0}', space=vmem, size = 0x400, scoped, tag = 'input window, operand 7, single buffered']
    #allocation11 [shape = 'u8[8192]{0}', space=vmem, size = 0x2000, scoped, tag = 'input window, operand 8, single buffered']
    #allocation12 [shape = 's32[1]{0}', space=sflag, size = 0x4, scoped, tag = 'scoped memory for tpu_custom_call.1']
    #allocation13 [shape = 'u8[512]{0}', space=vmem, size = 0x400, scoped, tag = 'input window, operand 9, single buffered']
    #allocation14 [shape = 'u8[8192]{0}', space=vmem, size = 0x2000, scoped, tag = 'output window, operand 0']
    %23 = vsyncpa [#allocation3], 0
    %s24 = scalar_lea.sflag [#allocation3], 1
    %25 = vsyncpa %s24, 0
    %26 = vsyncpa [#allocation6], 0
    %27 = vsyncpa [#allocation9], 0
    %28 = vsyncpa [#allocation12], 0
    %29 = vsyncpa [#allocation4], 0
    %s30 = scalar_lea.sflag [#allocation4], 1
    %31 = vsyncpa %s30, 0
    loop: start=0, step=1, limit=4
    $region2: #{tpu_custom_call.1} parent=1 // loop_pre_header
      _
    $region3: #{tpu_custom_call.1} parent=1 // loop_header
      %s33 = sphi 0, %s37
      %p34 = scmp.ge.s32.totalorder %s33, 4
      %s43 = sphi 0, %s45
      %s46 = sphi 0, %s43
      %s47 = sphi 0, %s46
      %s63 = sphi 0, %s47
      %s69 = sphi 0, %s71
      %s72 = sphi 0, %s69
      %s73 = sphi 0, %s72
      %s89 = sphi 0, %s73
      %s93 = sphi 0, %s93
      %s95 = sphi 0, %s93
      %s96 = sphi 0, %s95
      %s110 = sphi 0, %s96
      %s114 = sphi 0, %s114
      %s116 = sphi 0, %s114
      %s117 = sphi 0, %s116
      %s131 = sphi 0, %s117
      %s135 = sphi 0, %s135
      %s137 = sphi 0, %s135
      %s138 = sphi 0, %s137
      %s152 = sphi 0, %s138
      %s156 = sphi 0, %s156
      %s158 = sphi 0, %s156
      %s159 = sphi 0, %s158
      %s173 = sphi 0, %s159
      %s177 = sphi 0, %s177
      %s179 = sphi 0, %s177
      %s180 = sphi 0, %s179
      %s194 = sphi 0, %s180
      %s198 = sphi 0, %s198
      %s200 = sphi 0, %s198
      %s201 = sphi 0, %s200
      %s215 = sphi 0, %s201
      %s219 = sphi 0, %s219
      %s221 = sphi 0, %s219
      %s222 = sphi 0, %s221
      %s236 = sphi 0, %s222
      %s240 = sphi 0, %s240
      %s242 = sphi 0, %s240
      %s243 = sphi 0, %s242
      %s257 = sphi 0, %s243
      %s261 = sphi 0, %s261
      %s263 = sphi 0, %s261
      %s264 = sphi 0, %s263
      %s278 = sphi 0, %s264
      %s282 = sphi 0, %s282
      %s284 = sphi 0, %s282
      %s285 = sphi 0, %s284
      %s299 = sphi 0, %s285
      %s303 = sphi 0, %s303
      %s305 = sphi 0, %s303
      %s306 = sphi 0, %s305
      %s320 = sphi 0, %s306
      %s324 = sphi 0, %s324
      %s326 = sphi 0, %s324
      %s327 = sphi 0, %s326
      %s341 = sphi 0, %s327
      %s345 = sphi 0, %s345
      %s347 = sphi 0, %s345
      %s348 = sphi 0, %s347
      %s362 = sphi 0, %s348
      %s366 = sphi 0, %s366
      %s368 = sphi 0, %s366
      %s369 = sphi 0, %s368
      %s383 = sphi 0, %s369
      %s387 = sphi 0, %s387
      %s389 = sphi 0, %s387
      %s390 = sphi 0, %s389
      %s404 = sphi 0, %s390
      %s408 = sphi 0, %s408
      %s410 = sphi 0, %s408
      %s411 = sphi 0, %s410
      %s425 = sphi 0, %s411
      %s431 = sphi 0, %s433
      %s434 = sphi 0, %s431
      %s435 = sphi 0, %s434
      %s451 = sphi 0, %s435
    $region4: #{tpu_custom_call.1} parent=1 // loop_header_branch
      %36 = sbr.rel (%p34) target = $region8
    $region5: #{tpu_custom_call.1} parent=1 // loop_body
      %s38 = ssub.s32 %s33, 1
      %s39 = ssub.s32 %s33, 2
      %s40 = sadd.s32 %s33, 1
      %s41 = ssub.s32 %s33, %s40
      %p42 = scmp.eq.s32.totalorder %s41, 0
      %s44 = sadd.s32 %s43, 1
      %s45 = scalar_select %p42, %s43, %s44
      %p48 = pneg %p42
      %p49 = scmp.eq.s32.totalorder %s33, 1
      %p50 = por %p48, %p49
      %p51 = scmp.ne.s32.totalorder %s43, %s46
      %p52 = scmp.eq.s32.totalorder %s33, 0
      %p53 = por %p51, %p52
      %p54 = scmp.ne.s32.totalorder %s43, %s46
      %p55 = scmp.eq.s32.totalorder %s38, 1
      %p56 = por %p54, %p55
      %p57 = scmp.ne.s32.totalorder %s46, %s47
      %p58 = scmp.eq.s32.totalorder %s38, 0
      %p59 = por %p57, %p58
      %p60 = scmp.ne.s32.totalorder %s46, %s47
      %p61 = scmp.eq.s32.totalorder %s39, 1
      %p62 = por %p60, %p61
      %p64 = scmp.ne.s32.totalorder %s47, %s63
      %p65 = scmp.eq.s32.totalorder %s39, 0
      %p66 = por %p64, %p65
      %s67 = ssub.s32 %s33, %s40
      %p68 = scmp.eq.s32.totalorder %s67, 0
      %s70 = sadd.s32 %s69, 1
      %s71 = scalar_select %p68, %s69, %s70
      %p74 = pneg %p68
      %p75 = scmp.eq.s32.totalorder %s33, 1
      %p76 = por %p74, %p75
      %p77 = scmp.ne.s32.totalorder %s69, %s72
      %p78 = scmp.eq.s32.totalorder %s33, 0
      %p79 = por %p77, %p78
      %p80 = scmp.ne.s32.totalorder %s69, %s72
      %p81 = scmp.eq.s32.totalorder %s38, 1
      %p82 = por %p80, %p81
      %p83 = scmp.ne.s32.totalorder %s72, %s73
      %p84 = scmp.eq.s32.totalorder %s38, 0
      %p85 = por %p83, %p84
      %p86 = scmp.ne.s32.totalorder %s72, %s73
      %p87 = scmp.eq.s32.totalorder %s39, 1
      %p88 = por %p86, %p87
      %p90 = scmp.ne.s32.totalorder %s73, %s89
      %p91 = scmp.eq.s32.totalorder %s39, 0
      %p92 = por %p90, %p91
      %s94 = sadd.s32 %s93, 1
      %p97 = scmp.eq.s32.totalorder %s33, 1
      %p98 = scmp.ne.s32.totalorder %s93, %s95
      %p99 = scmp.eq.s32.totalorder %s33, 0
      %p100 = por %p98, %p99
      %p101 = scmp.ne.s32.totalorder %s93, %s95
      %p102 = scmp.eq.s32.totalorder %s38, 1
      %p103 = por %p101, %p102
      %p104 = scmp.ne.s32.totalorder %s95, %s96
      %p105 = scmp.eq.s32.totalorder %s38, 0
      %p106 = por %p104, %p105
      %p107 = scmp.ne.s32.totalorder %s95, %s96
      %p108 = scmp.eq.s32.totalorder %s39, 1
      %p109 = por %p107, %p108
      %p111 = scmp.ne.s32.totalorder %s96, %s110
      %p112 = scmp.eq.s32.totalorder %s39, 0
      %p113 = por %p111, %p112
      %s115 = sadd.s32 %s114, 1
      %p118 = scmp.eq.s32.totalorder %s33, 1
      %p119 = scmp.ne.s32.totalorder %s114, %s116
      %p120 = scmp.eq.s32.totalorder %s33, 0
      %p121 = por %p119, %p120
      %p122 = scmp.ne.s32.totalorder %s114, %s116
      %p123 = scmp.eq.s32.totalorder %s38, 1
      %p124 = por %p122, %p123
      %p125 = scmp.ne.s32.totalorder %s116, %s117
      %p126 = scmp.eq.s32.totalorder %s38, 0
      %p127 = por %p125, %p126
      %p128 = scmp.ne.s32.totalorder %s116, %s117
      %p129 = scmp.eq.s32.totalorder %s39, 1
      %p130 = por %p128, %p129
      %p132 = scmp.ne.s32.totalorder %s117, %s131
      %p133 = scmp.eq.s32.totalorder %s39, 0
      %p134 = por %p132, %p133
      %s136 = sadd.s32 %s135, 1
      %p139 = scmp.eq.s32.totalorder %s33, 1
      %p140 = scmp.ne.s32.totalorder %s135, %s137
      %p141 = scmp.eq.s32.totalorder %s33, 0
      %p142 = por %p140, %p141
      %p143 = scmp.ne.s32.totalorder %s135, %s137
      %p144 = scmp.eq.s32.totalorder %s38, 1
      %p145 = por %p143, %p144
      %p146 = scmp.ne.s32.totalorder %s137, %s138
      %p147 = scmp.eq.s32.totalorder %s38, 0
      %p148 = por %p146, %p147
      %p149 = scmp.ne.s32.totalorder %s137, %s138
      %p150 = scmp.eq.s32.totalorder %s39, 1
      %p151 = por %p149, %p150
      %p153 = scmp.ne.s32.totalorder %s138, %s152
      %p154 = scmp.eq.s32.totalorder %s39, 0
      %p155 = por %p153, %p154
      %s157 = sadd.s32 %s156, 1
      %p160 = scmp.eq.s32.totalorder %s33, 1
      %p161 = scmp.ne.s32.totalorder %s156, %s158
      %p162 = scmp.eq.s32.totalorder %s33, 0
      %p163 = por %p161, %p162
      %p164 = scmp.ne.s32.totalorder %s156, %s158
      %p165 = scmp.eq.s32.totalorder %s38, 1
      %p166 = por %p164, %p165
      %p167 = scmp.ne.s32.totalorder %s158, %s159
      %p168 = scmp.eq.s32.totalorder %s38, 0
      %p169 = por %p167, %p168
      %p170 = scmp.ne.s32.totalorder %s158, %s159
      %p171 = scmp.eq.s32.totalorder %s39, 1
      %p172 = por %p170, %p171
      %p174 = scmp.ne.s32.totalorder %s159, %s173
      %p175 = scmp.eq.s32.totalorder %s39, 0
      %p176 = por %p174, %p175
      %s178 = sadd.s32 %s177, 1
      %p181 = scmp.eq.s32.totalorder %s33, 1
      %p182 = scmp.ne.s32.totalorder %s177, %s179
      %p183 = scmp.eq.s32.totalorder %s33, 0
      %p184 = por %p182, %p183
      %p185 = scmp.ne.s32.totalorder %s177, %s179
      %p186 = scmp.eq.s32.totalorder %s38, 1
      %p187 = por %p185, %p186
      %p188 = scmp.ne.s32.totalorder %s179, %s180
      %p189 = scmp.eq.s32.totalorder %s38, 0
      %p190 = por %p188, %p189
      %p191 = scmp.ne.s32.totalorder %s179, %s180
      %p192 = scmp.eq.s32.totalorder %s39, 1
      %p193 = por %p191, %p192
      %p195 = scmp.ne.s32.totalorder %s180, %s194
      %p196 = scmp.eq.s32.totalorder %s39, 0
      %p197 = por %p195, %p196
      %s199 = sadd.s32 %s198, 1
      %p202 = scmp.eq.s32.totalorder %s33, 1
      %p203 = scmp.ne.s32.totalorder %s198, %s200
      %p204 = scmp.eq.s32.totalorder %s33, 0
      %p205 = por %p203, %p204
      %p206 = scmp.ne.s32.totalorder %s198, %s200
      %p207 = scmp.eq.s32.totalorder %s38, 1
      %p208 = por %p206, %p207
      %p209 = scmp.ne.s32.totalorder %s200, %s201
      %p210 = scmp.eq.s32.totalorder %s38, 0
      %p211 = por %p209, %p210
      %p212 = scmp.ne.s32.totalorder %s200, %s201
      %p213 = scmp.eq.s32.totalorder %s39, 1
      %p214 = por %p212, %p213
      %p216 = scmp.ne.s32.totalorder %s201, %s215
      %p217 = scmp.eq.s32.totalorder %s39, 0
      %p218 = por %p216, %p217
      %s220 = sadd.s32 %s219, 1
      %p223 = scmp.eq.s32.totalorder %s33, 1
      %p224 = scmp.ne.s32.totalorder %s219, %s221
      %p225 = scmp.eq.s32.totalorder %s33, 0
      %p226 = por %p224, %p225
      %p227 = scmp.ne.s32.totalorder %s219, %s221
      %p228 = scmp.eq.s32.totalorder %s38, 1
      %p229 = por %p227, %p228
      %p230 = scmp.ne.s32.totalorder %s221, %s222
      %p231 = scmp.eq.s32.totalorder %s38, 0
      %p232 = por %p230, %p231
      %p233 = scmp.ne.s32.totalorder %s221, %s222
      %p234 = scmp.eq.s32.totalorder %s39, 1
      %p235 = por %p233, %p234
      %p237 = scmp.ne.s32.totalorder %s222, %s236
      %p238 = scmp.eq.s32.totalorder %s39, 0
      %p239 = por %p237, %p238
      %s241 = sadd.s32 %s240, 1
      %p244 = scmp.eq.s32.totalorder %s33, 1
      %p245 = scmp.ne.s32.totalorder %s240, %s242
      %p246 = scmp.eq.s32.totalorder %s33, 0
      %p247 = por %p245, %p246
      %p248 = scmp.ne.s32.totalorder %s240, %s242
      %p249 = scmp.eq.s32.totalorder %s38, 1
      %p250 = por %p248, %p249
      %p251 = scmp.ne.s32.totalorder %s242, %s243
      %p252 = scmp.eq.s32.totalorder %s38, 0
      %p253 = por %p251, %p252
      %p254 = scmp.ne.s32.totalorder %s242, %s243
      %p255 = scmp.eq.s32.totalorder %s39, 1
      %p256 = por %p254, %p255
      %p258 = scmp.ne.s32.totalorder %s243, %s257
      %p259 = scmp.eq.s32.totalorder %s39, 0
      %p260 = por %p258, %p259
      %s262 = sadd.s32 %s261, 1
      %p265 = scmp.eq.s32.totalorder %s33, 1
      %p266 = scmp.ne.s32.totalorder %s261, %s263
      %p267 = scmp.eq.s32.totalorder %s33, 0
      %p268 = por %p266, %p267
      %p269 = scmp.ne.s32.totalorder %s261, %s263
      %p270 = scmp.eq.s32.totalorder %s38, 1
      %p271 = por %p269, %p270
      %p272 = scmp.ne.s32.totalorder %s263, %s264
      %p273 = scmp.eq.s32.totalorder %s38, 0
      %p274 = por %p272, %p273
      %p275 = scmp.ne.s32.totalorder %s263, %s264
      %p276 = scmp.eq.s32.totalorder %s39, 1
      %p277 = por %p275, %p276
      %p279 = scmp.ne.s32.totalorder %s264, %s278
      %p280 = scmp.eq.s32.totalorder %s39, 0
      %p281 = por %p279, %p280
      %s283 = sadd.s32 %s282, 1
      %p286 = scmp.eq.s32.totalorder %s33, 1
      %p287 = scmp.ne.s32.totalorder %s282, %s284
      %p288 = scmp.eq.s32.totalorder %s33, 0
      %p289 = por %p287, %p288
      %p290 = scmp.ne.s32.totalorder %s282, %s284
      %p291 = scmp.eq.s32.totalorder %s38, 1
      %p292 = por %p290, %p291
      %p293 = scmp.ne.s32.totalorder %s284, %s285
      %p294 = scmp.eq.s32.totalorder %s38, 0
      %p295 = por %p293, %p294
      %p296 = scmp.ne.s32.totalorder %s284, %s285
      %p297 = scmp.eq.s32.totalorder %s39, 1
      %p298 = por %p296, %p297
      %p300 = scmp.ne.s32.totalorder %s285, %s299
      %p301 = scmp.eq.s32.totalorder %s39, 0
      %p302 = por %p300, %p301
      %s304 = sadd.s32 %s303, 1
      %p307 = scmp.eq.s32.totalorder %s33, 1
      %p308 = scmp.ne.s32.totalorder %s303, %s305
      %p309 = scmp.eq.s32.totalorder %s33, 0
      %p310 = por %p308, %p309
      %p311 = scmp.ne.s32.totalorder %s303, %s305
      %p312 = scmp.eq.s32.totalorder %s38, 1
      %p313 = por %p311, %p312
      %p314 = scmp.ne.s32.totalorder %s305, %s306
      %p315 = scmp.eq.s32.totalorder %s38, 0
      %p316 = por %p314, %p315
      %p317 = scmp.ne.s32.totalorder %s305, %s306
      %p318 = scmp.eq.s32.totalorder %s39, 1
      %p319 = por %p317, %p318
      %p321 = scmp.ne.s32.totalorder %s306, %s320
      %p322 = scmp.eq.s32.totalorder %s39, 0
      %p323 = por %p321, %p322
      %s325 = sadd.s32 %s324, 1
      %p328 = scmp.eq.s32.totalorder %s33, 1
      %p329 = scmp.ne.s32.totalorder %s324, %s326
      %p330 = scmp.eq.s32.totalorder %s33, 0
      %p331 = por %p329, %p330
      %p332 = scmp.ne.s32.totalorder %s324, %s326
      %p333 = scmp.eq.s32.totalorder %s38, 1
      %p334 = por %p332, %p333
      %p335 = scmp.ne.s32.totalorder %s326, %s327
      %p336 = scmp.eq.s32.totalorder %s38, 0
      %p337 = por %p335, %p336
      %p338 = scmp.ne.s32.totalorder %s326, %s327
      %p339 = scmp.eq.s32.totalorder %s39, 1
      %p340 = por %p338, %p339
      %p342 = scmp.ne.s32.totalorder %s327, %s341
      %p343 = scmp.eq.s32.totalorder %s39, 0
      %p344 = por %p342, %p343
      %s346 = sadd.s32 %s345, 1
      %p349 = scmp.eq.s32.totalorder %s33, 1
      %p350 = scmp.ne.s32.totalorder %s345, %s347
      %p351 = scmp.eq.s32.totalorder %s33, 0
      %p352 = por %p350, %p351
      %p353 = scmp.ne.s32.totalorder %s345, %s347
      %p354 = scmp.eq.s32.totalorder %s38, 1
      %p355 = por %p353, %p354
      %p356 = scmp.ne.s32.totalorder %s347, %s348
      %p357 = scmp.eq.s32.totalorder %s38, 0
      %p358 = por %p356, %p357
      %p359 = scmp.ne.s32.totalorder %s347, %s348
      %p360 = scmp.eq.s32.totalorder %s39, 1
      %p361 = por %p359, %p360
      %p363 = scmp.ne.s32.totalorder %s348, %s362
      %p364 = scmp.eq.s32.totalorder %s39, 0
      %p365 = por %p363, %p364
      %s367 = sadd.s32 %s366, 1
      %p370 = scmp.eq.s32.totalorder %s33, 1
      %p371 = scmp.ne.s32.totalorder %s366, %s368
      %p372 = scmp.eq.s32.totalorder %s33, 0
      %p373 = por %p371, %p372
      %p374 = scmp.ne.s32.totalorder %s366, %s368
      %p375 = scmp.eq.s32.totalorder %s38, 1
      %p376 = por %p374, %p375
      %p377 = scmp.ne.s32.totalorder %s368, %s369
      %p378 = scmp.eq.s32.totalorder %s38, 0
      %p379 = por %p377, %p378
      %p380 = scmp.ne.s32.totalorder %s368, %s369
      %p381 = scmp.eq.s32.totalorder %s39, 1
      %p382 = por %p380, %p381
      %p384 = scmp.ne.s32.totalorder %s369, %s383
      %p385 = scmp.eq.s32.totalorder %s39, 0
      %p386 = por %p384, %p385
      %s388 = sadd.s32 %s387, 1
      %p391 = scmp.eq.s32.totalorder %s33, 1
      %p392 = scmp.ne.s32.totalorder %s387, %s389
      %p393 = scmp.eq.s32.totalorder %s33, 0
      %p394 = por %p392, %p393
      %p395 = scmp.ne.s32.totalorder %s387, %s389
      %p396 = scmp.eq.s32.totalorder %s38, 1
      %p397 = por %p395, %p396
      %p398 = scmp.ne.s32.totalorder %s389, %s390
      %p399 = scmp.eq.s32.totalorder %s38, 0
      %p400 = por %p398, %p399
      %p401 = scmp.ne.s32.totalorder %s389, %s390
      %p402 = scmp.eq.s32.totalorder %s39, 1
      %p403 = por %p401, %p402
      %p405 = scmp.ne.s32.totalorder %s390, %s404
      %p406 = scmp.eq.s32.totalorder %s39, 0
      %p407 = por %p405, %p406
      %s409 = sadd.s32 %s408, 1
      %p412 = scmp.eq.s32.totalorder %s33, 1
      %p413 = scmp.ne.s32.totalorder %s408, %s410
      %p414 = scmp.eq.s32.totalorder %s33, 0
      %p415 = por %p413, %p414
      %p416 = scmp.ne.s32.totalorder %s408, %s410
      %p417 = scmp.eq.s32.totalorder %s38, 1
      %p418 = por %p416, %p417
      %p419 = scmp.ne.s32.totalorder %s410, %s411
      %p420 = scmp.eq.s32.totalorder %s38, 0
      %p421 = por %p419, %p420
      %p422 = scmp.ne.s32.totalorder %s410, %s411
      %p423 = scmp.eq.s32.totalorder %s39, 1
      %p424 = por %p422, %p423
      %p426 = scmp.ne.s32.totalorder %s411, %s425
      %p427 = scmp.eq.s32.totalorder %s39, 0
      %p428 = por %p426, %p427
      %s429 = ssub.s32 %s33, %s40
      %p430 = scmp.eq.s32.totalorder %s429, 0
      %s432 = sadd.s32 %s431, 1
      %s433 = scalar_select %p430, %s431, %s432
      %p436 = pneg %p430
      %p437 = scmp.eq.s32.totalorder %s33, 1
      %p438 = por %p436, %p437
      %p439 = scmp.ne.s32.totalorder %s431, %s434
      %p440 = scmp.eq.s32.totalorder %s33, 0
      %p441 = por %p439, %p440
      %p442 = scmp.ne.s32.totalorder %s431, %s434
      %p443 = scmp.eq.s32.totalorder %s38, 1
      %p444 = por %p442, %p443
      %p445 = scmp.ne.s32.totalorder %s434, %s435
      %p446 = scmp.eq.s32.totalorder %s38, 0
      %p447 = por %p445, %p446
      %p448 = scmp.ne.s32.totalorder %s434, %s435
      %p449 = scmp.eq.s32.totalorder %s39, 1
      %p450 = por %p448, %p449
      %p452 = scmp.ne.s32.totalorder %s435, %s451
      %p453 = scmp.eq.s32.totalorder %s39, 0
      %p454 = por %p452, %p453
      %p455 = scmp.le.s32.totalorder 1, %s33
      %p456 = scmp.lt.s32.totalorder %s33, 3
      %p457 = pnand %p455, %p456
      %p458 = pneg %p457
      // Predicated region
      $region9: #{tpu_custom_call.1} parent=5 // pred_check
        _
      $region10: #{tpu_custom_call.1} parent=5 // pred_check_branch
        %460 = sbr.rel (%p457) target = $region12
      $region11: #{tpu_custom_call.1} parent=5 // pred_region
        %s461 = ssub.s32 %s33, 1
        // Predicated region
        $region13: #{tpu_custom_call.1} parent=11 // pred_check
          %p462 = pneg %p106
        $region14: #{tpu_custom_call.1} parent=11 // pred_check_branch
          %464 = sbr.rel (%p462) target = $region16
        $region15: #{tpu_custom_call.1} parent=11 // pred_region
          _
        $region16: #{tpu_custom_call.1} parent=11 // pred_fallthru
          _
        // Predicated region
        $region17: #{tpu_custom_call.1} parent=11 // pred_check
          %p465 = pneg %p127
        $region18: #{tpu_custom_call.1} parent=11 // pred_check_branch
          %467 = sbr.rel (%p465) target = $region20
        $region19: #{tpu_custom_call.1} parent=11 // pred_region
          %s469 = ssub.s32 16, 16
          %470 = vsyncadd [#allocation6], %s469
          %s472 = sshll.u32 [#allocation5], 4
          %s473 = int_to_ptr.vmem [resolvable:$true] %s472
          %475 = dma.hbm_to_vmem [thread:$0]  %s3, 16, %s473, [#allocation6]
        $region20: #{tpu_custom_call.1} parent=11 // pred_fallthru
          _
        // Predicated region
        $region21: #{tpu_custom_call.1} parent=11 // pred_check
          %p476 = pneg %p148
        $region22: #{tpu_custom_call.1} parent=11 // pred_check_branch
          %478 = sbr.rel (%p476) target = $region24
        $region23: #{tpu_custom_call.1} parent=11 // pred_region
          _
        $region24: #{tpu_custom_call.1} parent=11 // pred_fallthru
          _
        // Predicated region
        $region25: #{tpu_custom_call.1} parent=11 // pred_check
          %p479 = pneg %p169
        $region26: #{tpu_custom_call.1} parent=11 // pred_check_branch
          %481 = sbr.rel (%p479) target = $region28
        $region27: #{tpu_custom_call.1} parent=11 // pred_region
          %s483 = ssub.s32 16, 16
          %484 = vsyncadd [#allocation6], %s483
          %s486 = sshll.u32 [#allocation7], 4
          %s487 = int_to_ptr.vmem [resolvable:$true] %s486
          %489 = dma.hbm_to_vmem [thread:$0]  %s5, 16, %s487, [#allocation6]
        $region28: #{tpu_custom_call.1} parent=11 // pred_fallthru
          _
        // Predicated region
        $region29: #{tpu_custom_call.1} parent=11 // pred_check
          %p490 = pneg %p190
        $region30: #{tpu_custom_call.1} parent=11 // pred_check_branch
          %492 = sbr.rel (%p490) target = $region32
        $region31: #{tpu_custom_call.1} parent=11 // pred_region
          %s494 = ssub.s32 256, 256
          %495 = vsyncadd [#allocation9], %s494
          %s496 = sshll.u32 [#allocation8], 4
          %s497 = int_to_ptr.vmem [resolvable:$true] %s496
          %502 = dma.hbm_to_vmem [thread:$0]  %s6, 256, %s497, [#allocation9], 64, 64, 4
        $region32: #{tpu_custom_call.1} parent=11 // pred_fallthru
          _
        // Predicated region
        $region33: #{tpu_custom_call.1} parent=11 // pred_check
          %p503 = pneg %p211
        $region34: #{tpu_custom_call.1} parent=11 // pred_check_branch
          %505 = sbr.rel (%p503) target = $region36
        $region35: #{tpu_custom_call.1} parent=11 // pred_region
          %s507 = ssub.s32 16, 16
          %508 = vsyncadd [#allocation9], %s507
          %s510 = sshll.u32 [#allocation10], 4
          %s511 = int_to_ptr.vmem [resolvable:$true] %s510
          %513 = dma.hbm_to_vmem [thread:$0]  %s7, 16, %s511, [#allocation9]
        $region36: #{tpu_custom_call.1} parent=11 // pred_fallthru
          _
        // Predicated region
        $region37: #{tpu_custom_call.1} parent=11 // pred_check
          %p514 = pneg %p232
        $region38: #{tpu_custom_call.1} parent=11 // pred_check_branch
          %516 = sbr.rel (%p514) target = $region40
        $region39: #{tpu_custom_call.1} parent=11 // pred_region
          %s518 = ssub.s32 256, 256
          %519 = vsyncadd [#allocation12], %s518
          %s520 = sshll.u32 [#allocation11], 4
          %s521 = int_to_ptr.vmem [resolvable:$true] %s520
          %526 = dma.hbm_to_vmem [thread:$0]  %s8, 256, %s521, [#allocation12], 64, 64, 4
        $region40: #{tpu_custom_call.1} parent=11 // pred_fallthru
          _
        // Predicated region
        $region41: #{tpu_custom_call.1} parent=11 // pred_check
          %p527 = pneg %p253
        $region42: #{tpu_custom_call.1} parent=11 // pred_check_branch
          %529 = sbr.rel (%p527) target = $region44
        $region43: #{tpu_custom_call.1} parent=11 // pred_region
          %s531 = ssub.s32 16, 16
          %532 = vsyncadd [#allocation12], %s531
          %s534 = sshll.u32 [#allocation13], 4
          %s535 = int_to_ptr.vmem [resolvable:$true] %s534
          %537 = dma.hbm_to_vmem [thread:$0]  %s9, 16, %s535, [#allocation12]
        $region44: #{tpu_custom_call.1} parent=11 // pred_fallthru
          _
        // Predicated region
        $region45: #{tpu_custom_call.1} parent=11 // pred_check
          %p538 = pneg %p274
        $region46: #{tpu_custom_call.1} parent=11 // pred_check_branch
          %540 = sbr.rel (%p538) target = $region48
        $region47: #{tpu_custom_call.1} parent=11 // pred_region
          _
        $region48: #{tpu_custom_call.1} parent=11 // pred_fallthru
          _
        // Predicated region
        $region49: #{tpu_custom_call.1} parent=11 // pred_check
          %p541 = pneg %p295
        $region50: #{tpu_custom_call.1} parent=11 // pred_check_branch
          %543 = sbr.rel (%p541) target = $region52
        $region51: #{tpu_custom_call.1} parent=11 // pred_region
          _
        $region52: #{tpu_custom_call.1} parent=11 // pred_fallthru
          _
        // Predicated region
        $region53: #{tpu_custom_call.1} parent=11 // pred_check
          %p544 = pneg %p316
        $region54: #{tpu_custom_call.1} parent=11 // pred_check_branch
          %546 = sbr.rel (%p544) target = $region56
        $region55: #{tpu_custom_call.1} parent=11 // pred_region
          _
        $region56: #{tpu_custom_call.1} parent=11 // pred_fallthru
          _
        // Predicated region
        $region57: #{tpu_custom_call.1} parent=11 // pred_check
          %p547 = pneg %p337
        $region58: #{tpu_custom_call.1} parent=11 // pred_check_branch
          %549 = sbr.rel (%p547) target = $region60
        $region59: #{tpu_custom_call.1} parent=11 // pred_region
          _
        $region60: #{tpu_custom_call.1} parent=11 // pred_fallthru
          _
        // Predicated region
        $region61: #{tpu_custom_call.1} parent=11 // pred_check
          %p550 = pneg %p358
        $region62: #{tpu_custom_call.1} parent=11 // pred_check_branch
          %552 = sbr.rel (%p550) target = $region64
        $region63: #{tpu_custom_call.1} parent=11 // pred_region
          _
        $region64: #{tpu_custom_call.1} parent=11 // pred_fallthru
          _
        // Predicated region
        $region65: #{tpu_custom_call.1} parent=11 // pred_check
          %p553 = pneg %p379
        $region66: #{tpu_custom_call.1} parent=11 // pred_check_branch
          %555 = sbr.rel (%p553) target = $region68
        $region67: #{tpu_custom_call.1} parent=11 // pred_region
          _
        $region68: #{tpu_custom_call.1} parent=11 // pred_fallthru
          _
        // Predicated region
        $region69: #{tpu_custom_call.1} parent=11 // pred_check
          %p556 = pneg %p400
        $region70: #{tpu_custom_call.1} parent=11 // pred_check_branch
          %558 = sbr.rel (%p556) target = $region72
        $region71: #{tpu_custom_call.1} parent=11 // pred_region
          _
        $region72: #{tpu_custom_call.1} parent=11 // pred_fallthru
          _
        // Predicated region
        $region73: #{tpu_custom_call.1} parent=11 // pred_check
          %p559 = pneg %p421
        $region74: #{tpu_custom_call.1} parent=11 // pred_check_branch
          %561 = sbr.rel (%p559) target = $region76
        $region75: #{tpu_custom_call.1} parent=11 // pred_region
          _
        $region76: #{tpu_custom_call.1} parent=11 // pred_fallthru
          _
      $region12: #{tpu_custom_call.1} parent=5 // pred_fallthru
        _
      %p562 = scmp.lt.s32.totalorder %s33, 2
      // Predicated region
      $region77: #{tpu_custom_call.1} parent=5 // pred_check
        %p563 = pneg %p562
      $region78: #{tpu_custom_call.1} parent=5 // pred_check_branch
        %565 = sbr.rel (%p563) target = $region80
      $region79: #{tpu_custom_call.1} parent=5 // pred_region
        // Predicated region
        $region81: #{tpu_custom_call.1} parent=79 // pred_check
          %p566 = pneg %p53
        $region82: #{tpu_custom_call.1} parent=79 // pred_check_branch
          %568 = sbr.rel (%p566) target = $region84
        $region83: #{tpu_custom_call.1} parent=79 // pred_region
          %p569 = scmp.lt.s32.totalorder %s33, 1
          %s570 = scalar_select %p569, %s33, 1
          %s571 = smul.addr %s570, 8
          %s572 = scalar_lea.vmem %s0, %s571
        $region84: #{tpu_custom_call.1} parent=79 // pred_fallthru
          _
        // Predicated region
        $region85: #{tpu_custom_call.1} parent=79 // pred_check
          %p573 = pneg %p79
        $region86: #{tpu_custom_call.1} parent=79 // pred_check_branch
          %575 = sbr.rel (%p573) target = $region88
        $region87: #{tpu_custom_call.1} parent=79 // pred_region
          %s576 = sand.u32 %s69, 1
          %s577 = scalar_lea.sflag [#allocation3], %s576
          %s578 = sand.u32 %s69, 1
          %s579 = scalar_lea.vmem [#allocation2], %s578
          %s581 = ssub.s32 16, 16
          %582 = vsyncadd %s577, %s581
          %s583 = smul.addr %s33, 16
          %s584 = scalar_lea.hbm %s1, %s583
          %s586 = sshll.u32 %s579, 4
          %s587 = int_to_ptr.vmem [resolvable:$true] %s586
          %589 = dma.hbm_to_vmem [thread:$0]  %s584, 16, %s587, %s577
        $region88: #{tpu_custom_call.1} parent=79 // pred_fallthru
          _
      $region80: #{tpu_custom_call.1} parent=5 // pred_fallthru
        _
      %p590 = scmp.le.s32.totalorder 1, %s33
      %p591 = scmp.lt.s32.totalorder %s33, 3
      %p592 = pnand %p590, %p591
      %p593 = pneg %p592
      // Predicated region
      $region89: #{tpu_custom_call.1} parent=5 // pred_check
        _
      $region90: #{tpu_custom_call.1} parent=5 // pred_check_branch
        %595 = sbr.rel (%p592) target = $region92
      $region91: #{tpu_custom_call.1} parent=5 // pred_region
        %s596 = ssub.s32 %s33, 1
        %s597 = sand.u32 %s72, 1
        %s598 = scalar_lea.sflag [#allocation3], %s597
        %s599 = sand.u32 %s72, 1
        %s600 = scalar_lea.vmem [#allocation2], %s599
        // Predicated region
        $region93: #{tpu_custom_call.1} parent=91 // pred_check
          %p601 = pneg %p85
        $region94: #{tpu_custom_call.1} parent=91 // pred_check_branch
          %603 = sbr.rel (%p601) target = $region96
        $region95: #{tpu_custom_call.1} parent=91 // pred_region
          %604 = dma.done %s598, 16
        $region96: #{tpu_custom_call.1} parent=91 // pred_fallthru
          _
        // Predicated region
        $region97: #{tpu_custom_call.1} parent=91 // pred_check
          %p605 = pneg %p127
        $region98: #{tpu_custom_call.1} parent=91 // pred_check_branch
          %607 = sbr.rel (%p605) target = $region100
        $region99: #{tpu_custom_call.1} parent=91 // pred_region
          %608 = dma.done [#allocation6], 16
        $region100: #{tpu_custom_call.1} parent=91 // pred_fallthru
          _
        // Predicated region
        $region101: #{tpu_custom_call.1} parent=91 // pred_check
          %p609 = pneg %p169
        $region102: #{tpu_custom_call.1} parent=91 // pred_check_branch
          %611 = sbr.rel (%p609) target = $region104
        $region103: #{tpu_custom_call.1} parent=91 // pred_region
          %612 = dma.done [#allocation6], 16
        $region104: #{tpu_custom_call.1} parent=91 // pred_fallthru
          _
        // Predicated region
        $region105: #{tpu_custom_call.1} parent=91 // pred_check
          %p613 = pneg %p190
        $region106: #{tpu_custom_call.1} parent=91 // pred_check_branch
          %615 = sbr.rel (%p613) target = $region108
        $region107: #{tpu_custom_call.1} parent=91 // pred_region
          %616 = dma.done [#allocation9], 256
        $region108: #{tpu_custom_call.1} parent=91 // pred_fallthru
          _
        // Predicated region
        $region109: #{tpu_custom_call.1} parent=91 // pred_check
          %p617 = pneg %p211
        $region110: #{tpu_custom_call.1} parent=91 // pred_check_branch
          %619 = sbr.rel (%p617) target = $region112
        $region111: #{tpu_custom_call.1} parent=91 // pred_region
          %620 = dma.done [#allocation9], 16
        $region112: #{tpu_custom_call.1} parent=91 // pred_fallthru
          _
        // Predicated region
        $region113: #{tpu_custom_call.1} parent=91 // pred_check
          %p621 = pneg %p232
        $region114: #{tpu_custom_call.1} parent=91 // pred_check_branch
          %623 = sbr.rel (%p621) target = $region116
        $region115: #{tpu_custom_call.1} parent=91 // pred_region
          %624 = dma.done [#allocation12], 256
        $region116: #{tpu_custom_call.1} parent=91 // pred_fallthru
          _
        // Predicated region
        $region117: #{tpu_custom_call.1} parent=91 // pred_check
          %p625 = pneg %p253
        $region118: #{tpu_custom_call.1} parent=91 // pred_check_branch
          %627 = sbr.rel (%p625) target = $region120
        $region119: #{tpu_custom_call.1} parent=91 // pred_region
          %628 = dma.done [#allocation12], 16
        $region120: #{tpu_custom_call.1} parent=91 // pred_fallthru
          _
        %p629 = scmp.lt.s32.totalorder %s38, 1
        %s630 = scalar_select %p629, %s38, 1
        %s631 = smul.addr %s630, 8
        %s632 = scalar_lea.vmem %s0, %s631
        %p633 = pneg %p59
        %p634 = pneg %p56
        %s635 = sand.u32 %s72, 1
        %s636 = scalar_lea.sflag [#allocation3], %s635
        %s637 = sand.u32 %s72, 1
        %s638 = scalar_lea.vmem [#allocation2], %s637
        %p639 = pneg %p85
        %p640 = pneg %p82
        %p641 = pneg %p106
        %p642 = pneg %p103
        %p643 = pneg %p127
        %p644 = pneg %p124
        %p645 = pneg %p148
        %p646 = pneg %p145
        %p647 = pneg %p169
        %p648 = pneg %p166
        %p649 = pneg %p190
        %p650 = pneg %p187
        %p651 = pneg %p211
        %p652 = pneg %p208
        %p653 = pneg %p232
        %p654 = pneg %p229
        %p655 = pneg %p253
        %p656 = pneg %p250
        %p657 = pneg %p274
        %p658 = pneg %p271
        %p659 = pneg %p295
        %p660 = pneg %p292
        %p661 = pneg %p316
        %p662 = pneg %p313
        %p663 = pneg %p337
        %p664 = pneg %p334
        %p665 = pneg %p358
        %p666 = pneg %p355
        %p667 = pneg %p379
        %p668 = pneg %p376
        %p669 = pneg %p400
        %p670 = pneg %p397
        %p671 = pneg %p421
        %p672 = pneg %p418
        %p673 = pneg %p447
        %p674 = pneg %p444
        %s675 = sand.u32 %s434, 1
        %s676 = scalar_lea.sflag [#allocation4], %s675
        %s677 = sand.u32 %s434, 1
        %s678 = smul.addr %s677, 8
        %s679 = scalar_lea.vmem [#allocation14], %s678
        %p680 = scmp.lt.s32.totalorder %s38, 1
        %s681 = scalar_select %p680, %s38, 1
        %s682 = smul.addr %s681, 8
        %s683 = scalar_lea.vmem %s0, %s682
        %v685 = vld [vmem:[%s683] sm:$0xff]
        %v686 = vpack.c.bf16 %v685, %v685
        %v687 = vld [vmem:[%s600] sm:$0x1]
        %v688 = vmul.f32 %v687, -1e+09
        %v689 = vld [vmem:[%s2] sm:$0xf]
        %v690 = vld [vmem:[%s2 + $0x4] sm:$0xf]
        %v691 = vld [vmem:[%s2 + $0x8] sm:$0xf]
        %v692 = vld [vmem:[%s2 + $0xc] sm:$0xf]
        %v693 = vld [vmem:[#allocation5] sm:$0x1]
        %v694 = vld [vmem:[%s4] sm:$0xf]
        %v695 = vld [vmem:[%s4 + $0x4] sm:$0xf]
        %v696 = vld [vmem:[%s4 + $0x8] sm:$0xf]
        %v697 = vld [vmem:[%s4 + $0xc] sm:$0xf]
        %v698 = vld [vmem:[#allocation7] sm:$0x1]
        %v699 = vld [vmem:[#allocation8] sm:$0xf]
        %v700 = vld [vmem:[#allocation8 + $0x4] sm:$0xf]
        %v701 = vld [vmem:[#allocation8 + $0x8] sm:$0xf]
        %v702 = vld [vmem:[#allocation8 + $0xc] sm:$0xf]
        %v703 = vld [vmem:[#allocation10] sm:$0x1]
        %v704 = vld [vmem:[#allocation11] sm:$0xf]
        %v705 = vld [vmem:[#allocation11 + $0x4] sm:$0xf]
        %v706 = vld [vmem:[#allocation11 + $0x8] sm:$0xf]
        %v707 = vld [vmem:[#allocation11 + $0xc] sm:$0xf]
        %v708 = vld [vmem:[#allocation13] sm:$0x1]
        %v709 = vld [vmem:[%s10] sm:$0x1]
        %v710 = vld [vmem:[%s11] sm:$0x1]
        %v711 = vld [vmem:[%s12] sm:$0xf]
        %v712 = vld [vmem:[%s12 + $0x4] sm:$0xf]
        %v713 = vld [vmem:[%s12 + $0x8] sm:$0xf]
        %v714 = vld [vmem:[%s12 + $0xc] sm:$0xf]
        %v715 = vld [vmem:[%s13] sm:$0x1]
        %v716 = vld [vmem:[%s14] sm:$0xf]
        %v717 = vld [vmem:[%s14 + $0x4] sm:$0xf]
        %v718 = vld [vmem:[%s14 + $0x8] sm:$0xf]
        %v719 = vld [vmem:[%s14 + $0xc] sm:$0xf]
        %v720 = vld [vmem:[%s14 + $0x10] sm:$0xf]
        %v721 = vld [vmem:[%s14 + $0x14] sm:$0xf]
        %v722 = vld [vmem:[%s14 + $0x18] sm:$0xf]
        %v723 = vld [vmem:[%s14 + $0x1c] sm:$0xf]
        %v724 = vld [vmem:[%s15] sm:$0x1]
        %v725 = vld [vmem:[%s16] sm:$0x1]
        %v726 = vld [vmem:[%s17] sm:$0x1]
        %v728 = vlaneseq
        %v729 = vshrl.u32 %v728, 7
        %v730 = vsub.s32 0, %v729
        %v731 = vrot.slane %v693, %v730
        %v737 = vunpack.c.l.b16 %v689
        %v738 = vunpack.c.l.b16 %v690
        %v739 = vunpack.c.l.b16 %v691
        %v740 = vunpack.c.l.b16 %v692
        %v741 = vpack.c.b16 %v738, %v737
        %v742 = vpack.c.b16 %v740, %v739
        %vm745 = vcmask 261120
        %v747 = vsel %vm745, %v686, 0
        %749 = vmatprep.subr.bf16.mxu0 0
        %750 = vmatpush1.bf16.msra.mxu0 0
        %751 = vmatprep.subr.bf16.mxu0 0
        %752 = vmatpush1.bf16.msra.mxu0 0
        %753 = vmatprep.subr.bf16.mxu0 0
        %754 = vmatpush1.bf16.msra.mxu0 0
        %755 = vmatprep.subr.bf16.mxu0 0
        %756 = vmatpush1.bf16.msra.mxu0 0
        %757 = vmatprep.subr.bf16.mxu0 0
        %758 = vmatpush1.bf16.msra.mxu0 0
        %759 = vmatprep.subr.bf16.mxu0 0
        %760 = vmatpush1.bf16.msra.mxu0 0
        %761 = vmatprep.subr.bf16.mxu0 0
        %762 = vmatpush1.bf16.msra.mxu0 %v742
        %763 = vmatprep.subr.bf16.mxu0 0
        %764 = vmatpush1.bf16.msra.mxu0 %v741
        %765 = vmatprep.subr.bf16.mxu0 0
        %766 = vmatpush2.bf16.msra.mxu0 0
        %767 = vmatprep.subr.bf16.mxu0 0
        %768 = vmatpush2.bf16.msra.mxu0 0
        %769 = vmatprep.subr.bf16.mxu0 0
        %770 = vmatpush2.bf16.msra.mxu0 0
        %771 = vmatprep.subr.bf16.mxu0 0
        %772 = vmatpush2.bf16.msra.mxu0 0
        %773 = vmatprep.subr.bf16.mxu0 0
        %774 = vmatpush2.bf16.msra.mxu0 0
        %775 = vmatprep.subr.bf16.mxu0 0
        %776 = vmatpush2.bf16.msra.mxu0 0
        %777 = vmatprep.subr.bf16.mxu0 0
        %778 = vmatpush2.bf16.msra.mxu0 0
        %779 = vmatprep.subr.bf16.mxu0 0
        %780 = vmatpush2.bf16.msra.mxu0 0
        %781 = vmatprep.mubr.bf16.mxu0 0
        %782 = vmatmul.mubr.bf16.gmra.mxu0 %v747
        %v783 = vpop.f32.mrf.mxu0
        %v784 = vadd.f32 %v731, %v783
        %v785 = vpop.f32.mrf.mxu0
        %v786 = vpop.f32.mrf.mxu0
        %v787 = vpop.f32.mrf.mxu0
        %788 = vdwg.mxu0
        %v790 = vlaneseq
        %v791 = vshrl.u32 %v790, 7
        %v792 = vsub.s32 0, %v791
        %v793 = vrot.slane %v698, %v792
        %v799 = vunpack.c.l.b16 %v694
        %v800 = vunpack.c.l.b16 %v695
        %v801 = vunpack.c.l.b16 %v696
        %v802 = vunpack.c.l.b16 %v697
        %v803 = vpack.c.b16 %v800, %v799
        %v804 = vpack.c.b16 %v802, %v801
        %807 = vmatprep.subr.bf16.mxu0 0
        %808 = vmatpush1.bf16.msra.mxu0 0
        %809 = vmatprep.subr.bf16.mxu0 0
        %810 = vmatpush1.bf16.msra.mxu0 0
        %811 = vmatprep.subr.bf16.mxu0 0
        %812 = vmatpush1.bf16.msra.mxu0 0
        %813 = vmatprep.subr.bf16.mxu0 0
        %814 = vmatpush1.bf16.msra.mxu0 0
        %815 = vmatprep.subr.bf16.mxu0 0
        %816 = vmatpush1.bf16.msra.mxu0 0
        %817 = vmatprep.subr.bf16.mxu0 0
        %818 = vmatpush1.bf16.msra.mxu0 0
        %819 = vmatprep.subr.bf16.mxu0 0
        %820 = vmatpush1.bf16.msra.mxu0 %v804
        %821 = vmatprep.subr.bf16.mxu0 0
        %822 = vmatpush1.bf16.msra.mxu0 %v803
        %823 = vmatprep.subr.bf16.mxu0 0
        %824 = vmatpush2.bf16.msra.mxu0 0
        %825 = vmatprep.subr.bf16.mxu0 0
        %826 = vmatpush2.bf16.msra.mxu0 0
        %827 = vmatprep.subr.bf16.mxu0 0
        %828 = vmatpush2.bf16.msra.mxu0 0
        %829 = vmatprep.subr.bf16.mxu0 0
        %830 = vmatpush2.bf16.msra.mxu0 0
        %831 = vmatprep.subr.bf16.mxu0 0
        %832 = vmatpush2.bf16.msra.mxu0 0
        %833 = vmatprep.subr.bf16.mxu0 0
        %834 = vmatpush2.bf16.msra.mxu0 0
        %835 = vmatprep.subr.bf16.mxu0 0
        %836 = vmatpush2.bf16.msra.mxu0 0
        %837 = vmatprep.subr.bf16.mxu0 0
        %838 = vmatpush2.bf16.msra.mxu0 0
        %839 = vmatprep.mubr.bf16.mxu0 0
        %840 = vmatmul.mubr.bf16.gmra.mxu0 %v747
        %v841 = vpop.f32.mrf.mxu0
        %v842 = vadd.f32 %v793, %v841
        %v843 = vpop.f32.mrf.mxu0
        %v844 = vpop.f32.mrf.mxu0
        %v845 = vpop.f32.mrf.mxu0
        %846 = vdwg.mxu0
        %v848 = vlaneseq
        %v849 = vshrl.u32 %v848, 7
        %v850 = vsub.s32 0, %v849
        %v851 = vrot.slane %v703, %v850
        %v857 = vunpack.c.l.b16 %v699
        %v858 = vunpack.c.l.b16 %v700
        %v859 = vunpack.c.l.b16 %v701
        %v860 = vunpack.c.l.b16 %v702
        %v861 = vpack.c.b16 %v858, %v857
        %v862 = vpack.c.b16 %v860, %v859
        %865 = vmatprep.subr.bf16.mxu0 0
        %866 = vmatpush1.bf16.msra.mxu0 0
        %867 = vmatprep.subr.bf16.mxu0 0
        %868 = vmatpush1.bf16.msra.mxu0 0
        %869 = vmatprep.subr.bf16.mxu0 0
        %870 = vmatpush1.bf16.msra.mxu0 0
        %871 = vmatprep.subr.bf16.mxu0 0
        %872 = vmatpush1.bf16.msra.mxu0 0
        %873 = vmatprep.subr.bf16.mxu0 0
        %874 = vmatpush1.bf16.msra.mxu0 0
        %875 = vmatprep.subr.bf16.mxu0 0
        %876 = vmatpush1.bf16.msra.mxu0 0
        %877 = vmatprep.subr.bf16.mxu0 0
        %878 = vmatpush1.bf16.msra.mxu0 %v862
        %879 = vmatprep.subr.bf16.mxu0 0
        %880 = vmatpush1.bf16.msra.mxu0 %v861
        %881 = vmatprep.subr.bf16.mxu0 0
        %882 = vmatpush2.bf16.msra.mxu0 0
        %883 = vmatprep.subr.bf16.mxu0 0
        %884 = vmatpush2.bf16.msra.mxu0 0
        %885 = vmatprep.subr.bf16.mxu0 0
        %886 = vmatpush2.bf16.msra.mxu0 0
        %887 = vmatprep.subr.bf16.mxu0 0
        %888 = vmatpush2.bf16.msra.mxu0 0
        %889 = vmatprep.subr.bf16.mxu0 0
        %890 = vmatpush2.bf16.msra.mxu0 0
        %891 = vmatprep.subr.bf16.mxu0 0
        %892 = vmatpush2.bf16.msra.mxu0 0
        %893 = vmatprep.subr.bf16.mxu0 0
        %894 = vmatpush2.bf16.msra.mxu0 0
        %895 = vmatprep.subr.bf16.mxu0 0
        %896 = vmatpush2.bf16.msra.mxu0 0
        %897 = vmatprep.mubr.bf16.mxu0 0
        %898 = vmatmul.mubr.bf16.gmra.mxu0 %v747
        %v899 = vpop.f32.mrf.mxu0
        %v900 = vadd.f32 %v851, %v899
        %v901 = vpop.f32.mrf.mxu0
        %v902 = vpop.f32.mrf.mxu0
        %v903 = vpop.f32.mrf.mxu0
        %904 = vdwg.mxu0
        %906 = vrot.lane.b32.xlu0 %v784, 120
        %v907 = vpop.permute.xlu0 %906
        %909 = vrot.lane.b32.xlu0 %v784, 112
        %v910 = vpop.permute.xlu0 %909
        %912 = vrot.lane.b32.xlu0 %v784, 104
        %v913 = vpop.permute.xlu0 %912
        %v915 = vcombine.low %v784, %v910
        %v916 = vcombine.high %v784, %v910
        %v918 = vunpack.c.l.s4 1983009808
        %v919 = vunpack.c.0.s8 %v918
        %v920 = vlaneseq
        %v921 = vshrl.u32 %v920, 7
        %v922 = vsub.s32 %v919, %v921
        %v923 = vrot.slane %v915, %v922
        %v925 = vunpack.c.l.s4 1983009808
        %v926 = vunpack.c.0.s8 %v925
        %v927 = vlaneseq
        %v928 = vshrl.u32 %v927, 7
        %v929 = vsub.s32 %v926, %v928
        %v930 = vrot.slane %v916, %v929
        %v931 = vcombine.low %v907, %v913
        %v932 = vcombine.high %v907, %v913
        %v934 = vunpack.c.l.s4 1983009808
        %v935 = vunpack.c.0.s8 %v934
        %v936 = vlaneseq
        %v937 = vshrl.u32 %v936, 7
        %v938 = vsub.s32 %v935, %v937
        %v939 = vrot.slane %v931, %v938
        %v941 = vunpack.c.l.s4 1983009808
        %v942 = vunpack.c.0.s8 %v941
        %v943 = vlaneseq
        %v944 = vshrl.u32 %v943, 7
        %v945 = vsub.s32 %v942, %v944
        %v946 = vrot.slane %v932, %v945
        %v947 = vcombine.low %v923, %v939
        %v948 = vcombine.high %v923, %v939
        %v950 = vunpack.c.l.s4 1934713408
        %v951 = vunpack.c.0.s8 %v950
        %v952 = vlaneseq
        %v953 = vshrl.u32 %v952, 7
        %v954 = vsub.s32 %v951, %v953
        %v955 = vrot.slane %v947, %v954
        %v957 = vunpack.c.l.s4 1934713408
        %v958 = vunpack.c.0.s8 %v957
        %v959 = vlaneseq
        %v960 = vshrl.u32 %v959, 7
        %v961 = vsub.s32 %v958, %v960
        %v962 = vrot.slane %v948, %v961
        %v963 = vcombine.low %v930, %v946
        %v964 = vcombine.high %v930, %v946
        %v966 = vunpack.c.l.s4 1934713408
        %v967 = vunpack.c.0.s8 %v966
        %v968 = vlaneseq
        %v969 = vshrl.u32 %v968, 7
        %v970 = vsub.s32 %v967, %v969
        %v971 = vrot.slane %v963, %v970
        %v973 = vunpack.c.l.s4 1934713408
        %v974 = vunpack.c.0.s8 %v973
        %v975 = vlaneseq
        %v976 = vshrl.u32 %v975, 7
        %v977 = vsub.s32 %v974, %v976
        %v978 = vrot.slane %v964, %v977
        %v979 = vcombine.high %v955, 0.0
        %v980 = vcombine.high %v962, 0.0
        %v981 = vcombine.high %v971, 0.0
        %v982 = vcombine.high %v978, 0.0
        %v983 = vcombine.low %v955, %v962
        %v985 = vunpack.c.l.s4 1983009808
        %v986 = vunpack.c.0.s8 %v985
        %v987 = vlaneseq
        %v988 = vshrl.u32 %v987, 7
        %v989 = vsub.s32 %v986, %v988
        %v990 = vrot.slane %v983, %v989
        %v991 = vcombine.low %v979, %v980
        %v993 = vunpack.c.l.s4 1983009808
        %v994 = vunpack.c.0.s8 %v993
        %v995 = vlaneseq
        %v996 = vshrl.u32 %v995, 7
        %v997 = vsub.s32 %v994, %v996
        %v998 = vrot.slane %v991, %v997
        %v999 = vcombine.low %v971, %v978
        %v1001 = vunpack.c.l.s4 1983009808
        %v1002 = vunpack.c.0.s8 %v1001
        %v1003 = vlaneseq
        %v1004 = vshrl.u32 %v1003, 7
        %v1005 = vsub.s32 %v1002, %v1004
        %v1006 = vrot.slane %v999, %v1005
        %v1007 = vcombine.low %v981, %v982
        %v1009 = vunpack.c.l.s4 1983009808
        %v1010 = vunpack.c.0.s8 %v1009
        %v1011 = vlaneseq
        %v1012 = vshrl.u32 %v1011, 7
        %v1013 = vsub.s32 %v1010, %v1012
        %v1014 = vrot.slane %v1007, %v1013
        %v1015 = vcombine.low %v990, %v998
        %v1016 = vcombine.high %v990, %v998
        %v1018 = vunpack.c.l.s4 1934713408
        %v1019 = vunpack.c.0.s8 %v1018
        %v1020 = vlaneseq
        %v1021 = vshrl.u32 %v1020, 7
        %v1022 = vsub.s32 %v1019, %v1021
        %v1023 = vrot.slane %v1015, %v1022
        %v1025 = vunpack.c.l.s4 1934713408
        %v1026 = vunpack.c.0.s8 %v1025
        %v1027 = vlaneseq
        %v1028 = vshrl.u32 %v1027, 7
        %v1029 = vsub.s32 %v1026, %v1028
        %v1030 = vrot.slane %v1016, %v1029
        %v1031 = vcombine.low %v1006, %v1014
        %v1032 = vcombine.high %v1006, %v1014
        %v1034 = vunpack.c.l.s4 1934713408
        %v1035 = vunpack.c.0.s8 %v1034
        %v1036 = vlaneseq
        %v1037 = vshrl.u32 %v1036, 7
        %v1038 = vsub.s32 %v1035, %v1037
        %v1039 = vrot.slane %v1031, %v1038
        %v1041 = vunpack.c.l.s4 1934713408
        %v1042 = vunpack.c.0.s8 %v1041
        %v1043 = vlaneseq
        %v1044 = vshrl.u32 %v1043, 7
        %v1045 = vsub.s32 %v1042, %v1044
        %v1046 = vrot.slane %v1032, %v1045
        %v1047 = vcombine.low %v1023, %v1039
        %v1048 = vcombine.high %v1023, %v1039
        %v1049 = vcombine.low %v1030, %v1046
        %v1050 = vcombine.high %v1030, %v1046
        %v1051 = vpack.c.bf16 %v1047, %v1047
        %v1052 = vpack.c.bf16 %v1048, %v1048
        %v1053 = vpack.c.bf16 %v1049, %v1049
        %v1054 = vpack.c.bf16 %v1050, %v1050
        %1056 = vrot.lane.b32.xlu0 %v842, 120
        %v1057 = vpop.permute.xlu0 %1056
        %1059 = vrot.lane.b32.xlu0 %v842, 112
        %v1060 = vpop.permute.xlu0 %1059
        %1062 = vrot.lane.b32.xlu0 %v842, 104
        %v1063 = vpop.permute.xlu0 %1062
        %v1065 = vcombine.low %v842, %v1060
        %v1066 = vcombine.high %v842, %v1060
        %v1068 = vunpack.c.l.s4 1983009808
        %v1069 = vunpack.c.0.s8 %v1068
        %v1070 = vlaneseq
        %v1071 = vshrl.u32 %v1070, 7
        %v1072 = vsub.s32 %v1069, %v1071
        %v1073 = vrot.slane %v1065, %v1072
        %v1075 = vunpack.c.l.s4 1983009808
        %v1076 = vunpack.c.0.s8 %v1075
        %v1077 = vlaneseq
        %v1078 = vshrl.u32 %v1077, 7
        %v1079 = vsub.s32 %v1076, %v1078
        %v1080 = vrot.slane %v1066, %v1079
        %v1081 = vcombine.low %v1057, %v1063
        %v1082 = vcombine.high %v1057, %v1063
        %v1084 = vunpack.c.l.s4 1983009808
        %v1085 = vunpack.c.0.s8 %v1084
        %v1086 = vlaneseq
        %v1087 = vshrl.u32 %v1086, 7
        %v1088 = vsub.s32 %v1085, %v1087
        %v1089 = vrot.slane %v1081, %v1088
        %v1091 = vunpack.c.l.s4 1983009808
        %v1092 = vunpack.c.0.s8 %v1091
        %v1093 = vlaneseq
        %v1094 = vshrl.u32 %v1093, 7
        %v1095 = vsub.s32 %v1092, %v1094
        %v1096 = vrot.slane %v1082, %v1095
        %v1097 = vcombine.low %v1073, %v1089
        %v1098 = vcombine.high %v1073, %v1089
        %v1100 = vunpack.c.l.s4 1934713408
        %v1101 = vunpack.c.0.s8 %v1100
        %v1102 = vlaneseq
        %v1103 = vshrl.u32 %v1102, 7
        %v1104 = vsub.s32 %v1101, %v1103
        %v1105 = vrot.slane %v1097, %v1104
        %v1107 = vunpack.c.l.s4 1934713408
        %v1108 = vunpack.c.0.s8 %v1107
        %v1109 = vlaneseq
        %v1110 = vshrl.u32 %v1109, 7
        %v1111 = vsub.s32 %v1108, %v1110
        %v1112 = vrot.slane %v1098, %v1111
        %v1113 = vcombine.low %v1080, %v1096
        %v1114 = vcombine.high %v1080, %v1096
        %v1116 = vunpack.c.l.s4 1934713408
        %v1117 = vunpack.c.0.s8 %v1116
        %v1118 = vlaneseq
        %v1119 = vshrl.u32 %v1118, 7
        %v1120 = vsub.s32 %v1117, %v1119
        %v1121 = vrot.slane %v1113, %v1120
        %v1123 = vunpack.c.l.s4 1934713408
        %v1124 = vunpack.c.0.s8 %v1123
        %v1125 = vlaneseq
        %v1126 = vshrl.u32 %v1125, 7
        %v1127 = vsub.s32 %v1124, %v1126
        %v1128 = vrot.slane %v1114, %v1127
        %v1129 = vcombine.high %v1105, 0.0
        %v1130 = vcombine.high %v1112, 0.0
        %v1131 = vcombine.high %v1121, 0.0
        %v1132 = vcombine.high %v1128, 0.0
        %v1133 = vcombine.low %v1105, %v1112
        %v1135 = vunpack.c.l.s4 1983009808
        %v1136 = vunpack.c.0.s8 %v1135
        %v1137 = vlaneseq
        %v1138 = vshrl.u32 %v1137, 7
        %v1139 = vsub.s32 %v1136, %v1138
        %v1140 = vrot.slane %v1133, %v1139
        %v1141 = vcombine.low %v1129, %v1130
        %v1143 = vunpack.c.l.s4 1983009808
        %v1144 = vunpack.c.0.s8 %v1143
        %v1145 = vlaneseq
        %v1146 = vshrl.u32 %v1145, 7
        %v1147 = vsub.s32 %v1144, %v1146
        %v1148 = vrot.slane %v1141, %v1147
        %v1149 = vcombine.low %v1121, %v1128
        %v1151 = vunpack.c.l.s4 1983009808
        %v1152 = vunpack.c.0.s8 %v1151
        %v1153 = vlaneseq
        %v1154 = vshrl.u32 %v1153, 7
        %v1155 = vsub.s32 %v1152, %v1154
        %v1156 = vrot.slane %v1149, %v1155
        %v1157 = vcombine.low %v1131, %v1132
        %v1159 = vunpack.c.l.s4 1983009808
        %v1160 = vunpack.c.0.s8 %v1159
        %v1161 = vlaneseq
        %v1162 = vshrl.u32 %v1161, 7
        %v1163 = vsub.s32 %v1160, %v1162
        %v1164 = vrot.slane %v1157, %v1163
        %v1165 = vcombine.low %v1140, %v1148
        %v1166 = vcombine.high %v1140, %v1148
        %v1168 = vunpack.c.l.s4 1934713408
        %v1169 = vunpack.c.0.s8 %v1168
        %v1170 = vlaneseq
        %v1171 = vshrl.u32 %v1170, 7
        %v1172 = vsub.s32 %v1169, %v1171
        %v1173 = vrot.slane %v1165, %v1172
        %v1175 = vunpack.c.l.s4 1934713408
        %v1176 = vunpack.c.0.s8 %v1175
        %v1177 = vlaneseq
        %v1178 = vshrl.u32 %v1177, 7
        %v1179 = vsub.s32 %v1176, %v1178
        %v1180 = vrot.slane %v1166, %v1179
        %v1181 = vcombine.low %v1156, %v1164
        %v1182 = vcombine.high %v1156, %v1164
        %v1184 = vunpack.c.l.s4 1934713408
        %v1185 = vunpack.c.0.s8 %v1184
        %v1186 = vlaneseq
        %v1187 = vshrl.u32 %v1186, 7
        %v1188 = vsub.s32 %v1185, %v1187
        %v1189 = vrot.slane %v1181, %v1188
        %v1191 = vunpack.c.l.s4 1934713408
        %v1192 = vunpack.c.0.s8 %v1191
        %v1193 = vlaneseq
        %v1194 = vshrl.u32 %v1193, 7
        %v1195 = vsub.s32 %v1192, %v1194
        %v1196 = vrot.slane %v1182, %v1195
        %v1197 = vcombine.low %v1173, %v1189
        %v1198 = vcombine.high %v1173, %v1189
        %v1199 = vcombine.low %v1180, %v1196
        %v1200 = vcombine.high %v1180, %v1196
        %v1201 = vpack.c.bf16 %v1197, %v1197
        %v1202 = vpack.c.bf16 %v1198, %v1198
        %v1203 = vpack.c.bf16 %v1199, %v1199
        %v1204 = vpack.c.bf16 %v1200, %v1200
        %1206 = vrot.lane.b32.xlu0 %v900, 120
        %v1207 = vpop.permute.xlu0 %1206
        %1209 = vrot.lane.b32.xlu0 %v900, 112
        %v1210 = vpop.permute.xlu0 %1209
        %1212 = vrot.lane.b32.xlu0 %v900, 104
        %v1213 = vpop.permute.xlu0 %1212
        %v1215 = vcombine.low %v900, %v1210
        %v1216 = vcombine.high %v900, %v1210
        %v1218 = vunpack.c.l.s4 1983009808
        %v1219 = vunpack.c.0.s8 %v1218
        %v1220 = vlaneseq
        %v1221 = vshrl.u32 %v1220, 7
        %v1222 = vsub.s32 %v1219, %v1221
        %v1223 = vrot.slane %v1215, %v1222
        %v1225 = vunpack.c.l.s4 1983009808
        %v1226 = vunpack.c.0.s8 %v1225
        %v1227 = vlaneseq
        %v1228 = vshrl.u32 %v1227, 7
        %v1229 = vsub.s32 %v1226, %v1228
        %v1230 = vrot.slane %v1216, %v1229
        %v1231 = vcombine.low %v1207, %v1213
        %v1232 = vcombine.high %v1207, %v1213
        %v1234 = vunpack.c.l.s4 1983009808
        %v1235 = vunpack.c.0.s8 %v1234
        %v1236 = vlaneseq
        %v1237 = vshrl.u32 %v1236, 7
        %v1238 = vsub.s32 %v1235, %v1237
        %v1239 = vrot.slane %v1231, %v1238
        %v1241 = vunpack.c.l.s4 1983009808
        %v1242 = vunpack.c.0.s8 %v1241
        %v1243 = vlaneseq
        %v1244 = vshrl.u32 %v1243, 7
        %v1245 = vsub.s32 %v1242, %v1244
        %v1246 = vrot.slane %v1232, %v1245
        %v1247 = vcombine.low %v1223, %v1239
        %v1248 = vcombine.high %v1223, %v1239
        %v1250 = vunpack.c.l.s4 1934713408
        %v1251 = vunpack.c.0.s8 %v1250
        %v1252 = vlaneseq
        %v1253 = vshrl.u32 %v1252, 7
        %v1254 = vsub.s32 %v1251, %v1253
        %v1255 = vrot.slane %v1247, %v1254
        %v1257 = vunpack.c.l.s4 1934713408
        %v1258 = vunpack.c.0.s8 %v1257
        %v1259 = vlaneseq
        %v1260 = vshrl.u32 %v1259, 7
        %v1261 = vsub.s32 %v1258, %v1260
        %v1262 = vrot.slane %v1248, %v1261
        %v1263 = vcombine.low %v1230, %v1246
        %v1264 = vcombine.high %v1230, %v1246
        %v1266 = vunpack.c.l.s4 1934713408
        %v1267 = vunpack.c.0.s8 %v1266
        %v1268 = vlaneseq
        %v1269 = vshrl.u32 %v1268, 7
        %v1270 = vsub.s32 %v1267, %v1269
        %v1271 = vrot.slane %v1263, %v1270
        %v1273 = vunpack.c.l.s4 1934713408
        %v1274 = vunpack.c.0.s8 %v1273
        %v1275 = vlaneseq
        %v1276 = vshrl.u32 %v1275, 7
        %v1277 = vsub.s32 %v1274, %v1276
        %v1278 = vrot.slane %v1264, %v1277
        %v1279 = vcombine.high %v1255, 0.0
        %v1280 = vcombine.high %v1262, 0.0
        %v1281 = vcombine.high %v1271, 0.0
        %v1282 = vcombine.high %v1278, 0.0
        %v1283 = vcombine.low %v1255, %v1262
        %v1285 = vunpack.c.l.s4 1983009808
        %v1286 = vunpack.c.0.s8 %v1285
        %v1287 = vlaneseq
        %v1288 = vshrl.u32 %v1287, 7
        %v1289 = vsub.s32 %v1286, %v1288
        %v1290 = vrot.slane %v1283, %v1289
        %v1291 = vcombine.low %v1279, %v1280
        %v1293 = vunpack.c.l.s4 1983009808
        %v1294 = vunpack.c.0.s8 %v1293
        %v1295 = vlaneseq
        %v1296 = vshrl.u32 %v1295, 7
        %v1297 = vsub.s32 %v1294, %v1296
        %v1298 = vrot.slane %v1291, %v1297
        %v1299 = vcombine.low %v1271, %v1278
        %v1301 = vunpack.c.l.s4 1983009808
        %v1302 = vunpack.c.0.s8 %v1301
        %v1303 = vlaneseq
        %v1304 = vshrl.u32 %v1303, 7
        %v1305 = vsub.s32 %v1302, %v1304
        %v1306 = vrot.slane %v1299, %v1305
        %v1307 = vcombine.low %v1281, %v1282
        %v1309 = vunpack.c.l.s4 1983009808
        %v1310 = vunpack.c.0.s8 %v1309
        %v1311 = vlaneseq
        %v1312 = vshrl.u32 %v1311, 7
        %v1313 = vsub.s32 %v1310, %v1312
        %v1314 = vrot.slane %v1307, %v1313
        %v1315 = vcombine.low %v1290, %v1298
        %v1316 = vcombine.high %v1290, %v1298
        %v1318 = vunpack.c.l.s4 1934713408
        %v1319 = vunpack.c.0.s8 %v1318
        %v1320 = vlaneseq
        %v1321 = vshrl.u32 %v1320, 7
        %v1322 = vsub.s32 %v1319, %v1321
        %v1323 = vrot.slane %v1315, %v1322
        %v1325 = vunpack.c.l.s4 1934713408
        %v1326 = vunpack.c.0.s8 %v1325
        %v1327 = vlaneseq
        %v1328 = vshrl.u32 %v1327, 7
        %v1329 = vsub.s32 %v1326, %v1328
        %v1330 = vrot.slane %v1316, %v1329
        %v1331 = vcombine.low %v1306, %v1314
        %v1332 = vcombine.high %v1306, %v1314
        %v1334 = vunpack.c.l.s4 1934713408
        %v1335 = vunpack.c.0.s8 %v1334
        %v1336 = vlaneseq
        %v1337 = vshrl.u32 %v1336, 7
        %v1338 = vsub.s32 %v1335, %v1337
        %v1339 = vrot.slane %v1331, %v1338
        %v1341 = vunpack.c.l.s4 1934713408
        %v1342 = vunpack.c.0.s8 %v1341
        %v1343 = vlaneseq
        %v1344 = vshrl.u32 %v1343, 7
        %v1345 = vsub.s32 %v1342, %v1344
        %v1346 = vrot.slane %v1332, %v1345
        %v1347 = vcombine.low %v1323, %v1339
        %v1348 = vcombine.high %v1323, %v1339
        %v1349 = vcombine.low %v1330, %v1346
        %v1350 = vcombine.high %v1330, %v1346
        %v1351 = vpack.c.bf16 %v1347, %v1347
        %v1352 = vpack.c.bf16 %v1348, %v1348
        %v1353 = vpack.c.bf16 %v1349, %v1349
        %v1354 = vpack.c.bf16 %v1350, %v1350
        %vm1355 = vcmask 64512
        %v1357 = vsel %vm1355, %v1051, 0
        %v1360 = vsel %vm1355, %v1201, 0
        %1362 = vmatprep.subr.bf16.mxu0 0
        %1363 = vmatpush1.bf16.xpose.msra.mxu0 0
        %1364 = vmatprep.subr.bf16.mxu0 0
        %1365 = vmatpush1.bf16.xpose.msra.mxu0 0
        %1366 = vmatprep.subr.bf16.mxu0 0
        %1367 = vmatpush1.bf16.xpose.msra.mxu0 0
        %1368 = vmatprep.subr.bf16.mxu0 0
        %1369 = vmatpush1.bf16.xpose.msra.mxu0 0
        %1370 = vmatprep.subr.bf16.mxu0 0
        %1371 = vmatpush1.bf16.xpose.msra.mxu0 0
        %1372 = vmatprep.subr.bf16.mxu0 0
        %1373 = vmatpush1.bf16.xpose.msra.mxu0 0
        %1374 = vmatprep.subr.bf16.mxu0 0
        %1375 = vmatpush1.bf16.xpose.msra.mxu0 0
        %1376 = vmatprep.subr.bf16.mxu0 0
        %1377 = vmatpush1.bf16.xpose.msra.mxu0 %v1360
        %1378 = vmatprep.subr.bf16.mxu0 0
        %1379 = vmatpush2.bf16.xpose.msra.mxu0 0
        %1380 = vmatprep.subr.bf16.mxu0 0
        %1381 = vmatpush2.bf16.xpose.msra.mxu0 0
        %1382 = vmatprep.subr.bf16.mxu0 0
        %1383 = vmatpush2.bf16.xpose.msra.mxu0 0
        %1384 = vmatprep.subr.bf16.mxu0 0
        %1385 = vmatpush2.bf16.xpose.msra.mxu0 0
        %1386 = vmatprep.subr.bf16.mxu0 0
        %1387 = vmatpush2.bf16.xpose.msra.mxu0 0
        %1388 = vmatprep.subr.bf16.mxu0 0
        %1389 = vmatpush2.bf16.xpose.msra.mxu0 0
        %1390 = vmatprep.subr.bf16.mxu0 0
        %1391 = vmatpush2.bf16.xpose.msra.mxu0 0
        %1392 = vmatprep.subr.bf16.mxu0 0
        %1393 = vmatpush2.bf16.xpose.msra.mxu0 0
        %1394 = vmatprep.mubr.bf16.mxu0 0
        %1395 = vmatmul.mubr.bf16.gmra.mxu0 %v1357
        %v1396 = vpop.f32.mrf.mxu0
        %v1397 = vadd.f32 0.0, %v1396
        %v1398 = vpop.f32.mrf.mxu0
        %v1399 = vpop.f32.mrf.mxu0
        %v1400 = vpop.f32.mrf.mxu0
        %1401 = vdwg.mxu0
        %v1403 = vsel %vm1355, %v1052, 0
        %v1406 = vsel %vm1355, %v1202, 0
        %1408 = vmatprep.subr.bf16.mxu0 0
        %1409 = vmatpush1.bf16.xpose.msra.mxu0 0
        %1410 = vmatprep.subr.bf16.mxu0 0
        %1411 = vmatpush1.bf16.xpose.msra.mxu0 0
        %1412 = vmatprep.subr.bf16.mxu0 0
        %1413 = vmatpush1.bf16.xpose.msra.mxu0 0
        %1414 = vmatprep.subr.bf16.mxu0 0
        %1415 = vmatpush1.bf16.xpose.msra.mxu0 0
        %1416 = vmatprep.subr.bf16.mxu0 0
        %1417 = vmatpush1.bf16.xpose.msra.mxu0 0
        %1418 = vmatprep.subr.bf16.mxu0 0
        %1419 = vmatpush1.bf16.xpose.msra.mxu0 0
        %1420 = vmatprep.subr.bf16.mxu0 0
        %1421 = vmatpush1.bf16.xpose.msra.mxu0 0
        %1422 = vmatprep.subr.bf16.mxu0 0
        %1423 = vmatpush1.bf16.xpose.msra.mxu0 %v1406
        %1424 = vmatprep.subr.bf16.mxu0 0
        %1425 = vmatpush2.bf16.xpose.msra.mxu0 0
        %1426 = vmatprep.subr.bf16.mxu0 0
        %1427 = vmatpush2.bf16.xpose.msra.mxu0 0
        %1428 = vmatprep.subr.bf16.mxu0 0
        %1429 = vmatpush2.bf16.xpose.msra.mxu0 0
        %1430 = vmatprep.subr.bf16.mxu0 0
        %1431 = vmatpush2.bf16.xpose.msra.mxu0 0
        %1432 = vmatprep.subr.bf16.mxu0 0
        %1433 = vmatpush2.bf16.xpose.msra.mxu0 0
        %1434 = vmatprep.subr.bf16.mxu0 0
        %1435 = vmatpush2.bf16.xpose.msra.mxu0 0
        %1436 = vmatprep.subr.bf16.mxu0 0
        %1437 = vmatpush2.bf16.xpose.msra.mxu0 0
        %1438 = vmatprep.subr.bf16.mxu0 0
        %1439 = vmatpush2.bf16.xpose.msra.mxu0 0
        %1440 = vmatprep.mubr.bf16.mxu0 0
        %1441 = vmatmul.mubr.bf16.gmra.mxu0 %v1403
        %v1442 = vpop.f32.mrf.mxu0
        %v1443 = vadd.f32 0.0, %v1442
        %v1444 = vpop.f32.mrf.mxu0
        %v1445 = vpop.f32.mrf.mxu0
        %v1446 = vpop.f32.mrf.mxu0
        %1447 = vdwg.mxu0
        %v1449 = vsel %vm1355, %v1053, 0
        %v1452 = vsel %vm1355, %v1203, 0
        %1454 = vmatprep.subr.bf16.mxu0 0
        %1455 = vmatpush1.bf16.xpose.msra.mxu0 0
        %1456 = vmatprep.subr.bf16.mxu0 0
        %1457 = vmatpush1.bf16.xpose.msra.mxu0 0
        %1458 = vmatprep.subr.bf16.mxu0 0
        %1459 = vmatpush1.bf16.xpose.msra.mxu0 0
        %1460 = vmatprep.subr.bf16.mxu0 0
        %1461 = vmatpush1.bf16.xpose.msra.mxu0 0
        %1462 = vmatprep.subr.bf16.mxu0 0
        %1463 = vmatpush1.bf16.xpose.msra.mxu0 0
        %1464 = vmatprep.subr.bf16.mxu0 0
        %1465 = vmatpush1.bf16.xpose.msra.mxu0 0
        %1466 = vmatprep.subr.bf16.mxu0 0
        %1467 = vmatpush1.bf16.xpose.msra.mxu0 0
        %1468 = vmatprep.subr.bf16.mxu0 0
        %1469 = vmatpush1.bf16.xpose.msra.mxu0 %v1452
        %1470 = vmatprep.subr.bf16.mxu0 0
        %1471 = vmatpush2.bf16.xpose.msra.mxu0 0
        %1472 = vmatprep.subr.bf16.mxu0 0
        %1473 = vmatpush2.bf16.xpose.msra.mxu0 0
        %1474 = vmatprep.subr.bf16.mxu0 0
        %1475 = vmatpush2.bf16.xpose.msra.mxu0 0
        %1476 = vmatprep.subr.bf16.mxu0 0
        %1477 = vmatpush2.bf16.xpose.msra.mxu0 0
        %1478 = vmatprep.subr.bf16.mxu0 0
        %1479 = vmatpush2.bf16.xpose.msra.mxu0 0
        %1480 = vmatprep.subr.bf16.mxu0 0
        %1481 = vmatpush2.bf16.xpose.msra.mxu0 0
        %1482 = vmatprep.subr.bf16.mxu0 0
        %1483 = vmatpush2.bf16.xpose.msra.mxu0 0
        %1484 = vmatprep.subr.bf16.mxu0 0
        %1485 = vmatpush2.bf16.xpose.msra.mxu0 0
        %1486 = vmatprep.mubr.bf16.mxu0 0
        %1487 = vmatmul.mubr.bf16.gmra.mxu0 %v1449
        %v1488 = vpop.f32.mrf.mxu0
        %v1489 = vadd.f32 0.0, %v1488
        %v1490 = vpop.f32.mrf.mxu0
        %v1491 = vpop.f32.mrf.mxu0
        %v1492 = vpop.f32.mrf.mxu0
        %1493 = vdwg.mxu0
        %v1495 = vsel %vm1355, %v1054, 0
        %v1498 = vsel %vm1355, %v1204, 0
        %1500 = vmatprep.subr.bf16.mxu0 0
        %1501 = vmatpush1.bf16.xpose.msra.mxu0 0
        %1502 = vmatprep.subr.bf16.mxu0 0
        %1503 = vmatpush1.bf16.xpose.msra.mxu0 0
        %1504 = vmatprep.subr.bf16.mxu0 0
        %1505 = vmatpush1.bf16.xpose.msra.mxu0 0
        %1506 = vmatprep.subr.bf16.mxu0 0
        %1507 = vmatpush1.bf16.xpose.msra.mxu0 0
        %1508 = vmatprep.subr.bf16.mxu0 0
        %1509 = vmatpush1.bf16.xpose.msra.mxu0 0
        %1510 = vmatprep.subr.bf16.mxu0 0
        %1511 = vmatpush1.bf16.xpose.msra.mxu0 0
        %1512 = vmatprep.subr.bf16.mxu0 0
        %1513 = vmatpush1.bf16.xpose.msra.mxu0 0
        %1514 = vmatprep.subr.bf16.mxu0 0
        %1515 = vmatpush1.bf16.xpose.msra.mxu0 %v1498
        %1516 = vmatprep.subr.bf16.mxu0 0
        %1517 = vmatpush2.bf16.xpose.msra.mxu0 0
        %1518 = vmatprep.subr.bf16.mxu0 0
        %1519 = vmatpush2.bf16.xpose.msra.mxu0 0
        %1520 = vmatprep.subr.bf16.mxu0 0
        %1521 = vmatpush2.bf16.xpose.msra.mxu0 0
        %1522 = vmatprep.subr.bf16.mxu0 0
        %1523 = vmatpush2.bf16.xpose.msra.mxu0 0
        %1524 = vmatprep.subr.bf16.mxu0 0
        %1525 = vmatpush2.bf16.xpose.msra.mxu0 0
        %1526 = vmatprep.subr.bf16.mxu0 0
        %1527 = vmatpush2.bf16.xpose.msra.mxu0 0
        %1528 = vmatprep.subr.bf16.mxu0 0
        %1529 = vmatpush2.bf16.xpose.msra.mxu0 0
        %1530 = vmatprep.subr.bf16.mxu0 0
        %1531 = vmatpush2.bf16.xpose.msra.mxu0 0
        %1532 = vmatprep.mubr.bf16.mxu0 0
        %1533 = vmatmul.mubr.bf16.gmra.mxu0 %v1495
        %v1534 = vpop.f32.mrf.mxu0
        %v1535 = vadd.f32 0.0, %v1534
        %v1536 = vpop.f32.mrf.mxu0
        %v1537 = vpop.f32.mrf.mxu0
        %v1538 = vpop.f32.mrf.mxu0
        %1539 = vdwg.mxu0
        %v1540 = vmul.f32 %v1397, 0.35355338
        %v1541 = vmul.f32 %v1443, 0.35355338
        %v1542 = vmul.f32 %v1489, 0.35355338
        %v1543 = vmul.f32 %v1535, 0.35355338
        %v1545 = vlaneseq
        %v1546 = vshrl.u32 %v1545, 7
        %v1547 = vsub.s32 0, %v1546
        %v1548 = vrot.slane %v688, %v1547
        %v1550 = vadd.f32 %v1540, %v1548
        %v1551 = vadd.f32 %v1541, %v1548
        %v1552 = vadd.f32 %v1542, %v1548
        %v1553 = vadd.f32 %v1543, %v1548
        %v1554 = vsel %vm1355, %v1550, -inf
        %1555 = vmax.xlane.f32.xlu0 %v1554
        %v1556 = vpop.xlane.xlu0 %1555
        %v1557 = vsel %vm1355, %v1551, -inf
        %1558 = vmax.xlane.f32.xlu0 %v1557
        %v1559 = vpop.xlane.xlu0 %1558
        %v1560 = vsel %vm1355, %v1552, -inf
        %1561 = vmax.xlane.f32.xlu0 %v1560
        %v1562 = vpop.xlane.xlu0 %1561
        %v1563 = vsel %vm1355, %v1553, -inf
        %1564 = vmax.xlane.f32.xlu0 %v1563
        %v1565 = vpop.xlane.xlu0 %1564
        %v1566 = vsub.f32 %v1550, %v1556
        %v1567 = vsub.f32 %v1551, %v1559
        %v1568 = vsub.f32 %v1552, %v1562
        %v1569 = vsub.f32 %v1553, %v1565
        %v1570 = vmul.f32 %v1566, 1.442695
        %v1571 = vpow.pop %v1570
        %v1572 = vmul.f32 %v1567, 1.442695
        %v1573 = vpow.pop %v1572
        %v1574 = vmul.f32 %v1568, 1.442695
        %v1575 = vpow.pop %v1574
        %v1576 = vmul.f32 %v1569, 1.442695
        %v1577 = vpow.pop %v1576
        %v1578 = vsel %vm1355, %v1571, 0.0
        %1579 = vadd.xlane.f32.xlu0 %v1578
        %v1580 = vpop.xlane.xlu0 %1579
        %v1581 = vsel %vm1355, %v1573, 0.0
        %1582 = vadd.xlane.f32.xlu0 %v1581
        %v1583 = vpop.xlane.xlu0 %1582
        %v1584 = vsel %vm1355, %v1575, 0.0
        %1585 = vadd.xlane.f32.xlu0 %v1584
        %v1586 = vpop.xlane.xlu0 %1585
        %v1587 = vsel %vm1355, %v1577, 0.0
        %1588 = vadd.xlane.f32.xlu0 %v1587
        %v1589 = vpop.xlane.xlu0 %1588
        %v1590 = vrcp.pop %v1580
        %v1591 = vrcp.pop %v1583
        %v1592 = vrcp.pop %v1586
        %v1593 = vrcp.pop %v1589
        %v1594 = vmul.f32 %v1571, %v1590
        %v1595 = vmul.f32 %v1573, %v1591
        %v1596 = vmul.f32 %v1575, %v1592
        %v1597 = vmul.f32 %v1577, %v1593
        %v1598 = vpack.c.bf16 %v1594, %v1594
        %v1599 = vpack.c.bf16 %v1595, %v1595
        %v1600 = vpack.c.bf16 %v1596, %v1596
        %v1601 = vpack.c.bf16 %v1597, %v1597
        %v1603 = vsel %vm1355, %v1598, 0
        %vm1605 = vcmask 1043456
        %v1607 = vsel %vm1605, %v1351, 0
        %1609 = vmatprep.subr.bf16.mxu0 0
        %1610 = vmatpush1.bf16.msra.mxu0 0
        %1611 = vmatprep.subr.bf16.mxu0 0
        %1612 = vmatpush1.bf16.msra.mxu0 0
        %1613 = vmatprep.subr.bf16.mxu0 0
        %1614 = vmatpush1.bf16.msra.mxu0 0
        %1615 = vmatprep.subr.bf16.mxu0 0
        %1616 = vmatpush1.bf16.msra.mxu0 0
        %1617 = vmatprep.subr.bf16.mxu0 0
        %1618 = vmatpush1.bf16.msra.mxu0 0
        %1619 = vmatprep.subr.bf16.mxu0 0
        %1620 = vmatpush1.bf16.msra.mxu0 0
        %1621 = vmatprep.subr.bf16.mxu0 0
        %1622 = vmatpush1.bf16.msra.mxu0 0
        %1623 = vmatprep.subr.bf16.mxu0 0
        %1624 = vmatpush1.bf16.msra.mxu0 %v1607
        %1625 = vmatprep.subr.bf16.mxu0 0
        %1626 = vmatpush2.bf16.msra.mxu0 0
        %1627 = vmatprep.subr.bf16.mxu0 0
        %1628 = vmatpush2.bf16.msra.mxu0 0
        %1629 = vmatprep.subr.bf16.mxu0 0
        %1630 = vmatpush2.bf16.msra.mxu0 0
        %1631 = vmatprep.subr.bf16.mxu0 0
        %1632 = vmatpush2.bf16.msra.mxu0 0
        %1633 = vmatprep.subr.bf16.mxu0 0
        %1634 = vmatpush2.bf16.msra.mxu0 0
        %1635 = vmatprep.subr.bf16.mxu0 0
        %1636 = vmatpush2.bf16.msra.mxu0 0
        %1637 = vmatprep.subr.bf16.mxu0 0
        %1638 = vmatpush2.bf16.msra.mxu0 0
        %1639 = vmatprep.subr.bf16.mxu0 0
        %1640 = vmatpush2.bf16.msra.mxu0 0
        %1641 = vmatprep.mubr.bf16.mxu0 0
        %1642 = vmatmul.mubr.bf16.gmra.mxu0 %v1603
        %v1643 = vpop.f32.mrf.mxu0
        %v1644 = vadd.f32 0.0, %v1643
        %v1645 = vpop.f32.mrf.mxu0
        %v1646 = vpop.f32.mrf.mxu0
        %v1647 = vpop.f32.mrf.mxu0
        %1648 = vdwg.mxu0
        %v1650 = vsel %vm1355, %v1599, 0
        %v1653 = vsel %vm1605, %v1352, 0
        %1655 = vmatprep.subr.bf16.mxu0 0
        %1656 = vmatpush1.bf16.msra.mxu0 0
        %1657 = vmatprep.subr.bf16.mxu0 0
        %1658 = vmatpush1.bf16.msra.mxu0 0
        %1659 = vmatprep.subr.bf16.mxu0 0
        %1660 = vmatpush1.bf16.msra.mxu0 0
        %1661 = vmatprep.subr.bf16.mxu0 0
        %1662 = vmatpush1.bf16.msra.mxu0 0
        %1663 = vmatprep.subr.bf16.mxu0 0
        %1664 = vmatpush1.bf16.msra.mxu0 0
        %1665 = vmatprep.subr.bf16.mxu0 0
        %1666 = vmatpush1.bf16.msra.mxu0 0
        %1667 = vmatprep.subr.bf16.mxu0 0
        %1668 = vmatpush1.bf16.msra.mxu0 0
        %1669 = vmatprep.subr.bf16.mxu0 0
        %1670 = vmatpush1.bf16.msra.mxu0 %v1653
        %1671 = vmatprep.subr.bf16.mxu0 0
        %1672 = vmatpush2.bf16.msra.mxu0 0
        %1673 = vmatprep.subr.bf16.mxu0 0
        %1674 = vmatpush2.bf16.msra.mxu0 0
        %1675 = vmatprep.subr.bf16.mxu0 0
        %1676 = vmatpush2.bf16.msra.mxu0 0
        %1677 = vmatprep.subr.bf16.mxu0 0
        %1678 = vmatpush2.bf16.msra.mxu0 0
        %1679 = vmatprep.subr.bf16.mxu0 0
        %1680 = vmatpush2.bf16.msra.mxu0 0
        %1681 = vmatprep.subr.bf16.mxu0 0
        %1682 = vmatpush2.bf16.msra.mxu0 0
        %1683 = vmatprep.subr.bf16.mxu0 0
        %1684 = vmatpush2.bf16.msra.mxu0 0
        %1685 = vmatprep.subr.bf16.mxu0 0
        %1686 = vmatpush2.bf16.msra.mxu0 0
        %1687 = vmatprep.mubr.bf16.mxu0 0
        %1688 = vmatmul.mubr.bf16.gmra.mxu0 %v1650
        %v1689 = vpop.f32.mrf.mxu0
        %v1690 = vadd.f32 0.0, %v1689
        %v1691 = vpop.f32.mrf.mxu0
        %v1692 = vpop.f32.mrf.mxu0
        %v1693 = vpop.f32.mrf.mxu0
        %1694 = vdwg.mxu0
        %v1696 = vsel %vm1355, %v1600, 0
        %v1699 = vsel %vm1605, %v1353, 0
        %1701 = vmatprep.subr.bf16.mxu0 0
        %1702 = vmatpush1.bf16.msra.mxu0 0
        %1703 = vmatprep.subr.bf16.mxu0 0
        %1704 = vmatpush1.bf16.msra.mxu0 0
        %1705 = vmatprep.subr.bf16.mxu0 0
        %1706 = vmatpush1.bf16.msra.mxu0 0
        %1707 = vmatprep.subr.bf16.mxu0 0
        %1708 = vmatpush1.bf16.msra.mxu0 0
        %1709 = vmatprep.subr.bf16.mxu0 0
        %1710 = vmatpush1.bf16.msra.mxu0 0
        %1711 = vmatprep.subr.bf16.mxu0 0
        %1712 = vmatpush1.bf16.msra.mxu0 0
        %1713 = vmatprep.subr.bf16.mxu0 0
        %1714 = vmatpush1.bf16.msra.mxu0 0
        %1715 = vmatprep.subr.bf16.mxu0 0
        %1716 = vmatpush1.bf16.msra.mxu0 %v1699
        %1717 = vmatprep.subr.bf16.mxu0 0
        %1718 = vmatpush2.bf16.msra.mxu0 0
        %1719 = vmatprep.subr.bf16.mxu0 0
        %1720 = vmatpush2.bf16.msra.mxu0 0
        %1721 = vmatprep.subr.bf16.mxu0 0
        %1722 = vmatpush2.bf16.msra.mxu0 0
        %1723 = vmatprep.subr.bf16.mxu0 0
        %1724 = vmatpush2.bf16.msra.mxu0 0
        %1725 = vmatprep.subr.bf16.mxu0 0
        %1726 = vmatpush2.bf16.msra.mxu0 0
        %1727 = vmatprep.subr.bf16.mxu0 0
        %1728 = vmatpush2.bf16.msra.mxu0 0
        %1729 = vmatprep.subr.bf16.mxu0 0
        %1730 = vmatpush2.bf16.msra.mxu0 0
        %1731 = vmatprep.subr.bf16.mxu0 0
        %1732 = vmatpush2.bf16.msra.mxu0 0
        %1733 = vmatprep.mubr.bf16.mxu0 0
        %1734 = vmatmul.mubr.bf16.gmra.mxu0 %v1696
        %v1735 = vpop.f32.mrf.mxu0
        %v1736 = vadd.f32 0.0, %v1735
        %v1737 = vpop.f32.mrf.mxu0
        %v1738 = vpop.f32.mrf.mxu0
        %v1739 = vpop.f32.mrf.mxu0
        %1740 = vdwg.mxu0
        %v1742 = vsel %vm1355, %v1601, 0
        %v1745 = vsel %vm1605, %v1354, 0
        %1747 = vmatprep.subr.bf16.mxu0 0
        %1748 = vmatpush1.bf16.msra.mxu0 0
        %1749 = vmatprep.subr.bf16.mxu0 0
        %1750 = vmatpush1.bf16.msra.mxu0 0
        %1751 = vmatprep.subr.bf16.mxu0 0
        %1752 = vmatpush1.bf16.msra.mxu0 0
        %1753 = vmatprep.subr.bf16.mxu0 0
        %1754 = vmatpush1.bf16.msra.mxu0 0
        %1755 = vmatprep.subr.bf16.mxu0 0
        %1756 = vmatpush1.bf16.msra.mxu0 0
        %1757 = vmatprep.subr.bf16.mxu0 0
        %1758 = vmatpush1.bf16.msra.mxu0 0
        %1759 = vmatprep.subr.bf16.mxu0 0
        %1760 = vmatpush1.bf16.msra.mxu0 0
        %1761 = vmatprep.subr.bf16.mxu0 0
        %1762 = vmatpush1.bf16.msra.mxu0 %v1745
        %1763 = vmatprep.subr.bf16.mxu0 0
        %1764 = vmatpush2.bf16.msra.mxu0 0
        %1765 = vmatprep.subr.bf16.mxu0 0
        %1766 = vmatpush2.bf16.msra.mxu0 0
        %1767 = vmatprep.subr.bf16.mxu0 0
        %1768 = vmatpush2.bf16.msra.mxu0 0
        %1769 = vmatprep.subr.bf16.mxu0 0
        %1770 = vmatpush2.bf16.msra.mxu0 0
        %1771 = vmatprep.subr.bf16.mxu0 0
        %1772 = vmatpush2.bf16.msra.mxu0 0
        %1773 = vmatprep.subr.bf16.mxu0 0
        %1774 = vmatpush2.bf16.msra.mxu0 0
        %1775 = vmatprep.subr.bf16.mxu0 0
        %1776 = vmatpush2.bf16.msra.mxu0 0
        %1777 = vmatprep.subr.bf16.mxu0 0
        %1778 = vmatpush2.bf16.msra.mxu0 0
        %1779 = vmatprep.mubr.bf16.mxu0 0
        %1780 = vmatmul.mubr.bf16.gmra.mxu0 %v1742
        %v1781 = vpop.f32.mrf.mxu0
        %v1782 = vadd.f32 0.0, %v1781
        %v1783 = vpop.f32.mrf.mxu0
        %v1784 = vpop.f32.mrf.mxu0
        %v1785 = vpop.f32.mrf.mxu0
        %1786 = vdwg.mxu0
        %v1787 = vcombine.low %v1644, %v1736
        %v1788 = vcombine.high %v1644, %v1736
        %v1790 = vunpack.c.l.s4 1983009808
        %v1791 = vunpack.c.0.s8 %v1790
        %v1792 = vlaneseq
        %v1793 = vshrl.u32 %v1792, 7
        %v1794 = vsub.s32 %v1791, %v1793
        %v1795 = vrot.slane %v1787, %v1794
        %v1797 = vunpack.c.l.s4 1983009808
        %v1798 = vunpack.c.0.s8 %v1797
        %v1799 = vlaneseq
        %v1800 = vshrl.u32 %v1799, 7
        %v1801 = vsub.s32 %v1798, %v1800
        %v1802 = vrot.slane %v1788, %v1801
        %v1803 = vcombine.low %v1690, %v1782
        %v1804 = vcombine.high %v1690, %v1782
        %v1806 = vunpack.c.l.s4 1983009808
        %v1807 = vunpack.c.0.s8 %v1806
        %v1808 = vlaneseq
        %v1809 = vshrl.u32 %v1808, 7
        %v1810 = vsub.s32 %v1807, %v1809
        %v1811 = vrot.slane %v1803, %v1810
        %v1813 = vunpack.c.l.s4 1983009808
        %v1814 = vunpack.c.0.s8 %v1813
        %v1815 = vlaneseq
        %v1816 = vshrl.u32 %v1815, 7
        %v1817 = vsub.s32 %v1814, %v1816
        %v1818 = vrot.slane %v1804, %v1817
        %v1819 = vcombine.low %v1795, %v1811
        %v1820 = vcombine.high %v1795, %v1811
        %v1822 = vunpack.c.l.s4 1934713408
        %v1823 = vunpack.c.0.s8 %v1822
        %v1824 = vlaneseq
        %v1825 = vshrl.u32 %v1824, 7
        %v1826 = vsub.s32 %v1823, %v1825
        %v1827 = vrot.slane %v1819, %v1826
        %v1829 = vunpack.c.l.s4 1934713408
        %v1830 = vunpack.c.0.s8 %v1829
        %v1831 = vlaneseq
        %v1832 = vshrl.u32 %v1831, 7
        %v1833 = vsub.s32 %v1830, %v1832
        %v1834 = vrot.slane %v1820, %v1833
        %v1835 = vcombine.low %v1802, %v1818
        %v1836 = vcombine.high %v1802, %v1818
        %v1838 = vunpack.c.l.s4 1934713408
        %v1839 = vunpack.c.0.s8 %v1838
        %v1840 = vlaneseq
        %v1841 = vshrl.u32 %v1840, 7
        %v1842 = vsub.s32 %v1839, %v1841
        %v1843 = vrot.slane %v1835, %v1842
        %v1845 = vunpack.c.l.s4 1934713408
        %v1846 = vunpack.c.0.s8 %v1845
        %v1847 = vlaneseq
        %v1848 = vshrl.u32 %v1847, 7
        %v1849 = vsub.s32 %v1846, %v1848
        %v1850 = vrot.slane %v1836, %v1849
        %v1851 = vcombine.high %v1827, 0.0
        %v1852 = vcombine.high %v1834, 0.0
        %v1853 = vcombine.high %v1843, 0.0
        %v1854 = vcombine.high %v1850, 0.0
        %v1855 = vcombine.low %v1827, %v1834
        %v1857 = vunpack.c.l.s4 1983009808
        %v1858 = vunpack.c.0.s8 %v1857
        %v1859 = vlaneseq
        %v1860 = vshrl.u32 %v1859, 7
        %v1861 = vsub.s32 %v1858, %v1860
        %v1862 = vrot.slane %v1855, %v1861
        %v1863 = vcombine.low %v1851, %v1852
        %v1865 = vunpack.c.l.s4 1983009808
        %v1866 = vunpack.c.0.s8 %v1865
        %v1867 = vlaneseq
        %v1868 = vshrl.u32 %v1867, 7
        %v1869 = vsub.s32 %v1866, %v1868
        %v1870 = vrot.slane %v1863, %v1869
        %v1871 = vcombine.low %v1843, %v1850
        %v1873 = vunpack.c.l.s4 1983009808
        %v1874 = vunpack.c.0.s8 %v1873
        %v1875 = vlaneseq
        %v1876 = vshrl.u32 %v1875, 7
        %v1877 = vsub.s32 %v1874, %v1876
        %v1878 = vrot.slane %v1871, %v1877
        %v1879 = vcombine.low %v1853, %v1854
        %v1881 = vunpack.c.l.s4 1983009808
        %v1882 = vunpack.c.0.s8 %v1881
        %v1883 = vlaneseq
        %v1884 = vshrl.u32 %v1883, 7
        %v1885 = vsub.s32 %v1882, %v1884
        %v1886 = vrot.slane %v1879, %v1885
        %v1887 = vcombine.low %v1862, %v1870
        %v1888 = vcombine.high %v1862, %v1870
        %v1890 = vunpack.c.l.s4 1934713408
        %v1891 = vunpack.c.0.s8 %v1890
        %v1892 = vlaneseq
        %v1893 = vshrl.u32 %v1892, 7
        %v1894 = vsub.s32 %v1891, %v1893
        %v1895 = vrot.slane %v1887, %v1894
        %v1897 = vunpack.c.l.s4 1934713408
        %v1898 = vunpack.c.0.s8 %v1897
        %v1899 = vlaneseq
        %v1900 = vshrl.u32 %v1899, 7
        %v1901 = vsub.s32 %v1898, %v1900
        %v1902 = vrot.slane %v1888, %v1901
        %v1903 = vcombine.low %v1878, %v1886
        %v1904 = vcombine.high %v1878, %v1886
        %v1906 = vunpack.c.l.s4 1934713408
        %v1907 = vunpack.c.0.s8 %v1906
        %v1908 = vlaneseq
        %v1909 = vshrl.u32 %v1908, 7
        %v1910 = vsub.s32 %v1907, %v1909
        %v1911 = vrot.slane %v1903, %v1910
        %v1913 = vunpack.c.l.s4 1934713408
        %v1914 = vunpack.c.0.s8 %v1913
        %v1915 = vlaneseq
        %v1916 = vshrl.u32 %v1915, 7
        %v1917 = vsub.s32 %v1914, %v1916
        %v1918 = vrot.slane %v1904, %v1917
        %v1919 = vcombine.low %v1895, %v1911
        %v1920 = vcombine.high %v1895, %v1911
        %v1921 = vcombine.low %v1902, %v1918
        %v1922 = vcombine.high %v1902, %v1918
        %1924 = vrot.lane.b32.xlu0 %v1920, 8
        %v1925 = vpop.permute.xlu0 %1924
        %1928 = vrot.lane.b32.xlu0 %v1921, 16
        %v1929 = vpop.permute.xlu0 %1928
        %1932 = vrot.lane.b32.xlu0 %v1922, 24
        %v1933 = vpop.permute.xlu0 %1932
        %v1935 = vsel %vm1355, %v1919, %v1925
        %vm1936 = vcmask 130048
        %v1937 = vsel %vm1936, %v1935, %v1929
        %vm1938 = vcmask 195584
        %v1939 = vsel %vm1938, %v1937, %v1933
        %v1940 = vpack.c.bf16 %v1939, %v1939
        %v1942 = vlaneseq
        %v1943 = vshrl.u32 %v1942, 7
        %v1944 = vsub.s32 0, %v1943
        %v1945 = vrot.slane %v708, %v1944
        %v1951 = vunpack.c.l.b16 %v704
        %v1952 = vunpack.c.l.b16 %v705
        %v1953 = vunpack.c.l.b16 %v706
        %v1954 = vunpack.c.l.b16 %v707
        %v1955 = vpack.c.b16 %v1952, %v1951
        %v1956 = vpack.c.b16 %v1954, %v1953
        %v1960 = vsel %vm745, %v1940, 0
        %1962 = vmatprep.subr.bf16.mxu0 0
        %1963 = vmatpush1.bf16.msra.mxu0 0
        %1964 = vmatprep.subr.bf16.mxu0 0
        %1965 = vmatpush1.bf16.msra.mxu0 0
        %1966 = vmatprep.subr.bf16.mxu0 0
        %1967 = vmatpush1.bf16.msra.mxu0 0
        %1968 = vmatprep.subr.bf16.mxu0 0
        %1969 = vmatpush1.bf16.msra.mxu0 0
        %1970 = vmatprep.subr.bf16.mxu0 0
        %1971 = vmatpush1.bf16.msra.mxu0 0
        %1972 = vmatprep.subr.bf16.mxu0 0
        %1973 = vmatpush1.bf16.msra.mxu0 0
        %1974 = vmatprep.subr.bf16.mxu0 0
        %1975 = vmatpush1.bf16.msra.mxu0 %v1956
        %1976 = vmatprep.subr.bf16.mxu0 0
        %1977 = vmatpush1.bf16.msra.mxu0 %v1955
        %1978 = vmatprep.subr.bf16.mxu0 0
        %1979 = vmatpush2.bf16.msra.mxu0 0
        %1980 = vmatprep.subr.bf16.mxu0 0
        %1981 = vmatpush2.bf16.msra.mxu0 0
        %1982 = vmatprep.subr.bf16.mxu0 0
        %1983 = vmatpush2.bf16.msra.mxu0 0
        %1984 = vmatprep.subr.bf16.mxu0 0
        %1985 = vmatpush2.bf16.msra.mxu0 0
        %1986 = vmatprep.subr.bf16.mxu0 0
        %1987 = vmatpush2.bf16.msra.mxu0 0
        %1988 = vmatprep.subr.bf16.mxu0 0
        %1989 = vmatpush2.bf16.msra.mxu0 0
        %1990 = vmatprep.subr.bf16.mxu0 0
        %1991 = vmatpush2.bf16.msra.mxu0 0
        %1992 = vmatprep.subr.bf16.mxu0 0
        %1993 = vmatpush2.bf16.msra.mxu0 0
        %1994 = vmatprep.mubr.bf16.mxu0 0
        %1995 = vmatmul.mubr.bf16.gmra.mxu0 %v1960
        %v1996 = vpop.f32.mrf.mxu0
        %v1997 = vadd.f32 %v1945, %v1996
        %v1998 = vpop.f32.mrf.mxu0
        %v1999 = vpop.f32.mrf.mxu0
        %v2000 = vpop.f32.mrf.mxu0
        %2001 = vdwg.mxu0
        %v2002 = vadd.f32 %v685, %v1997
        %v2003 = vsel %vm745, %v2002, 0.0
        %2004 = vadd.xlane.f32.xlu0 %v2003
        %v2005 = vpop.xlane.xlu0 %2004
        %v2006 = vrcp.pop 32.0
        %v2007 = vmul.f32 %v2005, %v2006
        %v2008 = vsub.f32 %v2002, %v2007
        %v2009 = vmul.f32 %v2008, %v2008
        %v2010 = vsel %vm745, %v2009, 0.0
        %2011 = vadd.xlane.f32.xlu0 %v2010
        %v2012 = vpop.xlane.xlu0 %2011
        %v2013 = vmul.f32 %v2012, %v2006
        %v2014 = vadd.f32 %v2013, 1e-06
        %v2015 = vrsqrt.pop %v2014
        %v2016 = vmul.f32 %v2008, %v2015
        %v2018 = vlaneseq
        %v2019 = vshrl.u32 %v2018, 7
        %v2020 = vsub.s32 0, %v2019
        %v2021 = vrot.slane %v709, %v2020
        %v2023 = vmul.f32 %v2016, %v2021
        %v2025 = vlaneseq
        %v2026 = vshrl.u32 %v2025, 7
        %v2027 = vsub.s32 0, %v2026
        %v2028 = vrot.slane %v710, %v2027
        %v2030 = vadd.f32 %v2023, %v2028
        %v2031 = vpack.c.bf16 %v2030, %v2030
        %v2033 = vlaneseq
        %v2034 = vshrl.u32 %v2033, 7
        %v2035 = vsub.s32 0, %v2034
        %v2036 = vrot.slane %v715, %v2035
        %v2042 = vunpack.c.l.b16 %v711
        %v2043 = vunpack.c.l.b16 %v712
        %v2044 = vunpack.c.l.b16 %v713
        %v2045 = vunpack.c.l.b16 %v714
        %v2046 = vpack.c.b16 %v2043, %v2042
        %v2047 = vpack.c.b16 %v2045, %v2044
        %v2051 = vsel %vm745, %v2031, 0
        %2053 = vmatprep.subr.bf16.mxu0 0
        %2054 = vmatpush1.bf16.msra.mxu0 0
        %2055 = vmatprep.subr.bf16.mxu0 0
        %2056 = vmatpush1.bf16.msra.mxu0 0
        %2057 = vmatprep.subr.bf16.mxu0 0
        %2058 = vmatpush1.bf16.msra.mxu0 0
        %2059 = vmatprep.subr.bf16.mxu0 0
        %2060 = vmatpush1.bf16.msra.mxu0 0
        %2061 = vmatprep.subr.bf16.mxu0 0
        %2062 = vmatpush1.bf16.msra.mxu0 0
        %2063 = vmatprep.subr.bf16.mxu0 0
        %2064 = vmatpush1.bf16.msra.mxu0 0
        %2065 = vmatprep.subr.bf16.mxu0 0
        %2066 = vmatpush1.bf16.msra.mxu0 %v2047
        %2067 = vmatprep.subr.bf16.mxu0 0
        %2068 = vmatpush1.bf16.msra.mxu0 %v2046
        %2069 = vmatprep.subr.bf16.mxu0 0
        %2070 = vmatpush2.bf16.msra.mxu0 0
        %2071 = vmatprep.subr.bf16.mxu0 0
        %2072 = vmatpush2.bf16.msra.mxu0 0
        %2073 = vmatprep.subr.bf16.mxu0 0
        %2074 = vmatpush2.bf16.msra.mxu0 0
        %2075 = vmatprep.subr.bf16.mxu0 0
        %2076 = vmatpush2.bf16.msra.mxu0 0
        %2077 = vmatprep.subr.bf16.mxu0 0
        %2078 = vmatpush2.bf16.msra.mxu0 0
        %2079 = vmatprep.subr.bf16.mxu0 0
        %2080 = vmatpush2.bf16.msra.mxu0 0
        %2081 = vmatprep.subr.bf16.mxu0 0
        %2082 = vmatpush2.bf16.msra.mxu0 0
        %2083 = vmatprep.subr.bf16.mxu0 0
        %2084 = vmatpush2.bf16.msra.mxu0 0
        %2085 = vmatprep.mubr.bf16.mxu0 0
        %2086 = vmatmul.mubr.bf16.gmra.mxu0 %v2051
        %v2087 = vpop.f32.mrf.mxu0
        %v2088 = vadd.f32 %v2036, %v2087
        %v2089 = vpop.f32.mrf.mxu0
        %v2090 = vpop.f32.mrf.mxu0
        %v2091 = vpop.f32.mrf.mxu0
        %2092 = vdwg.mxu0
        %v2093 = vmax.f32 %v2088, 0.0
        %v2094 = vpack.c.bf16 %v2093, %v2093
        %v2096 = vlaneseq
        %v2097 = vshrl.u32 %v2096, 7
        %v2098 = vsub.s32 0, %v2097
        %v2099 = vrot.slane %v724, %v2098
        %v2109 = vunpack.c.l.b16 %v716
        %v2110 = vunpack.c.l.b16 %v717
        %v2111 = vunpack.c.l.b16 %v718
        %v2112 = vunpack.c.l.b16 %v719
        %v2113 = vunpack.c.l.b16 %v720
        %v2114 = vunpack.c.l.b16 %v721
        %v2115 = vunpack.c.l.b16 %v722
        %v2116 = vunpack.c.l.b16 %v723
        %v2117 = vpack.c.b16 %v2110, %v2109
        %v2118 = vpack.c.b16 %v2112, %v2111
        %v2119 = vpack.c.b16 %v2114, %v2113
        %v2120 = vpack.c.b16 %v2116, %v2115
        %vm2125 = vcmask 523264
        %v2127 = vsel %vm2125, %v2094, 0
        %2129 = vmatprep.subr.bf16.mxu0 0
        %2130 = vmatpush1.bf16.msra.mxu0 0
        %2131 = vmatprep.subr.bf16.mxu0 0
        %2132 = vmatpush1.bf16.msra.mxu0 0
        %2133 = vmatprep.subr.bf16.mxu0 0
        %2134 = vmatpush1.bf16.msra.mxu0 0
        %2135 = vmatprep.subr.bf16.mxu0 0
        %2136 = vmatpush1.bf16.msra.mxu0 0
        %2137 = vmatprep.subr.bf16.mxu0 0
        %2138 = vmatpush1.bf16.msra.mxu0 %v2120
        %2139 = vmatprep.subr.bf16.mxu0 0
        %2140 = vmatpush1.bf16.msra.mxu0 %v2119
        %2141 = vmatprep.subr.bf16.mxu0 0
        %2142 = vmatpush1.bf16.msra.mxu0 %v2118
        %2143 = vmatprep.subr.bf16.mxu0 0
        %2144 = vmatpush1.bf16.msra.mxu0 %v2117
        %2145 = vmatprep.subr.bf16.mxu0 0
        %2146 = vmatpush2.bf16.msra.mxu0 0
        %2147 = vmatprep.subr.bf16.mxu0 0
        %2148 = vmatpush2.bf16.msra.mxu0 0
        %2149 = vmatprep.subr.bf16.mxu0 0
        %2150 = vmatpush2.bf16.msra.mxu0 0
        %2151 = vmatprep.subr.bf16.mxu0 0
        %2152 = vmatpush2.bf16.msra.mxu0 0
        %2153 = vmatprep.subr.bf16.mxu0 0
        %2154 = vmatpush2.bf16.msra.mxu0 0
        %2155 = vmatprep.subr.bf16.mxu0 0
        %2156 = vmatpush2.bf16.msra.mxu0 0
        %2157 = vmatprep.subr.bf16.mxu0 0
        %2158 = vmatpush2.bf16.msra.mxu0 0
        %2159 = vmatprep.subr.bf16.mxu0 0
        %2160 = vmatpush2.bf16.msra.mxu0 0
        %2161 = vmatprep.mubr.bf16.mxu0 0
        %2162 = vmatmul.mubr.bf16.gmra.mxu0 %v2127
        %v2163 = vpop.f32.mrf.mxu0
        %v2164 = vadd.f32 %v2099, %v2163
        %v2165 = vpop.f32.mrf.mxu0
        %v2166 = vpop.f32.mrf.mxu0
        %v2167 = vpop.f32.mrf.mxu0
        %2168 = vdwg.mxu0
        %v2169 = vadd.f32 %v2030, %v2164
        %v2170 = vsel %vm745, %v2169, 0.0
        %2171 = vadd.xlane.f32.xlu0 %v2170
        %v2172 = vpop.xlane.xlu0 %2171
        %v2173 = vmul.f32 %v2172, %v2006
        %v2174 = vsub.f32 %v2169, %v2173
        %v2175 = vmul.f32 %v2174, %v2174
        %v2176 = vsel %vm745, %v2175, 0.0
        %2177 = vadd.xlane.f32.xlu0 %v2176
        %v2178 = vpop.xlane.xlu0 %2177
        %v2179 = vmul.f32 %v2178, %v2006
        %v2180 = vadd.f32 %v2179, 1e-06
        %v2181 = vrsqrt.pop %v2180
        %v2182 = vmul.f32 %v2174, %v2181
        %v2184 = vlaneseq
        %v2185 = vshrl.u32 %v2184, 7
        %v2186 = vsub.s32 0, %v2185
        %v2187 = vrot.slane %v725, %v2186
        %v2189 = vmul.f32 %v2182, %v2187
        %v2191 = vlaneseq
        %v2192 = vshrl.u32 %v2191, 7
        %v2193 = vsub.s32 0, %v2192
        %v2194 = vrot.slane %v726, %v2193
        %v2196 = vadd.f32 %v2189, %v2194
        %2197 = vst.msk [vmem:[%s679] sm:$0xff] %vm745, %v2196
        %s2198 = sand.u32 %s434, 1
        %s2199 = scalar_lea.sflag [#allocation4], %s2198
        %s2200 = sand.u32 %s434, 1
        %s2201 = smul.addr %s2200, 8
        %s2202 = scalar_lea.vmem [#allocation14], %s2201
        // Predicated region
        $region121: #{tpu_custom_call.1} parent=91 // pred_check
          %p2203 = pneg %p444
        $region122: #{tpu_custom_call.1} parent=91 // pred_check_branch
          %2205 = sbr.rel (%p2203) target = $region124
        $region123: #{tpu_custom_call.1} parent=91 // pred_region
          %s2207 = ssub.s32 128, 128
          %2208 = vsyncadd %s2199, %s2207
          %s2209 = smul.addr %s38, 128
          %s2210 = scalar_lea.hbm %s18, %s2209
          %s2212 = sshll.u32 %s2202, 4
          %s2213 = int_to_ptr.vmem [resolvable:$true] %s2212
          %2215 = dma.vmem_to_hbm [thread:$0]  %s2213, 128, %s2210, %s2199
        $region124: #{tpu_custom_call.1} parent=91 // pred_fallthru
          _
      $region92: #{tpu_custom_call.1} parent=5 // pred_fallthru
        _
      %p2216 = scmp.le.s32.totalorder 2, %s33
      // Predicated region
      $region125: #{tpu_custom_call.1} parent=5 // pred_check
        %p2217 = pneg %p2216
      $region126: #{tpu_custom_call.1} parent=5 // pred_check_branch
        %2219 = sbr.rel (%p2217) target = $region128
      $region127: #{tpu_custom_call.1} parent=5 // pred_region
        %s2220 = ssub.s32 %s33, 2
        // Predicated region
        $region129: #{tpu_custom_call.1} parent=127 // pred_check
          %p2221 = pneg %p450
        $region130: #{tpu_custom_call.1} parent=127 // pred_check_branch
          %2223 = sbr.rel (%p2221) target = $region132
        $region131: #{tpu_custom_call.1} parent=127 // pred_region
          %s2224 = sand.u32 %s435, 1
          %s2225 = scalar_lea.sflag [#allocation4], %s2224
          %s2226 = sand.u32 %s435, 1
          %s2227 = smul.addr %s2226, 8
          %s2228 = scalar_lea.vmem [#allocation14], %s2227
          %2229 = dma.done %s2225, 128
        $region132: #{tpu_custom_call.1} parent=127 // pred_fallthru
          _
      $region128: #{tpu_custom_call.1} parent=5 // pred_fallthru
        _
    $region6: #{tpu_custom_call.1} parent=1 // loop_footer
      %s37 = sadd.s32 1, %s33
    $region7: #{tpu_custom_call.1} parent=1 // loop_footer_branch
      %32 = sbr.rel target = $region3
    $region8: #{tpu_custom_call.1} parent=1 // loop_exit
      _
    %2230 = vsyncpa [#allocation3], 1
    %s2231 = scalar_lea.sflag [#allocation3], 1
    %2232 = vsyncpa %s2231, 1
    %2233 = vsyncpa [#allocation6], 1
    %2234 = vsyncpa [#allocation9], 1
    %2235 = vsyncpa [#allocation12], 1
    %2236 = vsyncpa [#allocation4], 1
    %s2237 = scalar_lea.sflag [#allocation4], 1
    %2238 = vsyncpa %s2237, 1

</llo_original>
